<compile_context>
chip_gen: v6e
topology: v6e:2x2x1
jax: 0.10.0
libtpu: 0.0.40
codegen_flags: <defaults>
</compile_context>

<pallas_src>
import numpy as np
import jax
import jax.numpy as jnp
from jax import lax
from jax.experimental import pallas as pl
from jax.experimental.pallas import tpu as pltpu


def _fused_upsample_kernel(x_ref, weff_ref, bias_ref, awt_ref,
                           o_ref, xpad_ref, col_ref, ycm_ref):
    # x_ref:     (1, H, W, Cin)     NHWC input tile (one batch element), f32
    # weff_ref:  (9*Cin, Cout)      depthwise*pointwise*BN-scale folded weights, bf16
    # bias_ref:  (1, Cout)          folded BatchNorm bias, f32
    # awt_ref:   (W, 2W)            bilinear W-interpolation matrix (transposed), bf16
    # o_ref:     (1, Cout, 2H, 2W)  NCHW output tile
    # xpad_ref:  (H+2, W+2, Cin)    VMEM scratch: zero-padded halo
    # col_ref:   (H*W, 9*Cin)       VMEM scratch: im2col matrix
    # ycm_ref:   (Cout, 2H, W)      VMEM scratch: channel-major, H-upsampled activation
    _, H, W, Cin = x_ref.shape
    _, Cout, H2, W2 = o_ref.shape

    # ---- halo handling in VMEM (replaces host-side jnp.pad) ---------------------------
    xpad_ref[...] = jnp.zeros_like(xpad_ref)
    xpad_ref[1:H + 1, 1:W + 1, :] = x_ref[0]
    xpad = xpad_ref[...]

    # ---- im2col: 9 shifted (H, W, Cin) views packed along lanes -> (H*W, 9*Cin) -------
    for kh in range(3):
        for kw in range(3):
            k = kh * 3 + kw
            col_ref[:, k * Cin:(k + 1) * Cin] = (
                xpad[kh:kh + H, kw:kw + W, :].reshape(H * W, Cin))

    # ---- depthwise 3x3 + pointwise 1x1 + BN scale as ONE MXU matmul (K = 9*Cin) -------
    y = jnp.dot(col_ref[...].astype(jnp.bfloat16), weff_ref[...],
                preferred_element_type=jnp.float32)                     # (H*W, Cout)

    # ---- folded BatchNorm bias (inference) + ReLU, f32 VPU epilogue -------------------
    y = jnp.maximum(y + bias_ref[...], 0.0)

    # ---- single relayout to channel-major ---------------------------------------------
    y_cm = y.T                                                           # (Cout, H*W)

    # ---- bilinear x2 along H: exact 2-tap blend (0.25/0.75, clamped edges), fused with
    #      the even/odd row interleave into the channel-major scratch --------------------
    for h in range(H):
        hp = max(h - 1, 0)
        hn = min(h + 1, H - 1)
        cur = y_cm[:, h * W:(h + 1) * W]
        prv = y_cm[:, hp * W:hp * W + W]
        nxt = y_cm[:, hn * W:hn * W + W]
        ycm_ref[:, 2 * h, :] = 0.25 * prv + 0.75 * cur                  # output row 2h
        ycm_ref[:, 2 * h + 1, :] = 0.75 * cur + 0.25 * nxt              # output row 2h+1

    # ---- bilinear x2 along W: one channels-batched matmul, store NCHW directly --------
    z = jnp.dot(ycm_ref[...].reshape(Cout * H2, W).astype(jnp.bfloat16), awt_ref[...],
                preferred_element_type=jnp.float32)                     # (Cout*2H, 2W)
    o_ref[0] = z.reshape(Cout, H2, W2).astype(o_ref.dtype)


def _bilinear_matrix(in_size, out_size):
    # Matches torch.nn.Upsample(scale_factor=2, mode='bilinear', align_corners=False)
    scale = in_size / out_size
    o = np.arange(out_size, dtype=np.float64)
    src = np.maximum((o + 0.5) * scale - 0.5, 0.0)
    i0 = np.minimum(np.floor(src).astype(np.int64), in_size - 1)
    i1 = np.minimum(i0 + 1, in_size - 1)
    w1 = src - i0
    w0 = 1.0 - w1
    m = np.zeros((out_size, in_size), np.float32)
    m[np.arange(out_size), i0] += w0
    m[np.arange(out_size), i1] += w1
    return jnp.asarray(m)


def upsample_block_forward(x, params):
    """x: (N, Cin, H, W) float32 -> (N, Cout, 2H, 2W) float32."""
    N, Cin, H, W = x.shape
    dw_w, pw_w = params["dw_w"], params["pw_w"]
    gamma, beta = params["gamma"], params["beta"]
    r_mean, r_var, eps = params["r_mean"], params["r_var"], params["eps"]
    Cout = pw_w.shape[0]
    assert H % 8 == 0 and W % 8 == 0, "kernel assumes H, W multiples of 8"
    assert H >= 2 and W >= 2

    # --- glue: fold depthwise*pointwise weights and the BN scale; build W-interp matrix -
    inv_std = 1.0 / jnp.sqrt(r_var + eps)
    scale = gamma * inv_std                                                  # (Cout,)
    bias = (beta - r_mean * scale).reshape(1, Cout).astype(jnp.float32)      # (1, Cout)
    dw_k = jnp.transpose(dw_w[:, 0, :, :].reshape(Cin, 9), (1, 0))           # (9, Cin)
    pw_s = pw_w[:, :, 0, 0] * scale[:, None]                                 # (Cout, Cin)
    weff = (dw_k[:, :, None] * jnp.transpose(pw_s, (1, 0))[None, :, :]
            ).reshape(9 * Cin, Cout).astype(jnp.bfloat16)                    # (9*Cin, Cout)
    awt = jnp.transpose(_bilinear_matrix(W, 2 * W), (1, 0)).astype(jnp.bfloat16)

    x_nhwc = jnp.transpose(x, (0, 2, 3, 1))   # channels on lanes for the conv matmul

    out = pl.pallas_call(
        _fused_upsample_kernel,
        out_shape=jax.ShapeDtypeStruct((N, Cout, 2 * H, 2 * W), jnp.float32),
        grid=(N,),
        in_specs=[
            pl.BlockSpec((1, H, W, Cin), lambda n: (n, 0, 0, 0)),
            pl.BlockSpec((9 * Cin, Cout), lambda n: (0, 0)),
            pl.BlockSpec((1, Cout), lambda n: (0, 0)),
            pl.BlockSpec((W, 2 * W), lambda n: (0, 0)),
        ],
        out_specs=pl.BlockSpec((1, Cout, 2 * H, 2 * W), lambda n: (n, 0, 0, 0)),
        scratch_shapes=[
            pltpu.VMEM((H + 2, W + 2, Cin), jnp.float32),
            pltpu.VMEM((H * W, 9 * Cin), jnp.float32),
            pltpu.VMEM((Cout, 2 * H, W), jnp.float32),
        ],
        compiler_params=pltpu.CompilerParams(dimension_semantics=("parallel",)),
    )(x_nhwc, weff, bias, awt)
    return out


def _reference(x, params):
    # Pure-JAX f32 reference for validation of the Pallas lowering.
    dw_w, pw_w = params["dw_w"], params["pw_w"]
    gamma, beta = params["gamma"], params["beta"]
    r_mean, r_var, eps = params["r_mean"], params["r_var"], params["eps"]
    N, Cin, H, W = x.shape
    y = lax.conv_general_dilated(
        x, dw_w, (1, 1), ((1, 1), (1, 1)),
        dimension_numbers=("NCHW", "OIHW", "NCHW"), feature_group_count=Cin)
    y = lax.conv_general_dilated(
        y, pw_w, (1, 1), ((0, 0), (0, 0)),
        dimension_numbers=("NCHW", "OIHW", "NCHW"))
    y = (y - r_mean[None, :, None, None]) / jnp.sqrt(r_var[None, :, None, None] + eps)
    y = y * gamma[None, :, None, None] + beta[None, :, None, None]
    y = jnp.maximum(y, 0.0)
    ah = _bilinear_matrix(H, 2 * H)
    aw = _bilinear_matrix(W, 2 * W)
    y = jnp.einsum("oh,nchw->ncow", ah, y)
    y = jnp.einsum("pw,ncow->ncop", aw, y)
    return y


if __name__ == "__main__":
    N, Cin, Cout, H, W = 2, 4, 8, 16, 16
    key = jax.random.PRNGKey(0)
    k = jax.random.split(key, 7)
    x = jax.random.normal(k[0], (N, Cin, H, W), jnp.float32)
    params = {
        "dw_w": jax.random.normal(k[1], (Cin, 1, 3, 3), jnp.float32) * 0.2,
        "pw_w": jax.random.normal(k[2], (Cout, Cin, 1, 1), jnp.float32) * 0.2,
        "gamma": jax.random.uniform(k[3], (Cout,), jnp.float32, 0.5, 1.5),
        "beta": jax.random.normal(k[4], (Cout,), jnp.float32) * 0.1,
        "r_mean": jax.random.normal(k[5], (Cout,), jnp.float32) * 0.1,
        "r_var": jax.random.uniform(k[6], (Cout,), jnp.float32, 0.5, 1.5),
        "eps": 1e-5,
    }

    out = jax.block_until_ready(upsample_block_forward(x, params))
    ref = jax.block_until_ready(_reference(x, params))
    assert out.shape == (N, Cout, 2 * H, 2 * W), out.shape
    # bf16 MXU operands (f32 accumulation) -> compare against the f32 reference with a
    # correspondingly looser tolerance.
    np.testing.assert_allclose(np.asarray(out), np.asarray(ref), rtol=2e-2, atol=2e-2)
    print("KERNEL_OK")
</pallas_src>

<mosaic_0001>
module attributes {stable_mosaic.version = 11 : i64} {
  func.func @_fused_upsample_kernel(%arg0: i32, %arg1: memref<1x16x16x4xf32, #tpu.memory_space<vmem>>, %arg2: memref<36x8xbf16, #tpu.memory_space<vmem>>, %arg3: memref<1x8xf32, #tpu.memory_space<vmem>>, %arg4: memref<16x32xbf16, #tpu.memory_space<vmem>>, %arg5: memref<1x8x32x32xf32, #tpu.memory_space<vmem>>, %arg6: memref<18x18x4xf32, #tpu.memory_space<vmem>>, %arg7: memref<256x36xf32, #tpu.memory_space<vmem>>, %arg8: memref<8x32x16xf32, #tpu.memory_space<vmem>>) attributes {dimension_semantics = [#tpu.dimension_semantics<parallel>], iteration_bounds = array<i64: 2>, scalar_prefetch = 0 : i64, scratch_operands = 3 : i64, tpu.core_type = #tpu.core_type<tc>, window_params = [{transform_indices = @transform_0, window_bounds = array<i64: 1, 16, 16, 4>}, {pipeline_mode = #tpu.pipeline_mode<synchronous>, transform_indices = @transform_1, window_bounds = array<i64: 36, 8>}, {pipeline_mode = #tpu.pipeline_mode<synchronous>, transform_indices = @transform_2, window_bounds = array<i64: 1, 8>}, {pipeline_mode = #tpu.pipeline_mode<synchronous>, transform_indices = @transform_3, window_bounds = array<i64: 16, 32>}, {transform_indices = @transform_4, window_bounds = array<i64: 1, 8, 32, 32>}]} {
    %cst = arith.constant 0.000000e+00 : f32
    %0 = vector.broadcast %cst : f32 to vector<18x18x4xf32>
    %c0 = arith.constant 0 : index
    %c0_0 = arith.constant 0 : index
    %c0_1 = arith.constant 0 : index
    %1 = vector.load %arg6[%c0, %c0_0, %c0_1] : memref<18x18x4xf32, #tpu.memory_space<vmem>>, vector<18x18x4xf32>
    tpu.vector_store %arg6[%c0, %c0_0, %c0_1], %0 {strides = array<i32>} : memref<18x18x4xf32, #tpu.memory_space<vmem>>, vector<18x18x4xf32>,
    %c0_2 = arith.constant 0 : index
    %c0_3 = arith.constant 0 : index
    %c0_4 = arith.constant 0 : index
    %c0_5 = arith.constant 0 : index
    %2 = vector.load %arg1[%c0_2, %c0_3, %c0_4, %c0_5] : memref<1x16x16x4xf32, #tpu.memory_space<vmem>>, vector<1x16x16x4xf32>
    %3 = vector.shape_cast %2 : vector<1x16x16x4xf32> to vector<16x16x4xf32>
    %c1 = arith.constant 1 : index
    %c1_6 = arith.constant 1 : index
    %c0_7 = arith.constant 0 : index
    %4 = vector.load %arg6[%c1, %c1_6, %c0_7] : memref<18x18x4xf32, #tpu.memory_space<vmem>>, vector<16x16x4xf32>
    tpu.vector_store %arg6[%c1, %c1_6, %c0_7], %3 {strides = array<i32>} : memref<18x18x4xf32, #tpu.memory_space<vmem>>, vector<16x16x4xf32>,
    %c0_8 = arith.constant 0 : index
    %c0_9 = arith.constant 0 : index
    %c0_10 = arith.constant 0 : index
    %5 = vector.load %arg6[%c0_8, %c0_9, %c0_10] : memref<18x18x4xf32, #tpu.memory_space<vmem>>, vector<18x18x4xf32>
    %6 = vector.extract_strided_slice %5 {offsets = [0, 0, 0], sizes = [16, 16, 4], strides = [1, 1, 1]} : vector<18x18x4xf32> to vector<16x16x4xf32>
    %7 = vector.shape_cast %6 : vector<16x16x4xf32> to vector<256x4xf32>
    %c0_11 = arith.constant 0 : index
    %c0_12 = arith.constant 0 : index
    %8 = vector.load %arg7[%c0_11, %c0_12] : memref<256x36xf32, #tpu.memory_space<vmem>>, vector<256x4xf32>
    tpu.vector_store %arg7[%c0_11, %c0_12], %7 {strides = array<i32>} : memref<256x36xf32, #tpu.memory_space<vmem>>, vector<256x4xf32>,
    %9 = vector.extract_strided_slice %5 {offsets = [0, 1, 0], sizes = [16, 16, 4], strides = [1, 1, 1]} : vector<18x18x4xf32> to vector<16x16x4xf32>
    %10 = vector.shape_cast %9 : vector<16x16x4xf32> to vector<256x4xf32>
    %c0_13 = arith.constant 0 : index
    %c4 = arith.constant 4 : index
    %11 = vector.load %arg7[%c0_13, %c4] : memref<256x36xf32, #tpu.memory_space<vmem>>, vector<256x4xf32>
    tpu.vector_store %arg7[%c0_13, %c4], %10 {strides = array<i32>} : memref<256x36xf32, #tpu.memory_space<vmem>>, vector<256x4xf32>,
    %12 = vector.extract_strided_slice %5 {offsets = [0, 2, 0], sizes = [16, 16, 4], strides = [1, 1, 1]} : vector<18x18x4xf32> to vector<16x16x4xf32>
    %13 = vector.shape_cast %12 : vector<16x16x4xf32> to vector<256x4xf32>
    %c0_14 = arith.constant 0 : index
    %c8 = arith.constant 8 : index
    %14 = vector.load %arg7[%c0_14, %c8] : memref<256x36xf32, #tpu.memory_space<vmem>>, vector<256x4xf32>
    tpu.vector_store %arg7[%c0_14, %c8], %13 {strides = array<i32>} : memref<256x36xf32, #tpu.memory_space<vmem>>, vector<256x4xf32>,
    %15 = vector.extract_strided_slice %5 {offsets = [1, 0, 0], sizes = [16, 16, 4], strides = [1, 1, 1]} : vector<18x18x4xf32> to vector<16x16x4xf32>
    %16 = vector.shape_cast %15 : vector<16x16x4xf32> to vector<256x4xf32>
    %c0_15 = arith.constant 0 : index
    %c12 = arith.constant 12 : index
    %17 = vector.load %arg7[%c0_15, %c12] : memref<256x36xf32, #tpu.memory_space<vmem>>, vector<256x4xf32>
    tpu.vector_store %arg7[%c0_15, %c12], %16 {strides = array<i32>} : memref<256x36xf32, #tpu.memory_space<vmem>>, vector<256x4xf32>,
    %18 = vector.extract_strided_slice %5 {offsets = [1, 1, 0], sizes = [16, 16, 4], strides = [1, 1, 1]} : vector<18x18x4xf32> to vector<16x16x4xf32>
    %19 = vector.shape_cast %18 : vector<16x16x4xf32> to vector<256x4xf32>
    %c0_16 = arith.constant 0 : index
    %c16 = arith.constant 16 : index
    %20 = vector.load %arg7[%c0_16, %c16] : memref<256x36xf32, #tpu.memory_space<vmem>>, vector<256x4xf32>
    tpu.vector_store %arg7[%c0_16, %c16], %19 {strides = array<i32>} : memref<256x36xf32, #tpu.memory_space<vmem>>, vector<256x4xf32>,
    %21 = vector.extract_strided_slice %5 {offsets = [1, 2, 0], sizes = [16, 16, 4], strides = [1, 1, 1]} : vector<18x18x4xf32> to vector<16x16x4xf32>
    %22 = vector.shape_cast %21 : vector<16x16x4xf32> to vector<256x4xf32>
    %c0_17 = arith.constant 0 : index
    %c20 = arith.constant 20 : index
    %23 = vector.load %arg7[%c0_17, %c20] : memref<256x36xf32, #tpu.memory_space<vmem>>, vector<256x4xf32>
    tpu.vector_store %arg7[%c0_17, %c20], %22 {strides = array<i32>} : memref<256x36xf32, #tpu.memory_space<vmem>>, vector<256x4xf32>,
    %24 = vector.extract_strided_slice %5 {offsets = [2, 0, 0], sizes = [16, 16, 4], strides = [1, 1, 1]} : vector<18x18x4xf32> to vector<16x16x4xf32>
    %25 = vector.shape_cast %24 : vector<16x16x4xf32> to vector<256x4xf32>
    %c0_18 = arith.constant 0 : index
    %c24 = arith.constant 24 : index
    %26 = vector.load %arg7[%c0_18, %c24] : memref<256x36xf32, #tpu.memory_space<vmem>>, vector<256x4xf32>
    tpu.vector_store %arg7[%c0_18, %c24], %25 {strides = array<i32>} : memref<256x36xf32, #tpu.memory_space<vmem>>, vector<256x4xf32>,
    %27 = vector.extract_strided_slice %5 {offsets = [2, 1, 0], sizes = [16, 16, 4], strides = [1, 1, 1]} : vector<18x18x4xf32> to vector<16x16x4xf32>
    %28 = vector.shape_cast %27 : vector<16x16x4xf32> to vector<256x4xf32>
    %c0_19 = arith.constant 0 : index
    %c28 = arith.constant 28 : index
    %29 = vector.load %arg7[%c0_19, %c28] : memref<256x36xf32, #tpu.memory_space<vmem>>, vector<256x4xf32>
    tpu.vector_store %arg7[%c0_19, %c28], %28 {strides = array<i32>} : memref<256x36xf32, #tpu.memory_space<vmem>>, vector<256x4xf32>,
    %30 = vector.extract_strided_slice %5 {offsets = [2, 2, 0], sizes = [16, 16, 4], strides = [1, 1, 1]} : vector<18x18x4xf32> to vector<16x16x4xf32>
    %31 = vector.shape_cast %30 : vector<16x16x4xf32> to vector<256x4xf32>
    %c0_20 = arith.constant 0 : index
    %c32 = arith.constant 32 : index
    %32 = vector.load %arg7[%c0_20, %c32] : memref<256x36xf32, #tpu.memory_space<vmem>>, vector<256x4xf32>
    tpu.vector_store %arg7[%c0_20, %c32], %31 {strides = array<i32>} : memref<256x36xf32, #tpu.memory_space<vmem>>, vector<256x4xf32>,
    %c0_21 = arith.constant 0 : index
    %c0_22 = arith.constant 0 : index
    %33 = vector.load %arg7[%c0_21, %c0_22] : memref<256x36xf32, #tpu.memory_space<vmem>>, vector<256x36xf32>
    %34 = arith.truncf %33 : vector<256x36xf32> to vector<256x36xbf16>
    %c0_23 = arith.constant 0 : index
    %c0_24 = arith.constant 0 : index
    %35 = vector.load %arg2[%c0_23, %c0_24] : memref<36x8xbf16, #tpu.memory_space<vmem>>, vector<36x8xbf16>
    %cst_25 = arith.constant dense<0.000000e+00> : vector<256x8xf32>
    %36 = tpu.matmul %34, %35, %cst_25 {dimension_numbers = #tpu.dot_dimension_numbers<[1], [0], [0], [1], [0, 0, 1, 1], [], []>} : vector<256x36xbf16>, vector<36x8xbf16>, vector<256x8xf32> -> vector<256x8xf32>
    %c0_26 = arith.constant 0 : index
    %c0_27 = arith.constant 0 : index
    %37 = vector.load %arg3[%c0_26, %c0_27] : memref<1x8xf32, #tpu.memory_space<vmem>>, vector<1x8xf32>
    %38 = vector.broadcast %37 : vector<1x8xf32> to vector<256x8xf32>
    %39 = arith.addf %36, %38 : vector<256x8xf32>
    %cst_28 = arith.constant 0.000000e+00 : f32
    %40 = vector.broadcast %cst_28 : f32 to vector<256x8xf32>
    %41 = arith.maximumf %39, %40 : vector<256x8xf32>
    %42 = tpu.transpose %41, [1, 0] : vector<256x8xf32> -> vector<8x256xf32>
    %43 = vector.extract_strided_slice %42 {offsets = [0, 0], sizes = [8, 16], strides = [1, 1]} : vector<8x256xf32> to vector<8x16xf32>
    %44 = vector.extract_strided_slice %42 {offsets = [0, 0], sizes = [8, 16], strides = [1, 1]} : vector<8x256xf32> to vector<8x16xf32>
    %45 = vector.extract_strided_slice %42 {offsets = [0, 16], sizes = [8, 16], strides = [1, 1]} : vector<8x256xf32> to vector<8x16xf32>
    %cst_29 = arith.constant 2.500000e-01 : f32
    %46 = vector.broadcast %cst_29 : f32 to vector<8x16xf32>
    %47 = arith.mulf %46, %44 : vector<8x16xf32>
    %cst_30 = arith.constant 7.500000e-01 : f32
    %48 = vector.broadcast %cst_30 : f32 to vector<8x16xf32>
    %49 = arith.mulf %48, %43 : vector<8x16xf32>
    %50 = arith.addf %47, %49 : vector<8x16xf32>
    %c0_31 = arith.constant 0 : index
    %c0_32 = arith.constant 0 : index
    %c0_33 = arith.constant 0 : index
    %51 = vector.load %arg8[%c0_31, %c0_32, %c0_33] : memref<8x32x16xf32, #tpu.memory_space<vmem>>, vector<8x1x16xf32>
    %52 = vector.shape_cast %51 : vector<8x1x16xf32> to vector<8x16xf32>
    %53 = vector.shape_cast %50 : vector<8x16xf32> to vector<8x1x16xf32>
    tpu.vector_store %arg8[%c0_31, %c0_32, %c0_33], %53 {strides = array<i32>} : memref<8x32x16xf32, #tpu.memory_space<vmem>>, vector<8x1x16xf32>,
    %cst_34 = arith.constant 7.500000e-01 : f32
    %54 = vector.broadcast %cst_34 : f32 to vector<8x16xf32>
    %55 = arith.mulf %54, %43 : vector<8x16xf32>
    %cst_35 = arith.constant 2.500000e-01 : f32
    %56 = vector.broadcast %cst_35 : f32 to vector<8x16xf32>
    %57 = arith.mulf %56, %45 : vector<8x16xf32>
    %58 = arith.addf %55, %57 : vector<8x16xf32>
    %c0_36 = arith.constant 0 : index
    %c1_37 = arith.constant 1 : index
    %c0_38 = arith.constant 0 : index
    %59 = vector.load %arg8[%c0_36, %c1_37, %c0_38] : memref<8x32x16xf32, #tpu.memory_space<vmem>>, vector<8x1x16xf32>
    %60 = vector.shape_cast %59 : vector<8x1x16xf32> to vector<8x16xf32>
    %61 = vector.shape_cast %58 : vector<8x16xf32> to vector<8x1x16xf32>
    tpu.vector_store %arg8[%c0_36, %c1_37, %c0_38], %61 {strides = array<i32>} : memref<8x32x16xf32, #tpu.memory_space<vmem>>, vector<8x1x16xf32>,
    %62 = vector.extract_strided_slice %42 {offsets = [0, 16], sizes = [8, 16], strides = [1, 1]} : vector<8x256xf32> to vector<8x16xf32>
    %63 = vector.extract_strided_slice %42 {offsets = [0, 0], sizes = [8, 16], strides = [1, 1]} : vector<8x256xf32> to vector<8x16xf32>
    %64 = vector.extract_strided_slice %42 {offsets = [0, 32], sizes = [8, 16], strides = [1, 1]} : vector<8x256xf32> to vector<8x16xf32>
    %cst_39 = arith.constant 2.500000e-01 : f32
    %65 = vector.broadcast %cst_39 : f32 to vector<8x16xf32>
    %66 = arith.mulf %65, %63 : vector<8x16xf32>
    %cst_40 = arith.constant 7.500000e-01 : f32
    %67 = vector.broadcast %cst_40 : f32 to vector<8x16xf32>
    %68 = arith.mulf %67, %62 : vector<8x16xf32>
    %69 = arith.addf %66, %68 : vector<8x16xf32>
    %c0_41 = arith.constant 0 : index
    %c2 = arith.constant 2 : index
    %c0_42 = arith.constant 0 : index
    %70 = vector.load %arg8[%c0_41, %c2, %c0_42] : memref<8x32x16xf32, #tpu.memory_space<vmem>>, vector<8x1x16xf32>
    %71 = vector.shape_cast %70 : vector<8x1x16xf32> to vector<8x16xf32>
    %72 = vector.shape_cast %69 : vector<8x16xf32> to vector<8x1x16xf32>
    tpu.vector_store %arg8[%c0_41, %c2, %c0_42], %72 {strides = array<i32>} : memref<8x32x16xf32, #tpu.memory_space<vmem>>, vector<8x1x16xf32>,
    %cst_43 = arith.constant 7.500000e-01 : f32
    %73 = vector.broadcast %cst_43 : f32 to vector<8x16xf32>
    %74 = arith.mulf %73, %62 : vector<8x16xf32>
    %cst_44 = arith.constant 2.500000e-01 : f32
    %75 = vector.broadcast %cst_44 : f32 to vector<8x16xf32>
    %76 = arith.mulf %75, %64 : vector<8x16xf32>
    %77 = arith.addf %74, %76 : vector<8x16xf32>
    %c0_45 = arith.constant 0 : index
    %c3 = arith.constant 3 : index
    %c0_46 = arith.constant 0 : index
    %78 = vector.load %arg8[%c0_45, %c3, %c0_46] : memref<8x32x16xf32, #tpu.memory_space<vmem>>, vector<8x1x16xf32>
    %79 = vector.shape_cast %78 : vector<8x1x16xf32> to vector<8x16xf32>
    %80 = vector.shape_cast %77 : vector<8x16xf32> to vector<8x1x16xf32>
    tpu.vector_store %arg8[%c0_45, %c3, %c0_46], %80 {strides = array<i32>} : memref<8x32x16xf32, #tpu.memory_space<vmem>>, vector<8x1x16xf32>,
    %81 = vector.extract_strided_slice %42 {offsets = [0, 32], sizes = [8, 16], strides = [1, 1]} : vector<8x256xf32> to vector<8x16xf32>
    %82 = vector.extract_strided_slice %42 {offsets = [0, 16], sizes = [8, 16], strides = [1, 1]} : vector<8x256xf32> to vector<8x16xf32>
    %83 = vector.extract_strided_slice %42 {offsets = [0, 48], sizes = [8, 16], strides = [1, 1]} : vector<8x256xf32> to vector<8x16xf32>
    %cst_47 = arith.constant 2.500000e-01 : f32
    %84 = vector.broadcast %cst_47 : f32 to vector<8x16xf32>
    %85 = arith.mulf %84, %82 : vector<8x16xf32>
    %cst_48 = arith.constant 7.500000e-01 : f32
    %86 = vector.broadcast %cst_48 : f32 to vector<8x16xf32>
    %87 = arith.mulf %86, %81 : vector<8x16xf32>
    %88 = arith.addf %85, %87 : vector<8x16xf32>
    %c0_49 = arith.constant 0 : index
    %c4_50 = arith.constant 4 : index
    %c0_51 = arith.constant 0 : index
    %89 = vector.load %arg8[%c0_49, %c4_50, %c0_51] : memref<8x32x16xf32, #tpu.memory_space<vmem>>, vector<8x1x16xf32>
    %90 = vector.shape_cast %89 : vector<8x1x16xf32> to vector<8x16xf32>
    %91 = vector.shape_cast %88 : vector<8x16xf32> to vector<8x1x16xf32>
    tpu.vector_store %arg8[%c0_49, %c4_50, %c0_51], %91 {strides = array<i32>} : memref<8x32x16xf32, #tpu.memory_space<vmem>>, vector<8x1x16xf32>,
    %cst_52 = arith.constant 7.500000e-01 : f32
    %92 = vector.broadcast %cst_52 : f32 to vector<8x16xf32>
    %93 = arith.mulf %92, %81 : vector<8x16xf32>
    %cst_53 = arith.constant 2.500000e-01 : f32
    %94 = vector.broadcast %cst_53 : f32 to vector<8x16xf32>
    %95 = arith.mulf %94, %83 : vector<8x16xf32>
    %96 = arith.addf %93, %95 : vector<8x16xf32>
    %c0_54 = arith.constant 0 : index
    %c5 = arith.constant 5 : index
    %c0_55 = arith.constant 0 : index
    %97 = vector.load %arg8[%c0_54, %c5, %c0_55] : memref<8x32x16xf32, #tpu.memory_space<vmem>>, vector<8x1x16xf32>
    %98 = vector.shape_cast %97 : vector<8x1x16xf32> to vector<8x16xf32>
    %99 = vector.shape_cast %96 : vector<8x16xf32> to vector<8x1x16xf32>
    tpu.vector_store %arg8[%c0_54, %c5, %c0_55], %99 {strides = array<i32>} : memref<8x32x16xf32, #tpu.memory_space<vmem>>, vector<8x1x16xf32>,
    %100 = vector.extract_strided_slice %42 {offsets = [0, 48], sizes = [8, 16], strides = [1, 1]} : vector<8x256xf32> to vector<8x16xf32>
    %101 = vector.extract_strided_slice %42 {offsets = [0, 32], sizes = [8, 16], strides = [1, 1]} : vector<8x256xf32> to vector<8x16xf32>
    %102 = vector.extract_strided_slice %42 {offsets = [0, 64], sizes = [8, 16], strides = [1, 1]} : vector<8x256xf32> to vector<8x16xf32>
    %cst_56 = arith.constant 2.500000e-01 : f32
    %103 = vector.broadcast %cst_56 : f32 to vector<8x16xf32>
    %104 = arith.mulf %103, %101 : vector<8x16xf32>
    %cst_57 = arith.constant 7.500000e-01 : f32
    %105 = vector.broadcast %cst_57 : f32 to vector<8x16xf32>
    %106 = arith.mulf %105, %100 : vector<8x16xf32>
    %107 = arith.addf %104, %106 : vector<8x16xf32>
    %c0_58 = arith.constant 0 : index
    %c6 = arith.constant 6 : index
    %c0_59 = arith.constant 0 : index
    %108 = vector.load %arg8[%c0_58, %c6, %c0_59] : memref<8x32x16xf32, #tpu.memory_space<vmem>>, vector<8x1x16xf32>
    %109 = vector.shape_cast %108 : vector<8x1x16xf32> to vector<8x16xf32>
    %110 = vector.shape_cast %107 : vector<8x16xf32> to vector<8x1x16xf32>
    tpu.vector_store %arg8[%c0_58, %c6, %c0_59], %110 {strides = array<i32>} : memref<8x32x16xf32, #tpu.memory_space<vmem>>, vector<8x1x16xf32>,
    %cst_60 = arith.constant 7.500000e-01 : f32
    %111 = vector.broadcast %cst_60 : f32 to vector<8x16xf32>
    %112 = arith.mulf %111, %100 : vector<8x16xf32>
    %cst_61 = arith.constant 2.500000e-01 : f32
    %113 = vector.broadcast %cst_61 : f32 to vector<8x16xf32>
    %114 = arith.mulf %113, %102 : vector<8x16xf32>
    %115 = arith.addf %112, %114 : vector<8x16xf32>
    %c0_62 = arith.constant 0 : index
    %c7 = arith.constant 7 : index
    %c0_63 = arith.constant 0 : index
    %116 = vector.load %arg8[%c0_62, %c7, %c0_63] : memref<8x32x16xf32, #tpu.memory_space<vmem>>, vector<8x1x16xf32>
    %117 = vector.shape_cast %116 : vector<8x1x16xf32> to vector<8x16xf32>
    %118 = vector.shape_cast %115 : vector<8x16xf32> to vector<8x1x16xf32>
    tpu.vector_store %arg8[%c0_62, %c7, %c0_63], %118 {strides = array<i32>} : memref<8x32x16xf32, #tpu.memory_space<vmem>>, vector<8x1x16xf32>,
    %119 = vector.extract_strided_slice %42 {offsets = [0, 64], sizes = [8, 16], strides = [1, 1]} : vector<8x256xf32> to vector<8x16xf32>
    %120 = vector.extract_strided_slice %42 {offsets = [0, 48], sizes = [8, 16], strides = [1, 1]} : vector<8x256xf32> to vector<8x16xf32>
    %121 = vector.extract_strided_slice %42 {offsets = [0, 80], sizes = [8, 16], strides = [1, 1]} : vector<8x256xf32> to vector<8x16xf32>
    %cst_64 = arith.constant 2.500000e-01 : f32
    %122 = vector.broadcast %cst_64 : f32 to vector<8x16xf32>
    %123 = arith.mulf %122, %120 : vector<8x16xf32>
    %cst_65 = arith.constant 7.500000e-01 : f32
    %124 = vector.broadcast %cst_65 : f32 to vector<8x16xf32>
    %125 = arith.mulf %124, %119 : vector<8x16xf32>
    %126 = arith.addf %123, %125 : vector<8x16xf32>
    %c0_66 = arith.constant 0 : index
    %c8_67 = arith.constant 8 : index
    %c0_68 = arith.constant 0 : index
    %127 = vector.load %arg8[%c0_66, %c8_67, %c0_68] : memref<8x32x16xf32, #tpu.memory_space<vmem>>, vector<8x1x16xf32>
    %128 = vector.shape_cast %127 : vector<8x1x16xf32> to vector<8x16xf32>
    %129 = vector.shape_cast %126 : vector<8x16xf32> to vector<8x1x16xf32>
    tpu.vector_store %arg8[%c0_66, %c8_67, %c0_68], %129 {strides = array<i32>} : memref<8x32x16xf32, #tpu.memory_space<vmem>>, vector<8x1x16xf32>,
    %cst_69 = arith.constant 7.500000e-01 : f32
    %130 = vector.broadcast %cst_69 : f32 to vector<8x16xf32>
    %131 = arith.mulf %130, %119 : vector<8x16xf32>
    %cst_70 = arith.constant 2.500000e-01 : f32
    %132 = vector.broadcast %cst_70 : f32 to vector<8x16xf32>
    %133 = arith.mulf %132, %121 : vector<8x16xf32>
    %134 = arith.addf %131, %133 : vector<8x16xf32>
    %c0_71 = arith.constant 0 : index
    %c9 = arith.constant 9 : index
    %c0_72 = arith.constant 0 : index
    %135 = vector.load %arg8[%c0_71, %c9, %c0_72] : memref<8x32x16xf32, #tpu.memory_space<vmem>>, vector<8x1x16xf32>
    %136 = vector.shape_cast %135 : vector<8x1x16xf32> to vector<8x16xf32>
    %137 = vector.shape_cast %134 : vector<8x16xf32> to vector<8x1x16xf32>
    tpu.vector_store %arg8[%c0_71, %c9, %c0_72], %137 {strides = array<i32>} : memref<8x32x16xf32, #tpu.memory_space<vmem>>, vector<8x1x16xf32>,
    %138 = vector.extract_strided_slice %42 {offsets = [0, 80], sizes = [8, 16], strides = [1, 1]} : vector<8x256xf32> to vector<8x16xf32>
    %139 = vector.extract_strided_slice %42 {offsets = [0, 64], sizes = [8, 16], strides = [1, 1]} : vector<8x256xf32> to vector<8x16xf32>
    %140 = vector.extract_strided_slice %42 {offsets = [0, 96], sizes = [8, 16], strides = [1, 1]} : vector<8x256xf32> to vector<8x16xf32>
    %cst_73 = arith.constant 2.500000e-01 : f32
    %141 = vector.broadcast %cst_73 : f32 to vector<8x16xf32>
    %142 = arith.mulf %141, %139 : vector<8x16xf32>
    %cst_74 = arith.constant 7.500000e-01 : f32
    %143 = vector.broadcast %cst_74 : f32 to vector<8x16xf32>
    %144 = arith.mulf %143, %138 : vector<8x16xf32>
    %145 = arith.addf %142, %144 : vector<8x16xf32>
    %c0_75 = arith.constant 0 : index
    %c10 = arith.constant 10 : index
    %c0_76 = arith.constant 0 : index
    %146 = vector.load %arg8[%c0_75, %c10, %c0_76] : memref<8x32x16xf32, #tpu.memory_space<vmem>>, vector<8x1x16xf32>
    %147 = vector.shape_cast %146 : vector<8x1x16xf32> to vector<8x16xf32>
    %148 = vector.shape_cast %145 : vector<8x16xf32> to vector<8x1x16xf32>
    tpu.vector_store %arg8[%c0_75, %c10, %c0_76], %148 {strides = array<i32>} : memref<8x32x16xf32, #tpu.memory_space<vmem>>, vector<8x1x16xf32>,
    %cst_77 = arith.constant 7.500000e-01 : f32
    %149 = vector.broadcast %cst_77 : f32 to vector<8x16xf32>
    %150 = arith.mulf %149, %138 : vector<8x16xf32>
    %cst_78 = arith.constant 2.500000e-01 : f32
    %151 = vector.broadcast %cst_78 : f32 to vector<8x16xf32>
    %152 = arith.mulf %151, %140 : vector<8x16xf32>
    %153 = arith.addf %150, %152 : vector<8x16xf32>
    %c0_79 = arith.constant 0 : index
    %c11 = arith.constant 11 : index
    %c0_80 = arith.constant 0 : index
    %154 = vector.load %arg8[%c0_79, %c11, %c0_80] : memref<8x32x16xf32, #tpu.memory_space<vmem>>, vector<8x1x16xf32>
    %155 = vector.shape_cast %154 : vector<8x1x16xf32> to vector<8x16xf32>
    %156 = vector.shape_cast %153 : vector<8x16xf32> to vector<8x1x16xf32>
    tpu.vector_store %arg8[%c0_79, %c11, %c0_80], %156 {strides = array<i32>} : memref<8x32x16xf32, #tpu.memory_space<vmem>>, vector<8x1x16xf32>,
    %157 = vector.extract_strided_slice %42 {offsets = [0, 96], sizes = [8, 16], strides = [1, 1]} : vector<8x256xf32> to vector<8x16xf32>
    %158 = vector.extract_strided_slice %42 {offsets = [0, 80], sizes = [8, 16], strides = [1, 1]} : vector<8x256xf32> to vector<8x16xf32>
    %159 = vector.extract_strided_slice %42 {offsets = [0, 112], sizes = [8, 16], strides = [1, 1]} : vector<8x256xf32> to vector<8x16xf32>
    %cst_81 = arith.constant 2.500000e-01 : f32
    %160 = vector.broadcast %cst_81 : f32 to vector<8x16xf32>
    %161 = arith.mulf %160, %158 : vector<8x16xf32>
    %cst_82 = arith.constant 7.500000e-01 : f32
    %162 = vector.broadcast %cst_82 : f32 to vector<8x16xf32>
    %163 = arith.mulf %162, %157 : vector<8x16xf32>
    %164 = arith.addf %161, %163 : vector<8x16xf32>
    %c0_83 = arith.constant 0 : index
    %c12_84 = arith.constant 12 : index
    %c0_85 = arith.constant 0 : index
    %165 = vector.load %arg8[%c0_83, %c12_84, %c0_85] : memref<8x32x16xf32, #tpu.memory_space<vmem>>, vector<8x1x16xf32>
    %166 = vector.shape_cast %165 : vector<8x1x16xf32> to vector<8x16xf32>
    %167 = vector.shape_cast %164 : vector<8x16xf32> to vector<8x1x16xf32>
    tpu.vector_store %arg8[%c0_83, %c12_84, %c0_85], %167 {strides = array<i32>} : memref<8x32x16xf32, #tpu.memory_space<vmem>>, vector<8x1x16xf32>,
    %cst_86 = arith.constant 7.500000e-01 : f32
    %168 = vector.broadcast %cst_86 : f32 to vector<8x16xf32>
    %169 = arith.mulf %168, %157 : vector<8x16xf32>
    %cst_87 = arith.constant 2.500000e-01 : f32
    %170 = vector.broadcast %cst_87 : f32 to vector<8x16xf32>
    %171 = arith.mulf %170, %159 : vector<8x16xf32>
    %172 = arith.addf %169, %171 : vector<8x16xf32>
    %c0_88 = arith.constant 0 : index
    %c13 = arith.constant 13 : index
    %c0_89 = arith.constant 0 : index
    %173 = vector.load %arg8[%c0_88, %c13, %c0_89] : memref<8x32x16xf32, #tpu.memory_space<vmem>>, vector<8x1x16xf32>
    %174 = vector.shape_cast %173 : vector<8x1x16xf32> to vector<8x16xf32>
    %175 = vector.shape_cast %172 : vector<8x16xf32> to vector<8x1x16xf32>
    tpu.vector_store %arg8[%c0_88, %c13, %c0_89], %175 {strides = array<i32>} : memref<8x32x16xf32, #tpu.memory_space<vmem>>, vector<8x1x16xf32>,
    %176 = vector.extract_strided_slice %42 {offsets = [0, 112], sizes = [8, 16], strides = [1, 1]} : vector<8x256xf32> to vector<8x16xf32>
    %177 = vector.extract_strided_slice %42 {offsets = [0, 96], sizes = [8, 16], strides = [1, 1]} : vector<8x256xf32> to vector<8x16xf32>
    %178 = vector.extract_strided_slice %42 {offsets = [0, 128], sizes = [8, 16], strides = [1, 1]} : vector<8x256xf32> to vector<8x16xf32>
    %cst_90 = arith.constant 2.500000e-01 : f32
    %179 = vector.broadcast %cst_90 : f32 to vector<8x16xf32>
    %180 = arith.mulf %179, %177 : vector<8x16xf32>
    %cst_91 = arith.constant 7.500000e-01 : f32
    %181 = vector.broadcast %cst_91 : f32 to vector<8x16xf32>
    %182 = arith.mulf %181, %176 : vector<8x16xf32>
    %183 = arith.addf %180, %182 : vector<8x16xf32>
    %c0_92 = arith.constant 0 : index
    %c14 = arith.constant 14 : index
    %c0_93 = arith.constant 0 : index
    %184 = vector.load %arg8[%c0_92, %c14, %c0_93] : memref<8x32x16xf32, #tpu.memory_space<vmem>>, vector<8x1x16xf32>
    %185 = vector.shape_cast %184 : vector<8x1x16xf32> to vector<8x16xf32>
    %186 = vector.shape_cast %183 : vector<8x16xf32> to vector<8x1x16xf32>
    tpu.vector_store %arg8[%c0_92, %c14, %c0_93], %186 {strides = array<i32>} : memref<8x32x16xf32, #tpu.memory_space<vmem>>, vector<8x1x16xf32>,
    %cst_94 = arith.constant 7.500000e-01 : f32
    %187 = vector.broadcast %cst_94 : f32 to vector<8x16xf32>
    %188 = arith.mulf %187, %176 : vector<8x16xf32>
    %cst_95 = arith.constant 2.500000e-01 : f32
    %189 = vector.broadcast %cst_95 : f32 to vector<8x16xf32>
    %190 = arith.mulf %189, %178 : vector<8x16xf32>
    %191 = arith.addf %188, %190 : vector<8x16xf32>
    %c0_96 = arith.constant 0 : index
    %c15 = arith.constant 15 : index
    %c0_97 = arith.constant 0 : index
    %192 = vector.load %arg8[%c0_96, %c15, %c0_97] : memref<8x32x16xf32, #tpu.memory_space<vmem>>, vector<8x1x16xf32>
    %193 = vector.shape_cast %192 : vector<8x1x16xf32> to vector<8x16xf32>
    %194 = vector.shape_cast %191 : vector<8x16xf32> to vector<8x1x16xf32>
    tpu.vector_store %arg8[%c0_96, %c15, %c0_97], %194 {strides = array<i32>} : memref<8x32x16xf32, #tpu.memory_space<vmem>>, vector<8x1x16xf32>,
    %195 = vector.extract_strided_slice %42 {offsets = [0, 128], sizes = [8, 16], strides = [1, 1]} : vector<8x256xf32> to vector<8x16xf32>
    %196 = vector.extract_strided_slice %42 {offsets = [0, 112], sizes = [8, 16], strides = [1, 1]} : vector<8x256xf32> to vector<8x16xf32>
    %197 = vector.extract_strided_slice %42 {offsets = [0, 144], sizes = [8, 16], strides = [1, 1]} : vector<8x256xf32> to vector<8x16xf32>
    %cst_98 = arith.constant 2.500000e-01 : f32
    %198 = vector.broadcast %cst_98 : f32 to vector<8x16xf32>
    %199 = arith.mulf %198, %196 : vector<8x16xf32>
    %cst_99 = arith.constant 7.500000e-01 : f32
    %200 = vector.broadcast %cst_99 : f32 to vector<8x16xf32>
    %201 = arith.mulf %200, %195 : vector<8x16xf32>
    %202 = arith.addf %199, %201 : vector<8x16xf32>
    %c0_100 = arith.constant 0 : index
    %c16_101 = arith.constant 16 : index
    %c0_102 = arith.constant 0 : index
    %203 = vector.load %arg8[%c0_100, %c16_101, %c0_102] : memref<8x32x16xf32, #tpu.memory_space<vmem>>, vector<8x1x16xf32>
    %204 = vector.shape_cast %203 : vector<8x1x16xf32> to vector<8x16xf32>
    %205 = vector.shape_cast %202 : vector<8x16xf32> to vector<8x1x16xf32>
    tpu.vector_store %arg8[%c0_100, %c16_101, %c0_102], %205 {strides = array<i32>} : memref<8x32x16xf32, #tpu.memory_space<vmem>>, vector<8x1x16xf32>,
    %cst_103 = arith.constant 7.500000e-01 : f32
    %206 = vector.broadcast %cst_103 : f32 to vector<8x16xf32>
    %207 = arith.mulf %206, %195 : vector<8x16xf32>
    %cst_104 = arith.constant 2.500000e-01 : f32
    %208 = vector.broadcast %cst_104 : f32 to vector<8x16xf32>
    %209 = arith.mulf %208, %197 : vector<8x16xf32>
    %210 = arith.addf %207, %209 : vector<8x16xf32>
    %c0_105 = arith.constant 0 : index
    %c17 = arith.constant 17 : index
    %c0_106 = arith.constant 0 : index
    %211 = vector.load %arg8[%c0_105, %c17, %c0_106] : memref<8x32x16xf32, #tpu.memory_space<vmem>>, vector<8x1x16xf32>
    %212 = vector.shape_cast %211 : vector<8x1x16xf32> to vector<8x16xf32>
    %213 = vector.shape_cast %210 : vector<8x16xf32> to vector<8x1x16xf32>
    tpu.vector_store %arg8[%c0_105, %c17, %c0_106], %213 {strides = array<i32>} : memref<8x32x16xf32, #tpu.memory_space<vmem>>, vector<8x1x16xf32>,
    %214 = vector.extract_strided_slice %42 {offsets = [0, 144], sizes = [8, 16], strides = [1, 1]} : vector<8x256xf32> to vector<8x16xf32>
    %215 = vector.extract_strided_slice %42 {offsets = [0, 128], sizes = [8, 16], strides = [1, 1]} : vector<8x256xf32> to vector<8x16xf32>
    %216 = vector.extract_strided_slice %42 {offsets = [0, 160], sizes = [8, 16], strides = [1, 1]} : vector<8x256xf32> to vector<8x16xf32>
    %cst_107 = arith.constant 2.500000e-01 : f32
    %217 = vector.broadcast %cst_107 : f32 to vector<8x16xf32>
    %218 = arith.mulf %217, %215 : vector<8x16xf32>
    %cst_108 = arith.constant 7.500000e-01 : f32
    %219 = vector.broadcast %cst_108 : f32 to vector<8x16xf32>
    %220 = arith.mulf %219, %214 : vector<8x16xf32>
    %221 = arith.addf %218, %220 : vector<8x16xf32>
    %c0_109 = arith.constant 0 : index
    %c18 = arith.constant 18 : index
    %c0_110 = arith.constant 0 : index
    %222 = vector.load %arg8[%c0_109, %c18, %c0_110] : memref<8x32x16xf32, #tpu.memory_space<vmem>>, vector<8x1x16xf32>
    %223 = vector.shape_cast %222 : vector<8x1x16xf32> to vector<8x16xf32>
    %224 = vector.shape_cast %221 : vector<8x16xf32> to vector<8x1x16xf32>
    tpu.vector_store %arg8[%c0_109, %c18, %c0_110], %224 {strides = array<i32>} : memref<8x32x16xf32, #tpu.memory_space<vmem>>, vector<8x1x16xf32>,
    %cst_111 = arith.constant 7.500000e-01 : f32
    %225 = vector.broadcast %cst_111 : f32 to vector<8x16xf32>
    %226 = arith.mulf %225, %214 : vector<8x16xf32>
    %cst_112 = arith.constant 2.500000e-01 : f32
    %227 = vector.broadcast %cst_112 : f32 to vector<8x16xf32>
    %228 = arith.mulf %227, %216 : vector<8x16xf32>
    %229 = arith.addf %226, %228 : vector<8x16xf32>
    %c0_113 = arith.constant 0 : index
    %c19 = arith.constant 19 : index
    %c0_114 = arith.constant 0 : index
    %230 = vector.load %arg8[%c0_113, %c19, %c0_114] : memref<8x32x16xf32, #tpu.memory_space<vmem>>, vector<8x1x16xf32>
    %231 = vector.shape_cast %230 : vector<8x1x16xf32> to vector<8x16xf32>
    %232 = vector.shape_cast %229 : vector<8x16xf32> to vector<8x1x16xf32>
    tpu.vector_store %arg8[%c0_113, %c19, %c0_114], %232 {strides = array<i32>} : memref<8x32x16xf32, #tpu.memory_space<vmem>>, vector<8x1x16xf32>,
    %233 = vector.extract_strided_slice %42 {offsets = [0, 160], sizes = [8, 16], strides = [1, 1]} : vector<8x256xf32> to vector<8x16xf32>
    %234 = vector.extract_strided_slice %42 {offsets = [0, 144], sizes = [8, 16], strides = [1, 1]} : vector<8x256xf32> to vector<8x16xf32>
    %235 = vector.extract_strided_slice %42 {offsets = [0, 176], sizes = [8, 16], strides = [1, 1]} : vector<8x256xf32> to vector<8x16xf32>
    %cst_115 = arith.constant 2.500000e-01 : f32
    %236 = vector.broadcast %cst_115 : f32 to vector<8x16xf32>
    %237 = arith.mulf %236, %234 : vector<8x16xf32>
    %cst_116 = arith.constant 7.500000e-01 : f32
    %238 = vector.broadcast %cst_116 : f32 to vector<8x16xf32>
    %239 = arith.mulf %238, %233 : vector<8x16xf32>
    %240 = arith.addf %237, %239 : vector<8x16xf32>
    %c0_117 = arith.constant 0 : index
    %c20_118 = arith.constant 20 : index
    %c0_119 = arith.constant 0 : index
    %241 = vector.load %arg8[%c0_117, %c20_118, %c0_119] : memref<8x32x16xf32, #tpu.memory_space<vmem>>, vector<8x1x16xf32>
    %242 = vector.shape_cast %241 : vector<8x1x16xf32> to vector<8x16xf32>
    %243 = vector.shape_cast %240 : vector<8x16xf32> to vector<8x1x16xf32>
    tpu.vector_store %arg8[%c0_117, %c20_118, %c0_119], %243 {strides = array<i32>} : memref<8x32x16xf32, #tpu.memory_space<vmem>>, vector<8x1x16xf32>,
    %cst_120 = arith.constant 7.500000e-01 : f32
    %244 = vector.broadcast %cst_120 : f32 to vector<8x16xf32>
    %245 = arith.mulf %244, %233 : vector<8x16xf32>
    %cst_121 = arith.constant 2.500000e-01 : f32
    %246 = vector.broadcast %cst_121 : f32 to vector<8x16xf32>
    %247 = arith.mulf %246, %235 : vector<8x16xf32>
    %248 = arith.addf %245, %247 : vector<8x16xf32>
    %c0_122 = arith.constant 0 : index
    %c21 = arith.constant 21 : index
    %c0_123 = arith.constant 0 : index
    %249 = vector.load %arg8[%c0_122, %c21, %c0_123] : memref<8x32x16xf32, #tpu.memory_space<vmem>>, vector<8x1x16xf32>
    %250 = vector.shape_cast %249 : vector<8x1x16xf32> to vector<8x16xf32>
    %251 = vector.shape_cast %248 : vector<8x16xf32> to vector<8x1x16xf32>
    tpu.vector_store %arg8[%c0_122, %c21, %c0_123], %251 {strides = array<i32>} : memref<8x32x16xf32, #tpu.memory_space<vmem>>, vector<8x1x16xf32>,
    %252 = vector.extract_strided_slice %42 {offsets = [0, 176], sizes = [8, 16], strides = [1, 1]} : vector<8x256xf32> to vector<8x16xf32>
    %253 = vector.extract_strided_slice %42 {offsets = [0, 160], sizes = [8, 16], strides = [1, 1]} : vector<8x256xf32> to vector<8x16xf32>
    %254 = vector.extract_strided_slice %42 {offsets = [0, 192], sizes = [8, 16], strides = [1, 1]} : vector<8x256xf32> to vector<8x16xf32>
    %cst_124 = arith.constant 2.500000e-01 : f32
    %255 = vector.broadcast %cst_124 : f32 to vector<8x16xf32>
    %256 = arith.mulf %255, %253 : vector<8x16xf32>
    %cst_125 = arith.constant 7.500000e-01 : f32
    %257 = vector.broadcast %cst_125 : f32 to vector<8x16xf32>
    %258 = arith.mulf %257, %252 : vector<8x16xf32>
    %259 = arith.addf %256, %258 : vector<8x16xf32>
    %c0_126 = arith.constant 0 : index
    %c22 = arith.constant 22 : index
    %c0_127 = arith.constant 0 : index
    %260 = vector.load %arg8[%c0_126, %c22, %c0_127] : memref<8x32x16xf32, #tpu.memory_space<vmem>>, vector<8x1x16xf32>
    %261 = vector.shape_cast %260 : vector<8x1x16xf32> to vector<8x16xf32>
    %262 = vector.shape_cast %259 : vector<8x16xf32> to vector<8x1x16xf32>
    tpu.vector_store %arg8[%c0_126, %c22, %c0_127], %262 {strides = array<i32>} : memref<8x32x16xf32, #tpu.memory_space<vmem>>, vector<8x1x16xf32>,
    %cst_128 = arith.constant 7.500000e-01 : f32
    %263 = vector.broadcast %cst_128 : f32 to vector<8x16xf32>
    %264 = arith.mulf %263, %252 : vector<8x16xf32>
    %cst_129 = arith.constant 2.500000e-01 : f32
    %265 = vector.broadcast %cst_129 : f32 to vector<8x16xf32>
    %266 = arith.mulf %265, %254 : vector<8x16xf32>
    %267 = arith.addf %264, %266 : vector<8x16xf32>
    %c0_130 = arith.constant 0 : index
    %c23 = arith.constant 23 : index
    %c0_131 = arith.constant 0 : index
    %268 = vector.load %arg8[%c0_130, %c23, %c0_131] : memref<8x32x16xf32, #tpu.memory_space<vmem>>, vector<8x1x16xf32>
    %269 = vector.shape_cast %268 : vector<8x1x16xf32> to vector<8x16xf32>
    %270 = vector.shape_cast %267 : vector<8x16xf32> to vector<8x1x16xf32>
    tpu.vector_store %arg8[%c0_130, %c23, %c0_131], %270 {strides = array<i32>} : memref<8x32x16xf32, #tpu.memory_space<vmem>>, vector<8x1x16xf32>,
    %271 = vector.extract_strided_slice %42 {offsets = [0, 192], sizes = [8, 16], strides = [1, 1]} : vector<8x256xf32> to vector<8x16xf32>
    %272 = vector.extract_strided_slice %42 {offsets = [0, 176], sizes = [8, 16], strides = [1, 1]} : vector<8x256xf32> to vector<8x16xf32>
    %273 = vector.extract_strided_slice %42 {offsets = [0, 208], sizes = [8, 16], strides = [1, 1]} : vector<8x256xf32> to vector<8x16xf32>
    %cst_132 = arith.constant 2.500000e-01 : f32
    %274 = vector.broadcast %cst_132 : f32 to vector<8x16xf32>
    %275 = arith.mulf %274, %272 : vector<8x16xf32>
    %cst_133 = arith.constant 7.500000e-01 : f32
    %276 = vector.broadcast %cst_133 : f32 to vector<8x16xf32>
    %277 = arith.mulf %276, %271 : vector<8x16xf32>
    %278 = arith.addf %275, %277 : vector<8x16xf32>
    %c0_134 = arith.constant 0 : index
    %c24_135 = arith.constant 24 : index
    %c0_136 = arith.constant 0 : index
    %279 = vector.load %arg8[%c0_134, %c24_135, %c0_136] : memref<8x32x16xf32, #tpu.memory_space<vmem>>, vector<8x1x16xf32>
    %280 = vector.shape_cast %279 : vector<8x1x16xf32> to vector<8x16xf32>
    %281 = vector.shape_cast %278 : vector<8x16xf32> to vector<8x1x16xf32>
    tpu.vector_store %arg8[%c0_134, %c24_135, %c0_136], %281 {strides = array<i32>} : memref<8x32x16xf32, #tpu.memory_space<vmem>>, vector<8x1x16xf32>,
    %cst_137 = arith.constant 7.500000e-01 : f32
    %282 = vector.broadcast %cst_137 : f32 to vector<8x16xf32>
    %283 = arith.mulf %282, %271 : vector<8x16xf32>
    %cst_138 = arith.constant 2.500000e-01 : f32
    %284 = vector.broadcast %cst_138 : f32 to vector<8x16xf32>
    %285 = arith.mulf %284, %273 : vector<8x16xf32>
    %286 = arith.addf %283, %285 : vector<8x16xf32>
    %c0_139 = arith.constant 0 : index
    %c25 = arith.constant 25 : index
    %c0_140 = arith.constant 0 : index
    %287 = vector.load %arg8[%c0_139, %c25, %c0_140] : memref<8x32x16xf32, #tpu.memory_space<vmem>>, vector<8x1x16xf32>
    %288 = vector.shape_cast %287 : vector<8x1x16xf32> to vector<8x16xf32>
    %289 = vector.shape_cast %286 : vector<8x16xf32> to vector<8x1x16xf32>
    tpu.vector_store %arg8[%c0_139, %c25, %c0_140], %289 {strides = array<i32>} : memref<8x32x16xf32, #tpu.memory_space<vmem>>, vector<8x1x16xf32>,
    %290 = vector.extract_strided_slice %42 {offsets = [0, 208], sizes = [8, 16], strides = [1, 1]} : vector<8x256xf32> to vector<8x16xf32>
    %291 = vector.extract_strided_slice %42 {offsets = [0, 192], sizes = [8, 16], strides = [1, 1]} : vector<8x256xf32> to vector<8x16xf32>
    %292 = vector.extract_strided_slice %42 {offsets = [0, 224], sizes = [8, 16], strides = [1, 1]} : vector<8x256xf32> to vector<8x16xf32>
    %cst_141 = arith.constant 2.500000e-01 : f32
    %293 = vector.broadcast %cst_141 : f32 to vector<8x16xf32>
    %294 = arith.mulf %293, %291 : vector<8x16xf32>
    %cst_142 = arith.constant 7.500000e-01 : f32
    %295 = vector.broadcast %cst_142 : f32 to vector<8x16xf32>
    %296 = arith.mulf %295, %290 : vector<8x16xf32>
    %297 = arith.addf %294, %296 : vector<8x16xf32>
    %c0_143 = arith.constant 0 : index
    %c26 = arith.constant 26 : index
    %c0_144 = arith.constant 0 : index
    %298 = vector.load %arg8[%c0_143, %c26, %c0_144] : memref<8x32x16xf32, #tpu.memory_space<vmem>>, vector<8x1x16xf32>
    %299 = vector.shape_cast %298 : vector<8x1x16xf32> to vector<8x16xf32>
    %300 = vector.shape_cast %297 : vector<8x16xf32> to vector<8x1x16xf32>
    tpu.vector_store %arg8[%c0_143, %c26, %c0_144], %300 {strides = array<i32>} : memref<8x32x16xf32, #tpu.memory_space<vmem>>, vector<8x1x16xf32>,
    %cst_145 = arith.constant 7.500000e-01 : f32
    %301 = vector.broadcast %cst_145 : f32 to vector<8x16xf32>
    %302 = arith.mulf %301, %290 : vector<8x16xf32>
    %cst_146 = arith.constant 2.500000e-01 : f32
    %303 = vector.broadcast %cst_146 : f32 to vector<8x16xf32>
    %304 = arith.mulf %303, %292 : vector<8x16xf32>
    %305 = arith.addf %302, %304 : vector<8x16xf32>
    %c0_147 = arith.constant 0 : index
    %c27 = arith.constant 27 : index
    %c0_148 = arith.constant 0 : index
    %306 = vector.load %arg8[%c0_147, %c27, %c0_148] : memref<8x32x16xf32, #tpu.memory_space<vmem>>, vector<8x1x16xf32>
    %307 = vector.shape_cast %306 : vector<8x1x16xf32> to vector<8x16xf32>
    %308 = vector.shape_cast %305 : vector<8x16xf32> to vector<8x1x16xf32>
    tpu.vector_store %arg8[%c0_147, %c27, %c0_148], %308 {strides = array<i32>} : memref<8x32x16xf32, #tpu.memory_space<vmem>>, vector<8x1x16xf32>,
    %309 = vector.extract_strided_slice %42 {offsets = [0, 224], sizes = [8, 16], strides = [1, 1]} : vector<8x256xf32> to vector<8x16xf32>
    %310 = vector.extract_strided_slice %42 {offsets = [0, 208], sizes = [8, 16], strides = [1, 1]} : vector<8x256xf32> to vector<8x16xf32>
    %311 = vector.extract_strided_slice %42 {offsets = [0, 240], sizes = [8, 16], strides = [1, 1]} : vector<8x256xf32> to vector<8x16xf32>
    %cst_149 = arith.constant 2.500000e-01 : f32
    %312 = vector.broadcast %cst_149 : f32 to vector<8x16xf32>
    %313 = arith.mulf %312, %310 : vector<8x16xf32>
    %cst_150 = arith.constant 7.500000e-01 : f32
    %314 = vector.broadcast %cst_150 : f32 to vector<8x16xf32>
    %315 = arith.mulf %314, %309 : vector<8x16xf32>
    %316 = arith.addf %313, %315 : vector<8x16xf32>
    %c0_151 = arith.constant 0 : index
    %c28_152 = arith.constant 28 : index
    %c0_153 = arith.constant 0 : index
    %317 = vector.load %arg8[%c0_151, %c28_152, %c0_153] : memref<8x32x16xf32, #tpu.memory_space<vmem>>, vector<8x1x16xf32>
    %318 = vector.shape_cast %317 : vector<8x1x16xf32> to vector<8x16xf32>
    %319 = vector.shape_cast %316 : vector<8x16xf32> to vector<8x1x16xf32>
    tpu.vector_store %arg8[%c0_151, %c28_152, %c0_153], %319 {strides = array<i32>} : memref<8x32x16xf32, #tpu.memory_space<vmem>>, vector<8x1x16xf32>,
    %cst_154 = arith.constant 7.500000e-01 : f32
    %320 = vector.broadcast %cst_154 : f32 to vector<8x16xf32>
    %321 = arith.mulf %320, %309 : vector<8x16xf32>
    %cst_155 = arith.constant 2.500000e-01 : f32
    %322 = vector.broadcast %cst_155 : f32 to vector<8x16xf32>
    %323 = arith.mulf %322, %311 : vector<8x16xf32>
    %324 = arith.addf %321, %323 : vector<8x16xf32>
    %c0_156 = arith.constant 0 : index
    %c29 = arith.constant 29 : index
    %c0_157 = arith.constant 0 : index
    %325 = vector.load %arg8[%c0_156, %c29, %c0_157] : memref<8x32x16xf32, #tpu.memory_space<vmem>>, vector<8x1x16xf32>
    %326 = vector.shape_cast %325 : vector<8x1x16xf32> to vector<8x16xf32>
    %327 = vector.shape_cast %324 : vector<8x16xf32> to vector<8x1x16xf32>
    tpu.vector_store %arg8[%c0_156, %c29, %c0_157], %327 {strides = array<i32>} : memref<8x32x16xf32, #tpu.memory_space<vmem>>, vector<8x1x16xf32>,
    %328 = vector.extract_strided_slice %42 {offsets = [0, 240], sizes = [8, 16], strides = [1, 1]} : vector<8x256xf32> to vector<8x16xf32>
    %329 = vector.extract_strided_slice %42 {offsets = [0, 224], sizes = [8, 16], strides = [1, 1]} : vector<8x256xf32> to vector<8x16xf32>
    %330 = vector.extract_strided_slice %42 {offsets = [0, 240], sizes = [8, 16], strides = [1, 1]} : vector<8x256xf32> to vector<8x16xf32>
    %cst_158 = arith.constant 2.500000e-01 : f32
    %331 = vector.broadcast %cst_158 : f32 to vector<8x16xf32>
    %332 = arith.mulf %331, %329 : vector<8x16xf32>
    %cst_159 = arith.constant 7.500000e-01 : f32
    %333 = vector.broadcast %cst_159 : f32 to vector<8x16xf32>
    %334 = arith.mulf %333, %328 : vector<8x16xf32>
    %335 = arith.addf %332, %334 : vector<8x16xf32>
    %c0_160 = arith.constant 0 : index
    %c30 = arith.constant 30 : index
    %c0_161 = arith.constant 0 : index
    %336 = vector.load %arg8[%c0_160, %c30, %c0_161] : memref<8x32x16xf32, #tpu.memory_space<vmem>>, vector<8x1x16xf32>
    %337 = vector.shape_cast %336 : vector<8x1x16xf32> to vector<8x16xf32>
    %338 = vector.shape_cast %335 : vector<8x16xf32> to vector<8x1x16xf32>
    tpu.vector_store %arg8[%c0_160, %c30, %c0_161], %338 {strides = array<i32>} : memref<8x32x16xf32, #tpu.memory_space<vmem>>, vector<8x1x16xf32>,
    %cst_162 = arith.constant 7.500000e-01 : f32
    %339 = vector.broadcast %cst_162 : f32 to vector<8x16xf32>
    %340 = arith.mulf %339, %328 : vector<8x16xf32>
    %cst_163 = arith.constant 2.500000e-01 : f32
    %341 = vector.broadcast %cst_163 : f32 to vector<8x16xf32>
    %342 = arith.mulf %341, %330 : vector<8x16xf32>
    %343 = arith.addf %340, %342 : vector<8x16xf32>
    %c0_164 = arith.constant 0 : index
    %c31 = arith.constant 31 : index
    %c0_165 = arith.constant 0 : index
    %344 = vector.load %arg8[%c0_164, %c31, %c0_165] : memref<8x32x16xf32, #tpu.memory_space<vmem>>, vector<8x1x16xf32>
    %345 = vector.shape_cast %344 : vector<8x1x16xf32> to vector<8x16xf32>
    %346 = vector.shape_cast %343 : vector<8x16xf32> to vector<8x1x16xf32>
    tpu.vector_store %arg8[%c0_164, %c31, %c0_165], %346 {strides = array<i32>} : memref<8x32x16xf32, #tpu.memory_space<vmem>>, vector<8x1x16xf32>,
    %c0_166 = arith.constant 0 : index
    %c0_167 = arith.constant 0 : index
    %c0_168 = arith.constant 0 : index
    %347 = vector.load %arg8[%c0_166, %c0_167, %c0_168] : memref<8x32x16xf32, #tpu.memory_space<vmem>>, vector<8x32x16xf32>
    %348 = vector.shape_cast %347 : vector<8x32x16xf32> to vector<256x16xf32>
    %349 = arith.truncf %348 : vector<256x16xf32> to vector<256x16xbf16>
    %c0_169 = arith.constant 0 : index
    %c0_170 = arith.constant 0 : index
    %350 = vector.load %arg4[%c0_169, %c0_170] : memref<16x32xbf16, #tpu.memory_space<vmem>>, vector<16x32xbf16>
    %cst_171 = arith.constant dense<0.000000e+00> : vector<256x32xf32>
    %351 = tpu.matmul %349, %350, %cst_171 {dimension_numbers = #tpu.dot_dimension_numbers<[1], [0], [0], [1], [0, 0, 1, 1], [], []>} : vector<256x16xbf16>, vector<16x32xbf16>, vector<256x32xf32> -> vector<256x32xf32>
    %352 = vector.shape_cast %351 : vector<256x32xf32> to vector<8x32x32xf32>
    %c0_172 = arith.constant 0 : index
    %c0_173 = arith.constant 0 : index
    %c0_174 = arith.constant 0 : index
    %c0_175 = arith.constant 0 : index
    %353 = vector.load %arg5[%c0_172, %c0_173, %c0_174, %c0_175] : memref<1x8x32x32xf32, #tpu.memory_space<vmem>>, vector<1x8x32x32xf32>
    %354 = vector.shape_cast %353 : vector<1x8x32x32xf32> to vector<8x32x32xf32>
    %355 = vector.shape_cast %352 : vector<8x32x32xf32> to vector<1x8x32x32xf32>
    tpu.vector_store %arg5[%c0_172, %c0_173, %c0_174, %c0_175], %355 {strides = array<i32>} : memref<1x8x32x32xf32, #tpu.memory_space<vmem>>, vector<1x8x32x32xf32>,
    return
  }
  func.func @transform_0(%arg0: i32) -> (i32, i32, i32, i32) {
    %c0_i32 = arith.constant 0 : i32
    %c0_i32_0 = arith.constant 0 : i32
    %c0_i32_1 = arith.constant 0 : i32
    %c0_i32_2 = arith.constant 0 : i32
    return %arg0, %c0_i32, %c0_i32_0, %c0_i32_1 : i32, i32, i32, i32
  }
  func.func @transform_1(%arg0: i32) -> (i32, i32) {
    %c0_i32 = arith.constant 0 : i32
    %c0_i32_0 = arith.constant 0 : i32
    %c0_i32_1 = arith.constant 0 : i32
    return %c0_i32, %c0_i32_0 : i32, i32
  }
  func.func @transform_2(%arg0: i32) -> (i32, i32) {
    %c0_i32 = arith.constant 0 : i32
    %c0_i32_0 = arith.constant 0 : i32
    %c0_i32_1 = arith.constant 0 : i32
    return %c0_i32, %c0_i32_0 : i32, i32
  }
  func.func @transform_3(%arg0: i32) -> (i32, i32) {
    %c0_i32 = arith.constant 0 : i32
    %c0_i32_0 = arith.constant 0 : i32
    %c0_i32_1 = arith.constant 0 : i32
    return %c0_i32, %c0_i32_0 : i32, i32
  }
  func.func @transform_4(%arg0: i32) -> (i32, i32, i32, i32) {
    %c0_i32 = arith.constant 0 : i32
    %c0_i32_0 = arith.constant 0 : i32
    %c0_i32_1 = arith.constant 0 : i32
    %c0_i32_2 = arith.constant 0 : i32
    return %arg0, %c0_i32, %c0_i32_0, %c0_i32_1 : i32, i32, i32, i32
  }
}

</mosaic_0001>

<llo_original>
// kernel: tpu_custom_call.1
$region0: #{tpu_custom_call.1}
  #allocation0 [shape = 'u32[]', space=smem, size = 0x4, offset = 0x4, fixed_abs, tag = 'smem constant byte address 0x4 - core index']
  #allocation1 [shape = 'u32[144,128]{1,0:T(1,128)}', space=vmem, size = 0x12000, scoped, tag = 'internal scratch']
  #allocation2 [shape = 'f32[18,18,4]{2,1,0:T(8,128)}', space=vmem, size = 0x36000, scoped, tag = 'scratch operand']
  #allocation3 [shape = 'f32[256,36]{1,0:T(8,128)}', space=vmem, size = 0x20000, scoped, tag = 'scratch operand']
  #allocation4 [shape = 'f32[8,32,16]{2,1,0:T(8,128)}', space=vmem, size = 0x20000, scoped, tag = 'scratch operand']
  %s0 = inlined_call_operand.vmem [shape: f32[2,16,16,4], index: 0, kind: input, shape index: {}]
  %s1 = inlined_call_operand.vmem [shape: bf16[36,8], index: 1, kind: input, shape index: {}]
  %s2 = inlined_call_operand.vmem [shape: f32[1,8], index: 2, kind: input, shape index: {}]
  %s3 = inlined_call_operand.vmem [shape: bf16[16,32], index: 3, kind: input, shape index: {}]
  %s4 = inlined_call_operand.hbm [shape: f32[2,8,32,32], index: 4, kind: output, shape index: {}]
  %s5 = sld [smem:[#allocation0]]
  $region49: #{tpu_custom_call.1} parent=0
    _
  %s7 = ssub.s32 1, %s5
  %s8 = scalar_select 0, %s7, %s5
  $region1: #{tpu_custom_call.1} parent=0
    #allocation5 [shape = 'u8[262144]{0}', space=vmem, size = 0x40000, scoped, tag = 'output window, operand 0']
    #allocation6 [shape = 's32[2]{0}', space=sflag, size = 0x8, scoped, tag = 'scoped memory for tpu_custom_call.1']
    %9 = vsyncpa [#allocation6], 0
    %s10 = scalar_lea.sflag [#allocation6], 1
    %11 = vsyncpa %s10, 0
    loop: start=0, step=1, limit=4
    $region2: #{tpu_custom_call.1} parent=1 // loop_pre_header
      _
    $region3: #{tpu_custom_call.1} parent=1 // loop_header
      %s13 = sphi 0, %s17
      %p14 = scmp.ge.s32.totalorder %s13, 4
      %s23 = sphi 0, %s25
      %s26 = sphi 0, %s23
      %s27 = sphi 0, %s26
      %s43 = sphi 0, %s27
      %s47 = sphi 0, %s47
      %s49 = sphi 0, %s47
      %s50 = sphi 0, %s49
      %s64 = sphi 0, %s50
      %s68 = sphi 0, %s68
      %s70 = sphi 0, %s68
      %s71 = sphi 0, %s70
      %s85 = sphi 0, %s71
      %s89 = sphi 0, %s89
      %s91 = sphi 0, %s89
      %s92 = sphi 0, %s91
      %s106 = sphi 0, %s92
      %s112 = sphi 0, %s114
      %s115 = sphi 0, %s112
      %s116 = sphi 0, %s115
      %s132 = sphi 0, %s116
    $region4: #{tpu_custom_call.1} parent=1 // loop_header_branch
      %16 = sbr.rel (%p14) target = $region8
    $region5: #{tpu_custom_call.1} parent=1 // loop_body
      %s18 = ssub.s32 %s13, 1
      %s19 = ssub.s32 %s13, 2
      %s20 = sadd.s32 %s13, 1
      %s21 = ssub.s32 %s13, %s20
      %p22 = scmp.eq.s32.totalorder %s21, 0
      %s24 = sadd.s32 %s23, 1
      %s25 = scalar_select %p22, %s23, %s24
      %p28 = pneg %p22
      %p29 = scmp.eq.s32.totalorder %s13, 1
      %p30 = por %p28, %p29
      %p31 = scmp.ne.s32.totalorder %s23, %s26
      %p32 = scmp.eq.s32.totalorder %s13, 0
      %p33 = por %p31, %p32
      %p34 = scmp.ne.s32.totalorder %s23, %s26
      %p35 = scmp.eq.s32.totalorder %s18, 1
      %p36 = por %p34, %p35
      %p37 = scmp.ne.s32.totalorder %s26, %s27
      %p38 = scmp.eq.s32.totalorder %s18, 0
      %p39 = por %p37, %p38
      %p40 = scmp.ne.s32.totalorder %s26, %s27
      %p41 = scmp.eq.s32.totalorder %s19, 1
      %p42 = por %p40, %p41
      %p44 = scmp.ne.s32.totalorder %s27, %s43
      %p45 = scmp.eq.s32.totalorder %s19, 0
      %p46 = por %p44, %p45
      %s48 = sadd.s32 %s47, 1
      %p51 = scmp.eq.s32.totalorder %s13, 1
      %p52 = scmp.ne.s32.totalorder %s47, %s49
      %p53 = scmp.eq.s32.totalorder %s13, 0
      %p54 = por %p52, %p53
      %p55 = scmp.ne.s32.totalorder %s47, %s49
      %p56 = scmp.eq.s32.totalorder %s18, 1
      %p57 = por %p55, %p56
      %p58 = scmp.ne.s32.totalorder %s49, %s50
      %p59 = scmp.eq.s32.totalorder %s18, 0
      %p60 = por %p58, %p59
      %p61 = scmp.ne.s32.totalorder %s49, %s50
      %p62 = scmp.eq.s32.totalorder %s19, 1
      %p63 = por %p61, %p62
      %p65 = scmp.ne.s32.totalorder %s50, %s64
      %p66 = scmp.eq.s32.totalorder %s19, 0
      %p67 = por %p65, %p66
      %s69 = sadd.s32 %s68, 1
      %p72 = scmp.eq.s32.totalorder %s13, 1
      %p73 = scmp.ne.s32.totalorder %s68, %s70
      %p74 = scmp.eq.s32.totalorder %s13, 0
      %p75 = por %p73, %p74
      %p76 = scmp.ne.s32.totalorder %s68, %s70
      %p77 = scmp.eq.s32.totalorder %s18, 1
      %p78 = por %p76, %p77
      %p79 = scmp.ne.s32.totalorder %s70, %s71
      %p80 = scmp.eq.s32.totalorder %s18, 0
      %p81 = por %p79, %p80
      %p82 = scmp.ne.s32.totalorder %s70, %s71
      %p83 = scmp.eq.s32.totalorder %s19, 1
      %p84 = por %p82, %p83
      %p86 = scmp.ne.s32.totalorder %s71, %s85
      %p87 = scmp.eq.s32.totalorder %s19, 0
      %p88 = por %p86, %p87
      %s90 = sadd.s32 %s89, 1
      %p93 = scmp.eq.s32.totalorder %s13, 1
      %p94 = scmp.ne.s32.totalorder %s89, %s91
      %p95 = scmp.eq.s32.totalorder %s13, 0
      %p96 = por %p94, %p95
      %p97 = scmp.ne.s32.totalorder %s89, %s91
      %p98 = scmp.eq.s32.totalorder %s18, 1
      %p99 = por %p97, %p98
      %p100 = scmp.ne.s32.totalorder %s91, %s92
      %p101 = scmp.eq.s32.totalorder %s18, 0
      %p102 = por %p100, %p101
      %p103 = scmp.ne.s32.totalorder %s91, %s92
      %p104 = scmp.eq.s32.totalorder %s19, 1
      %p105 = por %p103, %p104
      %p107 = scmp.ne.s32.totalorder %s92, %s106
      %p108 = scmp.eq.s32.totalorder %s19, 0
      %p109 = por %p107, %p108
      %s110 = ssub.s32 %s13, %s20
      %p111 = scmp.eq.s32.totalorder %s110, 0
      %s113 = sadd.s32 %s112, 1
      %s114 = scalar_select %p111, %s112, %s113
      %p117 = pneg %p111
      %p118 = scmp.eq.s32.totalorder %s13, 1
      %p119 = por %p117, %p118
      %p120 = scmp.ne.s32.totalorder %s112, %s115
      %p121 = scmp.eq.s32.totalorder %s13, 0
      %p122 = por %p120, %p121
      %p123 = scmp.ne.s32.totalorder %s112, %s115
      %p124 = scmp.eq.s32.totalorder %s18, 1
      %p125 = por %p123, %p124
      %p126 = scmp.ne.s32.totalorder %s115, %s116
      %p127 = scmp.eq.s32.totalorder %s18, 0
      %p128 = por %p126, %p127
      %p129 = scmp.ne.s32.totalorder %s115, %s116
      %p130 = scmp.eq.s32.totalorder %s19, 1
      %p131 = por %p129, %p130
      %p133 = scmp.ne.s32.totalorder %s116, %s132
      %p134 = scmp.eq.s32.totalorder %s19, 0
      %p135 = por %p133, %p134
      %p136 = scmp.le.s32.totalorder 1, %s13
      %p137 = scmp.lt.s32.totalorder %s13, 3
      %p138 = pnand %p136, %p137
      %p139 = pneg %p138
      // Predicated region
      $region9: #{tpu_custom_call.1} parent=5 // pred_check
        _
      $region10: #{tpu_custom_call.1} parent=5 // pred_check_branch
        %141 = sbr.rel (%p138) target = $region12
      $region11: #{tpu_custom_call.1} parent=5 // pred_region
        %s142 = ssub.s32 %s13, 1
        // Predicated region
        $region13: #{tpu_custom_call.1} parent=11 // pred_check
          %p143 = pneg %p60
        $region14: #{tpu_custom_call.1} parent=11 // pred_check_branch
          %145 = sbr.rel (%p143) target = $region16
        $region15: #{tpu_custom_call.1} parent=11 // pred_region
          _
        $region16: #{tpu_custom_call.1} parent=11 // pred_fallthru
          _
        // Predicated region
        $region17: #{tpu_custom_call.1} parent=11 // pred_check
          %p146 = pneg %p81
        $region18: #{tpu_custom_call.1} parent=11 // pred_check_branch
          %148 = sbr.rel (%p146) target = $region20
        $region19: #{tpu_custom_call.1} parent=11 // pred_region
          _
        $region20: #{tpu_custom_call.1} parent=11 // pred_fallthru
          _
        // Predicated region
        $region21: #{tpu_custom_call.1} parent=11 // pred_check
          %p149 = pneg %p102
        $region22: #{tpu_custom_call.1} parent=11 // pred_check_branch
          %151 = sbr.rel (%p149) target = $region24
        $region23: #{tpu_custom_call.1} parent=11 // pred_region
          _
        $region24: #{tpu_custom_call.1} parent=11 // pred_fallthru
          _
      $region12: #{tpu_custom_call.1} parent=5 // pred_fallthru
        _
      %p152 = scmp.lt.s32.totalorder %s13, 2
      // Predicated region
      $region25: #{tpu_custom_call.1} parent=5 // pred_check
        %p153 = pneg %p152
      $region26: #{tpu_custom_call.1} parent=5 // pred_check_branch
        %155 = sbr.rel (%p153) target = $region28
      $region27: #{tpu_custom_call.1} parent=5 // pred_region
        // Predicated region
        $region29: #{tpu_custom_call.1} parent=27 // pred_check
          %p156 = pneg %p33
        $region30: #{tpu_custom_call.1} parent=27 // pred_check_branch
          %158 = sbr.rel (%p156) target = $region32
        $region31: #{tpu_custom_call.1} parent=27 // pred_region
          %p159 = scmp.lt.s32.totalorder %s13, 1
          %s160 = scalar_select %p159, %s13, 1
          %s161 = smul.addr %s160, 32
          %s162 = smul.addr %s161, 8
          %s163 = scalar_lea.vmem %s0, %s162
        $region32: #{tpu_custom_call.1} parent=27 // pred_fallthru
          _
      $region28: #{tpu_custom_call.1} parent=5 // pred_fallthru
        _
      %p164 = scmp.le.s32.totalorder 1, %s13
      %p165 = scmp.lt.s32.totalorder %s13, 3
      %p166 = pnand %p164, %p165
      %p167 = pneg %p166
      // Predicated region
      $region33: #{tpu_custom_call.1} parent=5 // pred_check
        _
      $region34: #{tpu_custom_call.1} parent=5 // pred_check_branch
        %169 = sbr.rel (%p166) target = $region36
      $region35: #{tpu_custom_call.1} parent=5 // pred_region
        %s170 = ssub.s32 %s13, 1
        %p171 = scmp.lt.s32.totalorder %s18, 1
        %s172 = scalar_select %p171, %s18, 1
        %s173 = smul.addr %s172, 32
        %s174 = smul.addr %s173, 8
        %s175 = scalar_lea.vmem %s0, %s174
        %p176 = pneg %p39
        %p177 = pneg %p36
        %p178 = pneg %p60
        %p179 = pneg %p57
        %p180 = pneg %p81
        %p181 = pneg %p78
        %p182 = pneg %p102
        %p183 = pneg %p99
        %p184 = pneg %p128
        %p185 = pneg %p125
        %s186 = sand.u32 %s115, 1
        %s187 = scalar_lea.sflag [#allocation6], %s186
        %s188 = sand.u32 %s115, 1
        %s189 = smul.addr %s188, 256
        %s190 = scalar_lea.vmem [#allocation5], %s189
        %p191 = scmp.lt.s32.totalorder %s18, 1
        %s192 = scalar_select %p191, %s18, 1
        %s193 = smul.addr %s192, 32
        %s194 = smul.addr %s193, 8
        %s195 = scalar_lea.vmem %s0, %s194
        %vm197 = vcmask 31744
        %198 = vst.msk [vmem:[#allocation2] sm:$0xff] %vm197, 0.0
        %199 = vst.msk [vmem:[#allocation2 + $0x8] sm:$0xff] %vm197, 0.0
        %vm200 = vcmask 25600
        %201 = vst.msk [vmem:[#allocation2 + $0x10] sm:$0x3] %vm200, 0.0
        %202 = vst.msk [vmem:[#allocation2 + $0x18] sm:$0xff] %vm197, 0.0
        %203 = vst.msk [vmem:[#allocation2 + $0x20] sm:$0xff] %vm197, 0.0
        %204 = vst.msk [vmem:[#allocation2 + $0x28] sm:$0x3] %vm200, 0.0
        %205 = vst.msk [vmem:[#allocation2 + $0x30] sm:$0xff] %vm197, 0.0
        %206 = vst.msk [vmem:[#allocation2 + $0x38] sm:$0xff] %vm197, 0.0
        %207 = vst.msk [vmem:[#allocation2 + $0x40] sm:$0x3] %vm200, 0.0
        %208 = vst.msk [vmem:[#allocation2 + $0x48] sm:$0xff] %vm197, 0.0
        %209 = vst.msk [vmem:[#allocation2 + $0x50] sm:$0xff] %vm197, 0.0
        %210 = vst.msk [vmem:[#allocation2 + $0x58] sm:$0x3] %vm200, 0.0
        %211 = vst.msk [vmem:[#allocation2 + $0x60] sm:$0xff] %vm197, 0.0
        %212 = vst.msk [vmem:[#allocation2 + $0x68] sm:$0xff] %vm197, 0.0
        %213 = vst.msk [vmem:[#allocation2 + $0x70] sm:$0x3] %vm200, 0.0
        %214 = vst.msk [vmem:[#allocation2 + $0x78] sm:$0xff] %vm197, 0.0
        %215 = vst.msk [vmem:[#allocation2 + $0x80] sm:$0xff] %vm197, 0.0
        %216 = vst.msk [vmem:[#allocation2 + $0x88] sm:$0x3] %vm200, 0.0
        %217 = vst.msk [vmem:[#allocation2 + $0x90] sm:$0xff] %vm197, 0.0
        %218 = vst.msk [vmem:[#allocation2 + $0x98] sm:$0xff] %vm197, 0.0
        %219 = vst.msk [vmem:[#allocation2 + $0xa0] sm:$0x3] %vm200, 0.0
        %220 = vst.msk [vmem:[#allocation2 + $0xa8] sm:$0xff] %vm197, 0.0
        %221 = vst.msk [vmem:[#allocation2 + $0xb0] sm:$0xff] %vm197, 0.0
        %222 = vst.msk [vmem:[#allocation2 + $0xb8] sm:$0x3] %vm200, 0.0
        %223 = vst.msk [vmem:[#allocation2 + $0xc0] sm:$0xff] %vm197, 0.0
        %224 = vst.msk [vmem:[#allocation2 + $0xc8] sm:$0xff] %vm197, 0.0
        %225 = vst.msk [vmem:[#allocation2 + $0xd0] sm:$0x3] %vm200, 0.0
        %226 = vst.msk [vmem:[#allocation2 + $0xd8] sm:$0xff] %vm197, 0.0
        %227 = vst.msk [vmem:[#allocation2 + $0xe0] sm:$0xff] %vm197, 0.0
        %228 = vst.msk [vmem:[#allocation2 + $0xe8] sm:$0x3] %vm200, 0.0
        %229 = vst.msk [vmem:[#allocation2 + $0xf0] sm:$0xff] %vm197, 0.0
        %230 = vst.msk [vmem:[#allocation2 + $0xf8] sm:$0xff] %vm197, 0.0
        %231 = vst.msk [vmem:[#allocation2 + $0x100] sm:$0x3] %vm200, 0.0
        %232 = vst.msk [vmem:[#allocation2 + $0x108] sm:$0xff] %vm197, 0.0
        %233 = vst.msk [vmem:[#allocation2 + $0x110] sm:$0xff] %vm197, 0.0
        %234 = vst.msk [vmem:[#allocation2 + $0x118] sm:$0x3] %vm200, 0.0
        %235 = vst.msk [vmem:[#allocation2 + $0x120] sm:$0xff] %vm197, 0.0
        %236 = vst.msk [vmem:[#allocation2 + $0x128] sm:$0xff] %vm197, 0.0
        %237 = vst.msk [vmem:[#allocation2 + $0x130] sm:$0x3] %vm200, 0.0
        %238 = vst.msk [vmem:[#allocation2 + $0x138] sm:$0xff] %vm197, 0.0
        %239 = vst.msk [vmem:[#allocation2 + $0x140] sm:$0xff] %vm197, 0.0
        %240 = vst.msk [vmem:[#allocation2 + $0x148] sm:$0x3] %vm200, 0.0
        %241 = vst.msk [vmem:[#allocation2 + $0x150] sm:$0xff] %vm197, 0.0
        %242 = vst.msk [vmem:[#allocation2 + $0x158] sm:$0xff] %vm197, 0.0
        %243 = vst.msk [vmem:[#allocation2 + $0x160] sm:$0x3] %vm200, 0.0
        %244 = vst.msk [vmem:[#allocation2 + $0x168] sm:$0xff] %vm197, 0.0
        %245 = vst.msk [vmem:[#allocation2 + $0x170] sm:$0xff] %vm197, 0.0
        %246 = vst.msk [vmem:[#allocation2 + $0x178] sm:$0x3] %vm200, 0.0
        %247 = vst.msk [vmem:[#allocation2 + $0x180] sm:$0xff] %vm197, 0.0
        %248 = vst.msk [vmem:[#allocation2 + $0x188] sm:$0xff] %vm197, 0.0
        %249 = vst.msk [vmem:[#allocation2 + $0x190] sm:$0x3] %vm200, 0.0
        %250 = vst.msk [vmem:[#allocation2 + $0x198] sm:$0xff] %vm197, 0.0
        %251 = vst.msk [vmem:[#allocation2 + $0x1a0] sm:$0xff] %vm197, 0.0
        %252 = vst.msk [vmem:[#allocation2 + $0x1a8] sm:$0x3] %vm200, 0.0
        %v253 = vld [vmem:[%s195] sm:$0xff]
        %v254 = vld [vmem:[%s195 + $0x8] sm:$0xff]
        %v255 = vld [vmem:[%s195 + $0x10] sm:$0xff]
        %v256 = vld [vmem:[%s195 + $0x18] sm:$0xff]
        %v257 = vld [vmem:[%s195 + $0x20] sm:$0xff]
        %v258 = vld [vmem:[%s195 + $0x28] sm:$0xff]
        %v259 = vld [vmem:[%s195 + $0x30] sm:$0xff]
        %v260 = vld [vmem:[%s195 + $0x38] sm:$0xff]
        %v261 = vld [vmem:[%s195 + $0x40] sm:$0xff]
        %v262 = vld [vmem:[%s195 + $0x48] sm:$0xff]
        %v263 = vld [vmem:[%s195 + $0x50] sm:$0xff]
        %v264 = vld [vmem:[%s195 + $0x58] sm:$0xff]
        %v265 = vld [vmem:[%s195 + $0x60] sm:$0xff]
        %v266 = vld [vmem:[%s195 + $0x68] sm:$0xff]
        %v267 = vld [vmem:[%s195 + $0x70] sm:$0xff]
        %v268 = vld [vmem:[%s195 + $0x78] sm:$0xff]
        %v269 = vld [vmem:[%s195 + $0x80] sm:$0xff]
        %v270 = vld [vmem:[%s195 + $0x88] sm:$0xff]
        %v271 = vld [vmem:[%s195 + $0x90] sm:$0xff]
        %v272 = vld [vmem:[%s195 + $0x98] sm:$0xff]
        %v273 = vld [vmem:[%s195 + $0xa0] sm:$0xff]
        %v274 = vld [vmem:[%s195 + $0xa8] sm:$0xff]
        %v275 = vld [vmem:[%s195 + $0xb0] sm:$0xff]
        %v276 = vld [vmem:[%s195 + $0xb8] sm:$0xff]
        %v277 = vld [vmem:[%s195 + $0xc0] sm:$0xff]
        %v278 = vld [vmem:[%s195 + $0xc8] sm:$0xff]
        %v279 = vld [vmem:[%s195 + $0xd0] sm:$0xff]
        %v280 = vld [vmem:[%s195 + $0xd8] sm:$0xff]
        %v281 = vld [vmem:[%s195 + $0xe0] sm:$0xff]
        %v282 = vld [vmem:[%s195 + $0xe8] sm:$0xff]
        %v283 = vld [vmem:[%s195 + $0xf0] sm:$0xff]
        %v284 = vld [vmem:[%s195 + $0xf8] sm:$0xff]
        %s285 = scalar_lea.vmem [#allocation2], 24
        %286 = vst.msk [vmem:[%s285 + $0x1] sm:$0xff] %vm197, %v253
        %287 = vst.msk [vmem:[%s285 + $0x9] sm:$0xff] %vm197, %v254
        %288 = vst.msk [vmem:[%s285 + $0x19] sm:$0xff] %vm197, %v255
        %289 = vst.msk [vmem:[%s285 + $0x21] sm:$0xff] %vm197, %v256
        %290 = vst.msk [vmem:[%s285 + $0x31] sm:$0xff] %vm197, %v257
        %291 = vst.msk [vmem:[%s285 + $0x39] sm:$0xff] %vm197, %v258
        %292 = vst.msk [vmem:[%s285 + $0x49] sm:$0xff] %vm197, %v259
        %293 = vst.msk [vmem:[%s285 + $0x51] sm:$0xff] %vm197, %v260
        %294 = vst.msk [vmem:[%s285 + $0x61] sm:$0xff] %vm197, %v261
        %295 = vst.msk [vmem:[%s285 + $0x69] sm:$0xff] %vm197, %v262
        %296 = vst.msk [vmem:[%s285 + $0x79] sm:$0xff] %vm197, %v263
        %297 = vst.msk [vmem:[%s285 + $0x81] sm:$0xff] %vm197, %v264
        %298 = vst.msk [vmem:[%s285 + $0x91] sm:$0xff] %vm197, %v265
        %299 = vst.msk [vmem:[%s285 + $0x99] sm:$0xff] %vm197, %v266
        %300 = vst.msk [vmem:[%s285 + $0xa9] sm:$0xff] %vm197, %v267
        %301 = vst.msk [vmem:[%s285 + $0xb1] sm:$0xff] %vm197, %v268
        %302 = vst.msk [vmem:[%s285 + $0xc1] sm:$0xff] %vm197, %v269
        %303 = vst.msk [vmem:[%s285 + $0xc9] sm:$0xff] %vm197, %v270
        %304 = vst.msk [vmem:[%s285 + $0xd9] sm:$0xff] %vm197, %v271
        %305 = vst.msk [vmem:[%s285 + $0xe1] sm:$0xff] %vm197, %v272
        %306 = vst.msk [vmem:[%s285 + $0xf1] sm:$0xff] %vm197, %v273
        %307 = vst.msk [vmem:[%s285 + $0xf9] sm:$0xff] %vm197, %v274
        %308 = vst.msk [vmem:[%s285 + $0x109] sm:$0xff] %vm197, %v275
        %309 = vst.msk [vmem:[%s285 + $0x111] sm:$0xff] %vm197, %v276
        %310 = vst.msk [vmem:[%s285 + $0x121] sm:$0xff] %vm197, %v277
        %311 = vst.msk [vmem:[%s285 + $0x129] sm:$0xff] %vm197, %v278
        %312 = vst.msk [vmem:[%s285 + $0x139] sm:$0xff] %vm197, %v279
        %313 = vst.msk [vmem:[%s285 + $0x141] sm:$0xff] %vm197, %v280
        %314 = vst.msk [vmem:[%s285 + $0x151] sm:$0xff] %vm197, %v281
        %315 = vst.msk [vmem:[%s285 + $0x159] sm:$0xff] %vm197, %v282
        %316 = vst.msk [vmem:[%s285 + $0x169] sm:$0xff] %vm197, %v283
        %317 = vst.msk [vmem:[%s285 + $0x171] sm:$0xff] %vm197, %v284
        %v318 = vld [vmem:[#allocation2] sm:$0xff]
        %v319 = vld [vmem:[#allocation2 + $0x8] sm:$0xff]
        %v320 = vld [vmem:[#allocation2 + $0x10] sm:$0x3]
        %v321 = vld [vmem:[#allocation2 + $0x18] sm:$0xff]
        %v322 = vld [vmem:[#allocation2 + $0x20] sm:$0xff]
        %v323 = vld [vmem:[#allocation2 + $0x28] sm:$0x3]
        %v324 = vld [vmem:[#allocation2 + $0x30] sm:$0xff]
        %v325 = vld [vmem:[#allocation2 + $0x38] sm:$0xff]
        %v326 = vld [vmem:[#allocation2 + $0x40] sm:$0x3]
        %v327 = vld [vmem:[#allocation2 + $0x48] sm:$0xff]
        %v328 = vld [vmem:[#allocation2 + $0x50] sm:$0xff]
        %v329 = vld [vmem:[#allocation2 + $0x58] sm:$0x3]
        %v330 = vld [vmem:[#allocation2 + $0x60] sm:$0xff]
        %v331 = vld [vmem:[#allocation2 + $0x68] sm:$0xff]
        %v332 = vld [vmem:[#allocation2 + $0x70] sm:$0x3]
        %v333 = vld [vmem:[#allocation2 + $0x78] sm:$0xff]
        %v334 = vld [vmem:[#allocation2 + $0x80] sm:$0xff]
        %v335 = vld [vmem:[#allocation2 + $0x88] sm:$0x3]
        %v336 = vld [vmem:[#allocation2 + $0x90] sm:$0xff]
        %v337 = vld [vmem:[#allocation2 + $0x98] sm:$0xff]
        %v338 = vld [vmem:[#allocation2 + $0xa0] sm:$0x3]
        %v339 = vld [vmem:[#allocation2 + $0xa8] sm:$0xff]
        %v340 = vld [vmem:[#allocation2 + $0xb0] sm:$0xff]
        %v341 = vld [vmem:[#allocation2 + $0xb8] sm:$0x3]
        %v342 = vld [vmem:[#allocation2 + $0xc0] sm:$0xff]
        %v343 = vld [vmem:[#allocation2 + $0xc8] sm:$0xff]
        %v344 = vld [vmem:[#allocation2 + $0xd0] sm:$0x3]
        %v345 = vld [vmem:[#allocation2 + $0xd8] sm:$0xff]
        %v346 = vld [vmem:[#allocation2 + $0xe0] sm:$0xff]
        %v347 = vld [vmem:[#allocation2 + $0xe8] sm:$0x3]
        %v348 = vld [vmem:[#allocation2 + $0xf0] sm:$0xff]
        %v349 = vld [vmem:[#allocation2 + $0xf8] sm:$0xff]
        %v350 = vld [vmem:[#allocation2 + $0x100] sm:$0x3]
        %v351 = vld [vmem:[#allocation2 + $0x108] sm:$0xff]
        %v352 = vld [vmem:[#allocation2 + $0x110] sm:$0xff]
        %v353 = vld [vmem:[#allocation2 + $0x118] sm:$0x3]
        %v354 = vld [vmem:[#allocation2 + $0x120] sm:$0xff]
        %v355 = vld [vmem:[#allocation2 + $0x128] sm:$0xff]
        %v356 = vld [vmem:[#allocation2 + $0x130] sm:$0x3]
        %v357 = vld [vmem:[#allocation2 + $0x138] sm:$0xff]
        %v358 = vld [vmem:[#allocation2 + $0x140] sm:$0xff]
        %v359 = vld [vmem:[#allocation2 + $0x148] sm:$0x3]
        %v360 = vld [vmem:[#allocation2 + $0x150] sm:$0xff]
        %v361 = vld [vmem:[#allocation2 + $0x158] sm:$0xff]
        %v362 = vld [vmem:[#allocation2 + $0x160] sm:$0x3]
        %v363 = vld [vmem:[#allocation2 + $0x168] sm:$0xff]
        %v364 = vld [vmem:[#allocation2 + $0x170] sm:$0xff]
        %v365 = vld [vmem:[#allocation2 + $0x178] sm:$0x3]
        %v366 = vld [vmem:[#allocation2 + $0x180] sm:$0xff]
        %v367 = vld [vmem:[#allocation2 + $0x188] sm:$0xff]
        %v368 = vld [vmem:[#allocation2 + $0x190] sm:$0x3]
        %v369 = vld [vmem:[#allocation2 + $0x198] sm:$0xff]
        %v370 = vld [vmem:[#allocation2 + $0x1a0] sm:$0xff]
        %v371 = vld [vmem:[#allocation2 + $0x1a8] sm:$0x3]
        %372 = vst.msk [vmem:[#allocation3] sm:$0xff] %vm197, %v318
        %373 = vst.msk [vmem:[#allocation3 + $0x8] sm:$0xff] %vm197, %v319
        %374 = vst.msk [vmem:[#allocation3 + $0x10] sm:$0xff] %vm197, %v321
        %375 = vst.msk [vmem:[#allocation3 + $0x18] sm:$0xff] %vm197, %v322
        %376 = vst.msk [vmem:[#allocation3 + $0x20] sm:$0xff] %vm197, %v324
        %377 = vst.msk [vmem:[#allocation3 + $0x28] sm:$0xff] %vm197, %v325
        %378 = vst.msk [vmem:[#allocation3 + $0x30] sm:$0xff] %vm197, %v327
        %379 = vst.msk [vmem:[#allocation3 + $0x38] sm:$0xff] %vm197, %v328
        %380 = vst.msk [vmem:[#allocation3 + $0x40] sm:$0xff] %vm197, %v330
        %381 = vst.msk [vmem:[#allocation3 + $0x48] sm:$0xff] %vm197, %v331
        %382 = vst.msk [vmem:[#allocation3 + $0x50] sm:$0xff] %vm197, %v333
        %383 = vst.msk [vmem:[#allocation3 + $0x58] sm:$0xff] %vm197, %v334
        %384 = vst.msk [vmem:[#allocation3 + $0x60] sm:$0xff] %vm197, %v336
        %385 = vst.msk [vmem:[#allocation3 + $0x68] sm:$0xff] %vm197, %v337
        %386 = vst.msk [vmem:[#allocation3 + $0x70] sm:$0xff] %vm197, %v339
        %387 = vst.msk [vmem:[#allocation3 + $0x78] sm:$0xff] %vm197, %v340
        %388 = vst.msk [vmem:[#allocation3 + $0x80] sm:$0xff] %vm197, %v342
        %389 = vst.msk [vmem:[#allocation3 + $0x88] sm:$0xff] %vm197, %v343
        %390 = vst.msk [vmem:[#allocation3 + $0x90] sm:$0xff] %vm197, %v345
        %391 = vst.msk [vmem:[#allocation3 + $0x98] sm:$0xff] %vm197, %v346
        %392 = vst.msk [vmem:[#allocation3 + $0xa0] sm:$0xff] %vm197, %v348
        %393 = vst.msk [vmem:[#allocation3 + $0xa8] sm:$0xff] %vm197, %v349
        %394 = vst.msk [vmem:[#allocation3 + $0xb0] sm:$0xff] %vm197, %v351
        %395 = vst.msk [vmem:[#allocation3 + $0xb8] sm:$0xff] %vm197, %v352
        %396 = vst.msk [vmem:[#allocation3 + $0xc0] sm:$0xff] %vm197, %v354
        %397 = vst.msk [vmem:[#allocation3 + $0xc8] sm:$0xff] %vm197, %v355
        %398 = vst.msk [vmem:[#allocation3 + $0xd0] sm:$0xff] %vm197, %v357
        %399 = vst.msk [vmem:[#allocation3 + $0xd8] sm:$0xff] %vm197, %v358
        %400 = vst.msk [vmem:[#allocation3 + $0xe0] sm:$0xff] %vm197, %v360
        %401 = vst.msk [vmem:[#allocation3 + $0xe8] sm:$0xff] %vm197, %v361
        %402 = vst.msk [vmem:[#allocation3 + $0xf0] sm:$0xff] %vm197, %v363
        %403 = vst.msk [vmem:[#allocation3 + $0xf8] sm:$0xff] %vm197, %v364
        %vm452 = vcmask 1046528
        %v453 = vrot.slane %v318, 1
        %v454 = vrot.slane %v319, 1
        %v455 = vsel %vm452, %v453, %v454
        %v456 = vrot.slane %v320, 1
        %v457 = vsel %vm452, %v454, %v456
        %v458 = vrot.slane %v321, 1
        %v459 = vrot.slane %v322, 1
        %v460 = vsel %vm452, %v458, %v459
        %v461 = vrot.slane %v323, 1
        %v462 = vsel %vm452, %v459, %v461
        %v463 = vrot.slane %v324, 1
        %v464 = vrot.slane %v325, 1
        %v465 = vsel %vm452, %v463, %v464
        %v466 = vrot.slane %v326, 1
        %v467 = vsel %vm452, %v464, %v466
        %v468 = vrot.slane %v327, 1
        %v469 = vrot.slane %v328, 1
        %v470 = vsel %vm452, %v468, %v469
        %v471 = vrot.slane %v329, 1
        %v472 = vsel %vm452, %v469, %v471
        %v473 = vrot.slane %v330, 1
        %v474 = vrot.slane %v331, 1
        %v475 = vsel %vm452, %v473, %v474
        %v476 = vrot.slane %v332, 1
        %v477 = vsel %vm452, %v474, %v476
        %v478 = vrot.slane %v333, 1
        %v479 = vrot.slane %v334, 1
        %v480 = vsel %vm452, %v478, %v479
        %v481 = vrot.slane %v335, 1
        %v482 = vsel %vm452, %v479, %v481
        %v483 = vrot.slane %v336, 1
        %v484 = vrot.slane %v337, 1
        %v485 = vsel %vm452, %v483, %v484
        %v486 = vrot.slane %v338, 1
        %v487 = vsel %vm452, %v484, %v486
        %v488 = vrot.slane %v339, 1
        %v489 = vrot.slane %v340, 1
        %v490 = vsel %vm452, %v488, %v489
        %v491 = vrot.slane %v341, 1
        %v492 = vsel %vm452, %v489, %v491
        %v493 = vrot.slane %v342, 1
        %v494 = vrot.slane %v343, 1
        %v495 = vsel %vm452, %v493, %v494
        %v496 = vrot.slane %v344, 1
        %v497 = vsel %vm452, %v494, %v496
        %v498 = vrot.slane %v345, 1
        %v499 = vrot.slane %v346, 1
        %v500 = vsel %vm452, %v498, %v499
        %v501 = vrot.slane %v347, 1
        %v502 = vsel %vm452, %v499, %v501
        %v503 = vrot.slane %v348, 1
        %v504 = vrot.slane %v349, 1
        %v505 = vsel %vm452, %v503, %v504
        %v506 = vrot.slane %v350, 1
        %v507 = vsel %vm452, %v504, %v506
        %v508 = vrot.slane %v351, 1
        %v509 = vrot.slane %v352, 1
        %v510 = vsel %vm452, %v508, %v509
        %v511 = vrot.slane %v353, 1
        %v512 = vsel %vm452, %v509, %v511
        %v513 = vrot.slane %v354, 1
        %v514 = vrot.slane %v355, 1
        %v515 = vsel %vm452, %v513, %v514
        %v516 = vrot.slane %v356, 1
        %v517 = vsel %vm452, %v514, %v516
        %v518 = vrot.slane %v357, 1
        %v519 = vrot.slane %v358, 1
        %v520 = vsel %vm452, %v518, %v519
        %v521 = vrot.slane %v359, 1
        %v522 = vsel %vm452, %v519, %v521
        %v523 = vrot.slane %v360, 1
        %v524 = vrot.slane %v361, 1
        %v525 = vsel %vm452, %v523, %v524
        %v526 = vrot.slane %v362, 1
        %v527 = vsel %vm452, %v524, %v526
        %v528 = vrot.slane %v363, 1
        %v529 = vrot.slane %v364, 1
        %v530 = vsel %vm452, %v528, %v529
        %v531 = vrot.slane %v365, 1
        %v532 = vsel %vm452, %v529, %v531
        %533 = vrot.lane.b32.xlu0 %v455, 4
        %v534 = vpop.permute.xlu0 %533
        %535 = vrot.lane.b32.xlu0 %v457, 4
        %v536 = vpop.permute.xlu0 %535
        %537 = vrot.lane.b32.xlu0 %v460, 4
        %v538 = vpop.permute.xlu0 %537
        %539 = vrot.lane.b32.xlu0 %v462, 4
        %v540 = vpop.permute.xlu0 %539
        %541 = vrot.lane.b32.xlu0 %v465, 4
        %v542 = vpop.permute.xlu0 %541
        %543 = vrot.lane.b32.xlu0 %v467, 4
        %v544 = vpop.permute.xlu0 %543
        %545 = vrot.lane.b32.xlu0 %v470, 4
        %v546 = vpop.permute.xlu0 %545
        %547 = vrot.lane.b32.xlu0 %v472, 4
        %v548 = vpop.permute.xlu0 %547
        %549 = vrot.lane.b32.xlu0 %v475, 4
        %v550 = vpop.permute.xlu0 %549
        %551 = vrot.lane.b32.xlu0 %v477, 4
        %v552 = vpop.permute.xlu0 %551
        %553 = vrot.lane.b32.xlu0 %v480, 4
        %v554 = vpop.permute.xlu0 %553
        %555 = vrot.lane.b32.xlu0 %v482, 4
        %v556 = vpop.permute.xlu0 %555
        %557 = vrot.lane.b32.xlu0 %v485, 4
        %v558 = vpop.permute.xlu0 %557
        %559 = vrot.lane.b32.xlu0 %v487, 4
        %v560 = vpop.permute.xlu0 %559
        %561 = vrot.lane.b32.xlu0 %v490, 4
        %v562 = vpop.permute.xlu0 %561
        %563 = vrot.lane.b32.xlu0 %v492, 4
        %v564 = vpop.permute.xlu0 %563
        %565 = vrot.lane.b32.xlu0 %v495, 4
        %v566 = vpop.permute.xlu0 %565
        %567 = vrot.lane.b32.xlu0 %v497, 4
        %v568 = vpop.permute.xlu0 %567
        %569 = vrot.lane.b32.xlu0 %v500, 4
        %v570 = vpop.permute.xlu0 %569
        %571 = vrot.lane.b32.xlu0 %v502, 4
        %v572 = vpop.permute.xlu0 %571
        %573 = vrot.lane.b32.xlu0 %v505, 4
        %v574 = vpop.permute.xlu0 %573
        %575 = vrot.lane.b32.xlu0 %v507, 4
        %v576 = vpop.permute.xlu0 %575
        %577 = vrot.lane.b32.xlu0 %v510, 4
        %v578 = vpop.permute.xlu0 %577
        %579 = vrot.lane.b32.xlu0 %v512, 4
        %v580 = vpop.permute.xlu0 %579
        %581 = vrot.lane.b32.xlu0 %v515, 4
        %v582 = vpop.permute.xlu0 %581
        %583 = vrot.lane.b32.xlu0 %v517, 4
        %v584 = vpop.permute.xlu0 %583
        %585 = vrot.lane.b32.xlu0 %v520, 4
        %v586 = vpop.permute.xlu0 %585
        %587 = vrot.lane.b32.xlu0 %v522, 4
        %v588 = vpop.permute.xlu0 %587
        %589 = vrot.lane.b32.xlu0 %v525, 4
        %v590 = vpop.permute.xlu0 %589
        %591 = vrot.lane.b32.xlu0 %v527, 4
        %v592 = vpop.permute.xlu0 %591
        %593 = vrot.lane.b32.xlu0 %v530, 4
        %v594 = vpop.permute.xlu0 %593
        %595 = vrot.lane.b32.xlu0 %v532, 4
        %v596 = vpop.permute.xlu0 %595
        %vm629 = vcmask 64544
        %630 = vst.msk [vmem:[#allocation3] sm:$0xff] %vm629, %v534
        %631 = vst.msk [vmem:[#allocation3 + $0x8] sm:$0xff] %vm629, %v536
        %632 = vst.msk [vmem:[#allocation3 + $0x10] sm:$0xff] %vm629, %v538
        %633 = vst.msk [vmem:[#allocation3 + $0x18] sm:$0xff] %vm629, %v540
        %634 = vst.msk [vmem:[#allocation3 + $0x20] sm:$0xff] %vm629, %v542
        %635 = vst.msk [vmem:[#allocation3 + $0x28] sm:$0xff] %vm629, %v544
        %636 = vst.msk [vmem:[#allocation3 + $0x30] sm:$0xff] %vm629, %v546
        %637 = vst.msk [vmem:[#allocation3 + $0x38] sm:$0xff] %vm629, %v548
        %638 = vst.msk [vmem:[#allocation3 + $0x40] sm:$0xff] %vm629, %v550
        %639 = vst.msk [vmem:[#allocation3 + $0x48] sm:$0xff] %vm629, %v552
        %640 = vst.msk [vmem:[#allocation3 + $0x50] sm:$0xff] %vm629, %v554
        %641 = vst.msk [vmem:[#allocation3 + $0x58] sm:$0xff] %vm629, %v556
        %642 = vst.msk [vmem:[#allocation3 + $0x60] sm:$0xff] %vm629, %v558
        %643 = vst.msk [vmem:[#allocation3 + $0x68] sm:$0xff] %vm629, %v560
        %644 = vst.msk [vmem:[#allocation3 + $0x70] sm:$0xff] %vm629, %v562
        %645 = vst.msk [vmem:[#allocation3 + $0x78] sm:$0xff] %vm629, %v564
        %646 = vst.msk [vmem:[#allocation3 + $0x80] sm:$0xff] %vm629, %v566
        %647 = vst.msk [vmem:[#allocation3 + $0x88] sm:$0xff] %vm629, %v568
        %648 = vst.msk [vmem:[#allocation3 + $0x90] sm:$0xff] %vm629, %v570
        %649 = vst.msk [vmem:[#allocation3 + $0x98] sm:$0xff] %vm629, %v572
        %650 = vst.msk [vmem:[#allocation3 + $0xa0] sm:$0xff] %vm629, %v574
        %651 = vst.msk [vmem:[#allocation3 + $0xa8] sm:$0xff] %vm629, %v576
        %652 = vst.msk [vmem:[#allocation3 + $0xb0] sm:$0xff] %vm629, %v578
        %653 = vst.msk [vmem:[#allocation3 + $0xb8] sm:$0xff] %vm629, %v580
        %654 = vst.msk [vmem:[#allocation3 + $0xc0] sm:$0xff] %vm629, %v582
        %655 = vst.msk [vmem:[#allocation3 + $0xc8] sm:$0xff] %vm629, %v584
        %656 = vst.msk [vmem:[#allocation3 + $0xd0] sm:$0xff] %vm629, %v586
        %657 = vst.msk [vmem:[#allocation3 + $0xd8] sm:$0xff] %vm629, %v588
        %658 = vst.msk [vmem:[#allocation3 + $0xe0] sm:$0xff] %vm629, %v590
        %659 = vst.msk [vmem:[#allocation3 + $0xe8] sm:$0xff] %vm629, %v592
        %660 = vst.msk [vmem:[#allocation3 + $0xf0] sm:$0xff] %vm629, %v594
        %661 = vst.msk [vmem:[#allocation3 + $0xf8] sm:$0xff] %vm629, %v596
        %vm662 = vcmask 1045504
        %v663 = vrot.slane %v318, 2
        %v664 = vrot.slane %v319, 2
        %v665 = vsel %vm662, %v663, %v664
        %v666 = vrot.slane %v320, 2
        %v667 = vsel %vm662, %v664, %v666
        %v668 = vrot.slane %v321, 2
        %v669 = vrot.slane %v322, 2
        %v670 = vsel %vm662, %v668, %v669
        %v671 = vrot.slane %v323, 2
        %v672 = vsel %vm662, %v669, %v671
        %v673 = vrot.slane %v324, 2
        %v674 = vrot.slane %v325, 2
        %v675 = vsel %vm662, %v673, %v674
        %v676 = vrot.slane %v326, 2
        %v677 = vsel %vm662, %v674, %v676
        %v678 = vrot.slane %v327, 2
        %v679 = vrot.slane %v328, 2
        %v680 = vsel %vm662, %v678, %v679
        %v681 = vrot.slane %v329, 2
        %v682 = vsel %vm662, %v679, %v681
        %v683 = vrot.slane %v330, 2
        %v684 = vrot.slane %v331, 2
        %v685 = vsel %vm662, %v683, %v684
        %v686 = vrot.slane %v332, 2
        %v687 = vsel %vm662, %v684, %v686
        %v688 = vrot.slane %v333, 2
        %v689 = vrot.slane %v334, 2
        %v690 = vsel %vm662, %v688, %v689
        %v691 = vrot.slane %v335, 2
        %v692 = vsel %vm662, %v689, %v691
        %v693 = vrot.slane %v336, 2
        %v694 = vrot.slane %v337, 2
        %v695 = vsel %vm662, %v693, %v694
        %v696 = vrot.slane %v338, 2
        %v697 = vsel %vm662, %v694, %v696
        %v698 = vrot.slane %v339, 2
        %v699 = vrot.slane %v340, 2
        %v700 = vsel %vm662, %v698, %v699
        %v701 = vrot.slane %v341, 2
        %v702 = vsel %vm662, %v699, %v701
        %v703 = vrot.slane %v342, 2
        %v704 = vrot.slane %v343, 2
        %v705 = vsel %vm662, %v703, %v704
        %v706 = vrot.slane %v344, 2
        %v707 = vsel %vm662, %v704, %v706
        %v708 = vrot.slane %v345, 2
        %v709 = vrot.slane %v346, 2
        %v710 = vsel %vm662, %v708, %v709
        %v711 = vrot.slane %v347, 2
        %v712 = vsel %vm662, %v709, %v711
        %v713 = vrot.slane %v348, 2
        %v714 = vrot.slane %v349, 2
        %v715 = vsel %vm662, %v713, %v714
        %v716 = vrot.slane %v350, 2
        %v717 = vsel %vm662, %v714, %v716
        %v718 = vrot.slane %v351, 2
        %v719 = vrot.slane %v352, 2
        %v720 = vsel %vm662, %v718, %v719
        %v721 = vrot.slane %v353, 2
        %v722 = vsel %vm662, %v719, %v721
        %v723 = vrot.slane %v354, 2
        %v724 = vrot.slane %v355, 2
        %v725 = vsel %vm662, %v723, %v724
        %v726 = vrot.slane %v356, 2
        %v727 = vsel %vm662, %v724, %v726
        %v728 = vrot.slane %v357, 2
        %v729 = vrot.slane %v358, 2
        %v730 = vsel %vm662, %v728, %v729
        %v731 = vrot.slane %v359, 2
        %v732 = vsel %vm662, %v729, %v731
        %v733 = vrot.slane %v360, 2
        %v734 = vrot.slane %v361, 2
        %v735 = vsel %vm662, %v733, %v734
        %v736 = vrot.slane %v362, 2
        %v737 = vsel %vm662, %v734, %v736
        %v738 = vrot.slane %v363, 2
        %v739 = vrot.slane %v364, 2
        %v740 = vsel %vm662, %v738, %v739
        %v741 = vrot.slane %v365, 2
        %v742 = vsel %vm662, %v739, %v741
        %743 = vrot.lane.b32.xlu0 %v665, 8
        %v744 = vpop.permute.xlu0 %743
        %745 = vrot.lane.b32.xlu0 %v667, 8
        %v746 = vpop.permute.xlu0 %745
        %747 = vrot.lane.b32.xlu0 %v670, 8
        %v748 = vpop.permute.xlu0 %747
        %749 = vrot.lane.b32.xlu0 %v672, 8
        %v750 = vpop.permute.xlu0 %749
        %751 = vrot.lane.b32.xlu0 %v675, 8
        %v752 = vpop.permute.xlu0 %751
        %753 = vrot.lane.b32.xlu0 %v677, 8
        %v754 = vpop.permute.xlu0 %753
        %755 = vrot.lane.b32.xlu0 %v680, 8
        %v756 = vpop.permute.xlu0 %755
        %757 = vrot.lane.b32.xlu0 %v682, 8
        %v758 = vpop.permute.xlu0 %757
        %759 = vrot.lane.b32.xlu0 %v685, 8
        %v760 = vpop.permute.xlu0 %759
        %761 = vrot.lane.b32.xlu0 %v687, 8
        %v762 = vpop.permute.xlu0 %761
        %763 = vrot.lane.b32.xlu0 %v690, 8
        %v764 = vpop.permute.xlu0 %763
        %765 = vrot.lane.b32.xlu0 %v692, 8
        %v766 = vpop.permute.xlu0 %765
        %767 = vrot.lane.b32.xlu0 %v695, 8
        %v768 = vpop.permute.xlu0 %767
        %769 = vrot.lane.b32.xlu0 %v697, 8
        %v770 = vpop.permute.xlu0 %769
        %771 = vrot.lane.b32.xlu0 %v700, 8
        %v772 = vpop.permute.xlu0 %771
        %773 = vrot.lane.b32.xlu0 %v702, 8
        %v774 = vpop.permute.xlu0 %773
        %775 = vrot.lane.b32.xlu0 %v705, 8
        %v776 = vpop.permute.xlu0 %775
        %777 = vrot.lane.b32.xlu0 %v707, 8
        %v778 = vpop.permute.xlu0 %777
        %779 = vrot.lane.b32.xlu0 %v710, 8
        %v780 = vpop.permute.xlu0 %779
        %781 = vrot.lane.b32.xlu0 %v712, 8
        %v782 = vpop.permute.xlu0 %781
        %783 = vrot.lane.b32.xlu0 %v715, 8
        %v784 = vpop.permute.xlu0 %783
        %785 = vrot.lane.b32.xlu0 %v717, 8
        %v786 = vpop.permute.xlu0 %785
        %787 = vrot.lane.b32.xlu0 %v720, 8
        %v788 = vpop.permute.xlu0 %787
        %789 = vrot.lane.b32.xlu0 %v722, 8
        %v790 = vpop.permute.xlu0 %789
        %791 = vrot.lane.b32.xlu0 %v725, 8
        %v792 = vpop.permute.xlu0 %791
        %793 = vrot.lane.b32.xlu0 %v727, 8
        %v794 = vpop.permute.xlu0 %793
        %795 = vrot.lane.b32.xlu0 %v730, 8
        %v796 = vpop.permute.xlu0 %795
        %797 = vrot.lane.b32.xlu0 %v732, 8
        %v798 = vpop.permute.xlu0 %797
        %799 = vrot.lane.b32.xlu0 %v735, 8
        %v800 = vpop.permute.xlu0 %799
        %801 = vrot.lane.b32.xlu0 %v737, 8
        %v802 = vpop.permute.xlu0 %801
        %803 = vrot.lane.b32.xlu0 %v740, 8
        %v804 = vpop.permute.xlu0 %803
        %805 = vrot.lane.b32.xlu0 %v742, 8
        %v806 = vpop.permute.xlu0 %805
        %vm839 = vcmask 97344
        %840 = vst.msk [vmem:[#allocation3] sm:$0xff] %vm839, %v744
        %841 = vst.msk [vmem:[#allocation3 + $0x8] sm:$0xff] %vm839, %v746
        %842 = vst.msk [vmem:[#allocation3 + $0x10] sm:$0xff] %vm839, %v748
        %843 = vst.msk [vmem:[#allocation3 + $0x18] sm:$0xff] %vm839, %v750
        %844 = vst.msk [vmem:[#allocation3 + $0x20] sm:$0xff] %vm839, %v752
        %845 = vst.msk [vmem:[#allocation3 + $0x28] sm:$0xff] %vm839, %v754
        %846 = vst.msk [vmem:[#allocation3 + $0x30] sm:$0xff] %vm839, %v756
        %847 = vst.msk [vmem:[#allocation3 + $0x38] sm:$0xff] %vm839, %v758
        %848 = vst.msk [vmem:[#allocation3 + $0x40] sm:$0xff] %vm839, %v760
        %849 = vst.msk [vmem:[#allocation3 + $0x48] sm:$0xff] %vm839, %v762
        %850 = vst.msk [vmem:[#allocation3 + $0x50] sm:$0xff] %vm839, %v764
        %851 = vst.msk [vmem:[#allocation3 + $0x58] sm:$0xff] %vm839, %v766
        %852 = vst.msk [vmem:[#allocation3 + $0x60] sm:$0xff] %vm839, %v768
        %853 = vst.msk [vmem:[#allocation3 + $0x68] sm:$0xff] %vm839, %v770
        %854 = vst.msk [vmem:[#allocation3 + $0x70] sm:$0xff] %vm839, %v772
        %855 = vst.msk [vmem:[#allocation3 + $0x78] sm:$0xff] %vm839, %v774
        %856 = vst.msk [vmem:[#allocation3 + $0x80] sm:$0xff] %vm839, %v776
        %857 = vst.msk [vmem:[#allocation3 + $0x88] sm:$0xff] %vm839, %v778
        %858 = vst.msk [vmem:[#allocation3 + $0x90] sm:$0xff] %vm839, %v780
        %859 = vst.msk [vmem:[#allocation3 + $0x98] sm:$0xff] %vm839, %v782
        %860 = vst.msk [vmem:[#allocation3 + $0xa0] sm:$0xff] %vm839, %v784
        %861 = vst.msk [vmem:[#allocation3 + $0xa8] sm:$0xff] %vm839, %v786
        %862 = vst.msk [vmem:[#allocation3 + $0xb0] sm:$0xff] %vm839, %v788
        %863 = vst.msk [vmem:[#allocation3 + $0xb8] sm:$0xff] %vm839, %v790
        %864 = vst.msk [vmem:[#allocation3 + $0xc0] sm:$0xff] %vm839, %v792
        %865 = vst.msk [vmem:[#allocation3 + $0xc8] sm:$0xff] %vm839, %v794
        %866 = vst.msk [vmem:[#allocation3 + $0xd0] sm:$0xff] %vm839, %v796
        %867 = vst.msk [vmem:[#allocation3 + $0xd8] sm:$0xff] %vm839, %v798
        %868 = vst.msk [vmem:[#allocation3 + $0xe0] sm:$0xff] %vm839, %v800
        %869 = vst.msk [vmem:[#allocation3 + $0xe8] sm:$0xff] %vm839, %v802
        %870 = vst.msk [vmem:[#allocation3 + $0xf0] sm:$0xff] %vm839, %v804
        %871 = vst.msk [vmem:[#allocation3 + $0xf8] sm:$0xff] %vm839, %v806
        %874 = vrot.lane.b32.xlu0 %v321, 12
        %v875 = vpop.permute.xlu0 %874
        %876 = vrot.lane.b32.xlu0 %v322, 12
        %v877 = vpop.permute.xlu0 %876
        %878 = vrot.lane.b32.xlu0 %v324, 12
        %v879 = vpop.permute.xlu0 %878
        %880 = vrot.lane.b32.xlu0 %v325, 12
        %v881 = vpop.permute.xlu0 %880
        %882 = vrot.lane.b32.xlu0 %v327, 12
        %v883 = vpop.permute.xlu0 %882
        %884 = vrot.lane.b32.xlu0 %v328, 12
        %v885 = vpop.permute.xlu0 %884
        %886 = vrot.lane.b32.xlu0 %v330, 12
        %v887 = vpop.permute.xlu0 %886
        %888 = vrot.lane.b32.xlu0 %v331, 12
        %v889 = vpop.permute.xlu0 %888
        %890 = vrot.lane.b32.xlu0 %v333, 12
        %v891 = vpop.permute.xlu0 %890
        %892 = vrot.lane.b32.xlu0 %v334, 12
        %v893 = vpop.permute.xlu0 %892
        %894 = vrot.lane.b32.xlu0 %v336, 12
        %v895 = vpop.permute.xlu0 %894
        %896 = vrot.lane.b32.xlu0 %v337, 12
        %v897 = vpop.permute.xlu0 %896
        %898 = vrot.lane.b32.xlu0 %v339, 12
        %v899 = vpop.permute.xlu0 %898
        %900 = vrot.lane.b32.xlu0 %v340, 12
        %v901 = vpop.permute.xlu0 %900
        %902 = vrot.lane.b32.xlu0 %v342, 12
        %v903 = vpop.permute.xlu0 %902
        %904 = vrot.lane.b32.xlu0 %v343, 12
        %v905 = vpop.permute.xlu0 %904
        %906 = vrot.lane.b32.xlu0 %v345, 12
        %v907 = vpop.permute.xlu0 %906
        %908 = vrot.lane.b32.xlu0 %v346, 12
        %v909 = vpop.permute.xlu0 %908
        %910 = vrot.lane.b32.xlu0 %v348, 12
        %v911 = vpop.permute.xlu0 %910
        %912 = vrot.lane.b32.xlu0 %v349, 12
        %v913 = vpop.permute.xlu0 %912
        %914 = vrot.lane.b32.xlu0 %v351, 12
        %v915 = vpop.permute.xlu0 %914
        %916 = vrot.lane.b32.xlu0 %v352, 12
        %v917 = vpop.permute.xlu0 %916
        %918 = vrot.lane.b32.xlu0 %v354, 12
        %v919 = vpop.permute.xlu0 %918
        %920 = vrot.lane.b32.xlu0 %v355, 12
        %v921 = vpop.permute.xlu0 %920
        %922 = vrot.lane.b32.xlu0 %v357, 12
        %v923 = vpop.permute.xlu0 %922
        %924 = vrot.lane.b32.xlu0 %v358, 12
        %v925 = vpop.permute.xlu0 %924
        %926 = vrot.lane.b32.xlu0 %v360, 12
        %v927 = vpop.permute.xlu0 %926
        %928 = vrot.lane.b32.xlu0 %v361, 12
        %v929 = vpop.permute.xlu0 %928
        %930 = vrot.lane.b32.xlu0 %v363, 12
        %v931 = vpop.permute.xlu0 %930
        %932 = vrot.lane.b32.xlu0 %v364, 12
        %v933 = vpop.permute.xlu0 %932
        %934 = vrot.lane.b32.xlu0 %v366, 12
        %v935 = vpop.permute.xlu0 %934
        %936 = vrot.lane.b32.xlu0 %v367, 12
        %v937 = vpop.permute.xlu0 %936
        %vm970 = vcmask 130144
        %971 = vst.msk [vmem:[#allocation3] sm:$0xff] %vm970, %v875
        %972 = vst.msk [vmem:[#allocation3 + $0x8] sm:$0xff] %vm970, %v877
        %973 = vst.msk [vmem:[#allocation3 + $0x10] sm:$0xff] %vm970, %v879
        %974 = vst.msk [vmem:[#allocation3 + $0x18] sm:$0xff] %vm970, %v881
        %975 = vst.msk [vmem:[#allocation3 + $0x20] sm:$0xff] %vm970, %v883
        %976 = vst.msk [vmem:[#allocation3 + $0x28] sm:$0xff] %vm970, %v885
        %977 = vst.msk [vmem:[#allocation3 + $0x30] sm:$0xff] %vm970, %v887
        %978 = vst.msk [vmem:[#allocation3 + $0x38] sm:$0xff] %vm970, %v889
        %979 = vst.msk [vmem:[#allocation3 + $0x40] sm:$0xff] %vm970, %v891
        %980 = vst.msk [vmem:[#allocation3 + $0x48] sm:$0xff] %vm970, %v893
        %981 = vst.msk [vmem:[#allocation3 + $0x50] sm:$0xff] %vm970, %v895
        %982 = vst.msk [vmem:[#allocation3 + $0x58] sm:$0xff] %vm970, %v897
        %983 = vst.msk [vmem:[#allocation3 + $0x60] sm:$0xff] %vm970, %v899
        %984 = vst.msk [vmem:[#allocation3 + $0x68] sm:$0xff] %vm970, %v901
        %985 = vst.msk [vmem:[#allocation3 + $0x70] sm:$0xff] %vm970, %v903
        %986 = vst.msk [vmem:[#allocation3 + $0x78] sm:$0xff] %vm970, %v905
        %987 = vst.msk [vmem:[#allocation3 + $0x80] sm:$0xff] %vm970, %v907
        %988 = vst.msk [vmem:[#allocation3 + $0x88] sm:$0xff] %vm970, %v909
        %989 = vst.msk [vmem:[#allocation3 + $0x90] sm:$0xff] %vm970, %v911
        %990 = vst.msk [vmem:[#allocation3 + $0x98] sm:$0xff] %vm970, %v913
        %991 = vst.msk [vmem:[#allocation3 + $0xa0] sm:$0xff] %vm970, %v915
        %992 = vst.msk [vmem:[#allocation3 + $0xa8] sm:$0xff] %vm970, %v917
        %993 = vst.msk [vmem:[#allocation3 + $0xb0] sm:$0xff] %vm970, %v919
        %994 = vst.msk [vmem:[#allocation3 + $0xb8] sm:$0xff] %vm970, %v921
        %995 = vst.msk [vmem:[#allocation3 + $0xc0] sm:$0xff] %vm970, %v923
        %996 = vst.msk [vmem:[#allocation3 + $0xc8] sm:$0xff] %vm970, %v925
        %997 = vst.msk [vmem:[#allocation3 + $0xd0] sm:$0xff] %vm970, %v927
        %998 = vst.msk [vmem:[#allocation3 + $0xd8] sm:$0xff] %vm970, %v929
        %999 = vst.msk [vmem:[#allocation3 + $0xe0] sm:$0xff] %vm970, %v931
        %1000 = vst.msk [vmem:[#allocation3 + $0xe8] sm:$0xff] %vm970, %v933
        %1001 = vst.msk [vmem:[#allocation3 + $0xf0] sm:$0xff] %vm970, %v935
        %1002 = vst.msk [vmem:[#allocation3 + $0xf8] sm:$0xff] %vm970, %v937
        %v1004 = vrot.slane %v366, 1
        %v1005 = vrot.slane %v367, 1
        %v1006 = vsel %vm452, %v1004, %v1005
        %v1007 = vrot.slane %v368, 1
        %v1008 = vsel %vm452, %v1005, %v1007
        %1009 = vrot.lane.b32.xlu0 %v460, 16
        %v1010 = vpop.permute.xlu0 %1009
        %1011 = vrot.lane.b32.xlu0 %v462, 16
        %v1012 = vpop.permute.xlu0 %1011
        %1013 = vrot.lane.b32.xlu0 %v465, 16
        %v1014 = vpop.permute.xlu0 %1013
        %1015 = vrot.lane.b32.xlu0 %v467, 16
        %v1016 = vpop.permute.xlu0 %1015
        %1017 = vrot.lane.b32.xlu0 %v470, 16
        %v1018 = vpop.permute.xlu0 %1017
        %1019 = vrot.lane.b32.xlu0 %v472, 16
        %v1020 = vpop.permute.xlu0 %1019
        %1021 = vrot.lane.b32.xlu0 %v475, 16
        %v1022 = vpop.permute.xlu0 %1021
        %1023 = vrot.lane.b32.xlu0 %v477, 16
        %v1024 = vpop.permute.xlu0 %1023
        %1025 = vrot.lane.b32.xlu0 %v480, 16
        %v1026 = vpop.permute.xlu0 %1025
        %1027 = vrot.lane.b32.xlu0 %v482, 16
        %v1028 = vpop.permute.xlu0 %1027
        %1029 = vrot.lane.b32.xlu0 %v485, 16
        %v1030 = vpop.permute.xlu0 %1029
        %1031 = vrot.lane.b32.xlu0 %v487, 16
        %v1032 = vpop.permute.xlu0 %1031
        %1033 = vrot.lane.b32.xlu0 %v490, 16
        %v1034 = vpop.permute.xlu0 %1033
        %1035 = vrot.lane.b32.xlu0 %v492, 16
        %v1036 = vpop.permute.xlu0 %1035
        %1037 = vrot.lane.b32.xlu0 %v495, 16
        %v1038 = vpop.permute.xlu0 %1037
        %1039 = vrot.lane.b32.xlu0 %v497, 16
        %v1040 = vpop.permute.xlu0 %1039
        %1041 = vrot.lane.b32.xlu0 %v500, 16
        %v1042 = vpop.permute.xlu0 %1041
        %1043 = vrot.lane.b32.xlu0 %v502, 16
        %v1044 = vpop.permute.xlu0 %1043
        %1045 = vrot.lane.b32.xlu0 %v505, 16
        %v1046 = vpop.permute.xlu0 %1045
        %1047 = vrot.lane.b32.xlu0 %v507, 16
        %v1048 = vpop.permute.xlu0 %1047
        %1049 = vrot.lane.b32.xlu0 %v510, 16
        %v1050 = vpop.permute.xlu0 %1049
        %1051 = vrot.lane.b32.xlu0 %v512, 16
        %v1052 = vpop.permute.xlu0 %1051
        %1053 = vrot.lane.b32.xlu0 %v515, 16
        %v1054 = vpop.permute.xlu0 %1053
        %1055 = vrot.lane.b32.xlu0 %v517, 16
        %v1056 = vpop.permute.xlu0 %1055
        %1057 = vrot.lane.b32.xlu0 %v520, 16
        %v1058 = vpop.permute.xlu0 %1057
        %1059 = vrot.lane.b32.xlu0 %v522, 16
        %v1060 = vpop.permute.xlu0 %1059
        %1061 = vrot.lane.b32.xlu0 %v525, 16
        %v1062 = vpop.permute.xlu0 %1061
        %1063 = vrot.lane.b32.xlu0 %v527, 16
        %v1064 = vpop.permute.xlu0 %1063
        %1065 = vrot.lane.b32.xlu0 %v530, 16
        %v1066 = vpop.permute.xlu0 %1065
        %1067 = vrot.lane.b32.xlu0 %v532, 16
        %v1068 = vpop.permute.xlu0 %1067
        %1069 = vrot.lane.b32.xlu0 %v1006, 16
        %v1070 = vpop.permute.xlu0 %1069
        %1071 = vrot.lane.b32.xlu0 %v1008, 16
        %v1072 = vpop.permute.xlu0 %1071
        %vm1105 = vcmask 162944
        %1106 = vst.msk [vmem:[#allocation3] sm:$0xff] %vm1105, %v1010
        %1107 = vst.msk [vmem:[#allocation3 + $0x8] sm:$0xff] %vm1105, %v1012
        %1108 = vst.msk [vmem:[#allocation3 + $0x10] sm:$0xff] %vm1105, %v1014
        %1109 = vst.msk [vmem:[#allocation3 + $0x18] sm:$0xff] %vm1105, %v1016
        %1110 = vst.msk [vmem:[#allocation3 + $0x20] sm:$0xff] %vm1105, %v1018
        %1111 = vst.msk [vmem:[#allocation3 + $0x28] sm:$0xff] %vm1105, %v1020
        %1112 = vst.msk [vmem:[#allocation3 + $0x30] sm:$0xff] %vm1105, %v1022
        %1113 = vst.msk [vmem:[#allocation3 + $0x38] sm:$0xff] %vm1105, %v1024
        %1114 = vst.msk [vmem:[#allocation3 + $0x40] sm:$0xff] %vm1105, %v1026
        %1115 = vst.msk [vmem:[#allocation3 + $0x48] sm:$0xff] %vm1105, %v1028
        %1116 = vst.msk [vmem:[#allocation3 + $0x50] sm:$0xff] %vm1105, %v1030
        %1117 = vst.msk [vmem:[#allocation3 + $0x58] sm:$0xff] %vm1105, %v1032
        %1118 = vst.msk [vmem:[#allocation3 + $0x60] sm:$0xff] %vm1105, %v1034
        %1119 = vst.msk [vmem:[#allocation3 + $0x68] sm:$0xff] %vm1105, %v1036
        %1120 = vst.msk [vmem:[#allocation3 + $0x70] sm:$0xff] %vm1105, %v1038
        %1121 = vst.msk [vmem:[#allocation3 + $0x78] sm:$0xff] %vm1105, %v1040
        %1122 = vst.msk [vmem:[#allocation3 + $0x80] sm:$0xff] %vm1105, %v1042
        %1123 = vst.msk [vmem:[#allocation3 + $0x88] sm:$0xff] %vm1105, %v1044
        %1124 = vst.msk [vmem:[#allocation3 + $0x90] sm:$0xff] %vm1105, %v1046
        %1125 = vst.msk [vmem:[#allocation3 + $0x98] sm:$0xff] %vm1105, %v1048
        %1126 = vst.msk [vmem:[#allocation3 + $0xa0] sm:$0xff] %vm1105, %v1050
        %1127 = vst.msk [vmem:[#allocation3 + $0xa8] sm:$0xff] %vm1105, %v1052
        %1128 = vst.msk [vmem:[#allocation3 + $0xb0] sm:$0xff] %vm1105, %v1054
        %1129 = vst.msk [vmem:[#allocation3 + $0xb8] sm:$0xff] %vm1105, %v1056
        %1130 = vst.msk [vmem:[#allocation3 + $0xc0] sm:$0xff] %vm1105, %v1058
        %1131 = vst.msk [vmem:[#allocation3 + $0xc8] sm:$0xff] %vm1105, %v1060
        %1132 = vst.msk [vmem:[#allocation3 + $0xd0] sm:$0xff] %vm1105, %v1062
        %1133 = vst.msk [vmem:[#allocation3 + $0xd8] sm:$0xff] %vm1105, %v1064
        %1134 = vst.msk [vmem:[#allocation3 + $0xe0] sm:$0xff] %vm1105, %v1066
        %1135 = vst.msk [vmem:[#allocation3 + $0xe8] sm:$0xff] %vm1105, %v1068
        %1136 = vst.msk [vmem:[#allocation3 + $0xf0] sm:$0xff] %vm1105, %v1070
        %1137 = vst.msk [vmem:[#allocation3 + $0xf8] sm:$0xff] %vm1105, %v1072
        %v1138 = vrot.slane %v366, 2
        %v1139 = vrot.slane %v367, 2
        %v1140 = vsel %vm662, %v1138, %v1139
        %v1141 = vrot.slane %v368, 2
        %v1142 = vsel %vm662, %v1139, %v1141
        %1143 = vrot.lane.b32.xlu0 %v670, 20
        %v1144 = vpop.permute.xlu0 %1143
        %1145 = vrot.lane.b32.xlu0 %v672, 20
        %v1146 = vpop.permute.xlu0 %1145
        %1147 = vrot.lane.b32.xlu0 %v675, 20
        %v1148 = vpop.permute.xlu0 %1147
        %1149 = vrot.lane.b32.xlu0 %v677, 20
        %v1150 = vpop.permute.xlu0 %1149
        %1151 = vrot.lane.b32.xlu0 %v680, 20
        %v1152 = vpop.permute.xlu0 %1151
        %1153 = vrot.lane.b32.xlu0 %v682, 20
        %v1154 = vpop.permute.xlu0 %1153
        %1155 = vrot.lane.b32.xlu0 %v685, 20
        %v1156 = vpop.permute.xlu0 %1155
        %1157 = vrot.lane.b32.xlu0 %v687, 20
        %v1158 = vpop.permute.xlu0 %1157
        %1159 = vrot.lane.b32.xlu0 %v690, 20
        %v1160 = vpop.permute.xlu0 %1159
        %1161 = vrot.lane.b32.xlu0 %v692, 20
        %v1162 = vpop.permute.xlu0 %1161
        %1163 = vrot.lane.b32.xlu0 %v695, 20
        %v1164 = vpop.permute.xlu0 %1163
        %1165 = vrot.lane.b32.xlu0 %v697, 20
        %v1166 = vpop.permute.xlu0 %1165
        %1167 = vrot.lane.b32.xlu0 %v700, 20
        %v1168 = vpop.permute.xlu0 %1167
        %1169 = vrot.lane.b32.xlu0 %v702, 20
        %v1170 = vpop.permute.xlu0 %1169
        %1171 = vrot.lane.b32.xlu0 %v705, 20
        %v1172 = vpop.permute.xlu0 %1171
        %1173 = vrot.lane.b32.xlu0 %v707, 20
        %v1174 = vpop.permute.xlu0 %1173
        %1175 = vrot.lane.b32.xlu0 %v710, 20
        %v1176 = vpop.permute.xlu0 %1175
        %1177 = vrot.lane.b32.xlu0 %v712, 20
        %v1178 = vpop.permute.xlu0 %1177
        %1179 = vrot.lane.b32.xlu0 %v715, 20
        %v1180 = vpop.permute.xlu0 %1179
        %1181 = vrot.lane.b32.xlu0 %v717, 20
        %v1182 = vpop.permute.xlu0 %1181
        %1183 = vrot.lane.b32.xlu0 %v720, 20
        %v1184 = vpop.permute.xlu0 %1183
        %1185 = vrot.lane.b32.xlu0 %v722, 20
        %v1186 = vpop.permute.xlu0 %1185
        %1187 = vrot.lane.b32.xlu0 %v725, 20
        %v1188 = vpop.permute.xlu0 %1187
        %1189 = vrot.lane.b32.xlu0 %v727, 20
        %v1190 = vpop.permute.xlu0 %1189
        %1191 = vrot.lane.b32.xlu0 %v730, 20
        %v1192 = vpop.permute.xlu0 %1191
        %1193 = vrot.lane.b32.xlu0 %v732, 20
        %v1194 = vpop.permute.xlu0 %1193
        %1195 = vrot.lane.b32.xlu0 %v735, 20
        %v1196 = vpop.permute.xlu0 %1195
        %1197 = vrot.lane.b32.xlu0 %v737, 20
        %v1198 = vpop.permute.xlu0 %1197
        %1199 = vrot.lane.b32.xlu0 %v740, 20
        %v1200 = vpop.permute.xlu0 %1199
        %1201 = vrot.lane.b32.xlu0 %v742, 20
        %v1202 = vpop.permute.xlu0 %1201
        %1203 = vrot.lane.b32.xlu0 %v1140, 20
        %v1204 = vpop.permute.xlu0 %1203
        %1205 = vrot.lane.b32.xlu0 %v1142, 20
        %v1206 = vpop.permute.xlu0 %1205
        %vm1239 = vcmask 195744
        %1240 = vst.msk [vmem:[#allocation3] sm:$0xff] %vm1239, %v1144
        %1241 = vst.msk [vmem:[#allocation3 + $0x8] sm:$0xff] %vm1239, %v1146
        %1242 = vst.msk [vmem:[#allocation3 + $0x10] sm:$0xff] %vm1239, %v1148
        %1243 = vst.msk [vmem:[#allocation3 + $0x18] sm:$0xff] %vm1239, %v1150
        %1244 = vst.msk [vmem:[#allocation3 + $0x20] sm:$0xff] %vm1239, %v1152
        %1245 = vst.msk [vmem:[#allocation3 + $0x28] sm:$0xff] %vm1239, %v1154
        %1246 = vst.msk [vmem:[#allocation3 + $0x30] sm:$0xff] %vm1239, %v1156
        %1247 = vst.msk [vmem:[#allocation3 + $0x38] sm:$0xff] %vm1239, %v1158
        %1248 = vst.msk [vmem:[#allocation3 + $0x40] sm:$0xff] %vm1239, %v1160
        %1249 = vst.msk [vmem:[#allocation3 + $0x48] sm:$0xff] %vm1239, %v1162
        %1250 = vst.msk [vmem:[#allocation3 + $0x50] sm:$0xff] %vm1239, %v1164
        %1251 = vst.msk [vmem:[#allocation3 + $0x58] sm:$0xff] %vm1239, %v1166
        %1252 = vst.msk [vmem:[#allocation3 + $0x60] sm:$0xff] %vm1239, %v1168
        %1253 = vst.msk [vmem:[#allocation3 + $0x68] sm:$0xff] %vm1239, %v1170
        %1254 = vst.msk [vmem:[#allocation3 + $0x70] sm:$0xff] %vm1239, %v1172
        %1255 = vst.msk [vmem:[#allocation3 + $0x78] sm:$0xff] %vm1239, %v1174
        %1256 = vst.msk [vmem:[#allocation3 + $0x80] sm:$0xff] %vm1239, %v1176
        %1257 = vst.msk [vmem:[#allocation3 + $0x88] sm:$0xff] %vm1239, %v1178
        %1258 = vst.msk [vmem:[#allocation3 + $0x90] sm:$0xff] %vm1239, %v1180
        %1259 = vst.msk [vmem:[#allocation3 + $0x98] sm:$0xff] %vm1239, %v1182
        %1260 = vst.msk [vmem:[#allocation3 + $0xa0] sm:$0xff] %vm1239, %v1184
        %1261 = vst.msk [vmem:[#allocation3 + $0xa8] sm:$0xff] %vm1239, %v1186
        %1262 = vst.msk [vmem:[#allocation3 + $0xb0] sm:$0xff] %vm1239, %v1188
        %1263 = vst.msk [vmem:[#allocation3 + $0xb8] sm:$0xff] %vm1239, %v1190
        %1264 = vst.msk [vmem:[#allocation3 + $0xc0] sm:$0xff] %vm1239, %v1192
        %1265 = vst.msk [vmem:[#allocation3 + $0xc8] sm:$0xff] %vm1239, %v1194
        %1266 = vst.msk [vmem:[#allocation3 + $0xd0] sm:$0xff] %vm1239, %v1196
        %1267 = vst.msk [vmem:[#allocation3 + $0xd8] sm:$0xff] %vm1239, %v1198
        %1268 = vst.msk [vmem:[#allocation3 + $0xe0] sm:$0xff] %vm1239, %v1200
        %1269 = vst.msk [vmem:[#allocation3 + $0xe8] sm:$0xff] %vm1239, %v1202
        %1270 = vst.msk [vmem:[#allocation3 + $0xf0] sm:$0xff] %vm1239, %v1204
        %1271 = vst.msk [vmem:[#allocation3 + $0xf8] sm:$0xff] %vm1239, %v1206
        %1274 = vrot.lane.b32.xlu0 %v324, 24
        %v1275 = vpop.permute.xlu0 %1274
        %1276 = vrot.lane.b32.xlu0 %v325, 24
        %v1277 = vpop.permute.xlu0 %1276
        %1278 = vrot.lane.b32.xlu0 %v327, 24
        %v1279 = vpop.permute.xlu0 %1278
        %1280 = vrot.lane.b32.xlu0 %v328, 24
        %v1281 = vpop.permute.xlu0 %1280
        %1282 = vrot.lane.b32.xlu0 %v330, 24
        %v1283 = vpop.permute.xlu0 %1282
        %1284 = vrot.lane.b32.xlu0 %v331, 24
        %v1285 = vpop.permute.xlu0 %1284
        %1286 = vrot.lane.b32.xlu0 %v333, 24
        %v1287 = vpop.permute.xlu0 %1286
        %1288 = vrot.lane.b32.xlu0 %v334, 24
        %v1289 = vpop.permute.xlu0 %1288
        %1290 = vrot.lane.b32.xlu0 %v336, 24
        %v1291 = vpop.permute.xlu0 %1290
        %1292 = vrot.lane.b32.xlu0 %v337, 24
        %v1293 = vpop.permute.xlu0 %1292
        %1294 = vrot.lane.b32.xlu0 %v339, 24
        %v1295 = vpop.permute.xlu0 %1294
        %1296 = vrot.lane.b32.xlu0 %v340, 24
        %v1297 = vpop.permute.xlu0 %1296
        %1298 = vrot.lane.b32.xlu0 %v342, 24
        %v1299 = vpop.permute.xlu0 %1298
        %1300 = vrot.lane.b32.xlu0 %v343, 24
        %v1301 = vpop.permute.xlu0 %1300
        %1302 = vrot.lane.b32.xlu0 %v345, 24
        %v1303 = vpop.permute.xlu0 %1302
        %1304 = vrot.lane.b32.xlu0 %v346, 24
        %v1305 = vpop.permute.xlu0 %1304
        %1306 = vrot.lane.b32.xlu0 %v348, 24
        %v1307 = vpop.permute.xlu0 %1306
        %1308 = vrot.lane.b32.xlu0 %v349, 24
        %v1309 = vpop.permute.xlu0 %1308
        %1310 = vrot.lane.b32.xlu0 %v351, 24
        %v1311 = vpop.permute.xlu0 %1310
        %1312 = vrot.lane.b32.xlu0 %v352, 24
        %v1313 = vpop.permute.xlu0 %1312
        %1314 = vrot.lane.b32.xlu0 %v354, 24
        %v1315 = vpop.permute.xlu0 %1314
        %1316 = vrot.lane.b32.xlu0 %v355, 24
        %v1317 = vpop.permute.xlu0 %1316
        %1318 = vrot.lane.b32.xlu0 %v357, 24
        %v1319 = vpop.permute.xlu0 %1318
        %1320 = vrot.lane.b32.xlu0 %v358, 24
        %v1321 = vpop.permute.xlu0 %1320
        %1322 = vrot.lane.b32.xlu0 %v360, 24
        %v1323 = vpop.permute.xlu0 %1322
        %1324 = vrot.lane.b32.xlu0 %v361, 24
        %v1325 = vpop.permute.xlu0 %1324
        %1326 = vrot.lane.b32.xlu0 %v363, 24
        %v1327 = vpop.permute.xlu0 %1326
        %1328 = vrot.lane.b32.xlu0 %v364, 24
        %v1329 = vpop.permute.xlu0 %1328
        %1330 = vrot.lane.b32.xlu0 %v366, 24
        %v1331 = vpop.permute.xlu0 %1330
        %1332 = vrot.lane.b32.xlu0 %v367, 24
        %v1333 = vpop.permute.xlu0 %1332
        %1334 = vrot.lane.b32.xlu0 %v369, 24
        %v1335 = vpop.permute.xlu0 %1334
        %1336 = vrot.lane.b32.xlu0 %v370, 24
        %v1337 = vpop.permute.xlu0 %1336
        %vm1370 = vcmask 228544
        %1371 = vst.msk [vmem:[#allocation3] sm:$0xff] %vm1370, %v1275
        %1372 = vst.msk [vmem:[#allocation3 + $0x8] sm:$0xff] %vm1370, %v1277
        %1373 = vst.msk [vmem:[#allocation3 + $0x10] sm:$0xff] %vm1370, %v1279
        %1374 = vst.msk [vmem:[#allocation3 + $0x18] sm:$0xff] %vm1370, %v1281
        %1375 = vst.msk [vmem:[#allocation3 + $0x20] sm:$0xff] %vm1370, %v1283
        %1376 = vst.msk [vmem:[#allocation3 + $0x28] sm:$0xff] %vm1370, %v1285
        %1377 = vst.msk [vmem:[#allocation3 + $0x30] sm:$0xff] %vm1370, %v1287
        %1378 = vst.msk [vmem:[#allocation3 + $0x38] sm:$0xff] %vm1370, %v1289
        %1379 = vst.msk [vmem:[#allocation3 + $0x40] sm:$0xff] %vm1370, %v1291
        %1380 = vst.msk [vmem:[#allocation3 + $0x48] sm:$0xff] %vm1370, %v1293
        %1381 = vst.msk [vmem:[#allocation3 + $0x50] sm:$0xff] %vm1370, %v1295
        %1382 = vst.msk [vmem:[#allocation3 + $0x58] sm:$0xff] %vm1370, %v1297
        %1383 = vst.msk [vmem:[#allocation3 + $0x60] sm:$0xff] %vm1370, %v1299
        %1384 = vst.msk [vmem:[#allocation3 + $0x68] sm:$0xff] %vm1370, %v1301
        %1385 = vst.msk [vmem:[#allocation3 + $0x70] sm:$0xff] %vm1370, %v1303
        %1386 = vst.msk [vmem:[#allocation3 + $0x78] sm:$0xff] %vm1370, %v1305
        %1387 = vst.msk [vmem:[#allocation3 + $0x80] sm:$0xff] %vm1370, %v1307
        %1388 = vst.msk [vmem:[#allocation3 + $0x88] sm:$0xff] %vm1370, %v1309
        %1389 = vst.msk [vmem:[#allocation3 + $0x90] sm:$0xff] %vm1370, %v1311
        %1390 = vst.msk [vmem:[#allocation3 + $0x98] sm:$0xff] %vm1370, %v1313
        %1391 = vst.msk [vmem:[#allocation3 + $0xa0] sm:$0xff] %vm1370, %v1315
        %1392 = vst.msk [vmem:[#allocation3 + $0xa8] sm:$0xff] %vm1370, %v1317
        %1393 = vst.msk [vmem:[#allocation3 + $0xb0] sm:$0xff] %vm1370, %v1319
        %1394 = vst.msk [vmem:[#allocation3 + $0xb8] sm:$0xff] %vm1370, %v1321
        %1395 = vst.msk [vmem:[#allocation3 + $0xc0] sm:$0xff] %vm1370, %v1323
        %1396 = vst.msk [vmem:[#allocation3 + $0xc8] sm:$0xff] %vm1370, %v1325
        %1397 = vst.msk [vmem:[#allocation3 + $0xd0] sm:$0xff] %vm1370, %v1327
        %1398 = vst.msk [vmem:[#allocation3 + $0xd8] sm:$0xff] %vm1370, %v1329
        %1399 = vst.msk [vmem:[#allocation3 + $0xe0] sm:$0xff] %vm1370, %v1331
        %1400 = vst.msk [vmem:[#allocation3 + $0xe8] sm:$0xff] %vm1370, %v1333
        %1401 = vst.msk [vmem:[#allocation3 + $0xf0] sm:$0xff] %vm1370, %v1335
        %1402 = vst.msk [vmem:[#allocation3 + $0xf8] sm:$0xff] %vm1370, %v1337
        %v1404 = vrot.slane %v369, 1
        %v1405 = vrot.slane %v370, 1
        %v1406 = vsel %vm452, %v1404, %v1405
        %v1407 = vrot.slane %v371, 1
        %v1408 = vsel %vm452, %v1405, %v1407
        %1409 = vrot.lane.b32.xlu0 %v465, 28
        %v1410 = vpop.permute.xlu0 %1409
        %1411 = vrot.lane.b32.xlu0 %v467, 28
        %v1412 = vpop.permute.xlu0 %1411
        %1413 = vrot.lane.b32.xlu0 %v470, 28
        %v1414 = vpop.permute.xlu0 %1413
        %1415 = vrot.lane.b32.xlu0 %v472, 28
        %v1416 = vpop.permute.xlu0 %1415
        %1417 = vrot.lane.b32.xlu0 %v475, 28
        %v1418 = vpop.permute.xlu0 %1417
        %1419 = vrot.lane.b32.xlu0 %v477, 28
        %v1420 = vpop.permute.xlu0 %1419
        %1421 = vrot.lane.b32.xlu0 %v480, 28
        %v1422 = vpop.permute.xlu0 %1421
        %1423 = vrot.lane.b32.xlu0 %v482, 28
        %v1424 = vpop.permute.xlu0 %1423
        %1425 = vrot.lane.b32.xlu0 %v485, 28
        %v1426 = vpop.permute.xlu0 %1425
        %1427 = vrot.lane.b32.xlu0 %v487, 28
        %v1428 = vpop.permute.xlu0 %1427
        %1429 = vrot.lane.b32.xlu0 %v490, 28
        %v1430 = vpop.permute.xlu0 %1429
        %1431 = vrot.lane.b32.xlu0 %v492, 28
        %v1432 = vpop.permute.xlu0 %1431
        %1433 = vrot.lane.b32.xlu0 %v495, 28
        %v1434 = vpop.permute.xlu0 %1433
        %1435 = vrot.lane.b32.xlu0 %v497, 28
        %v1436 = vpop.permute.xlu0 %1435
        %1437 = vrot.lane.b32.xlu0 %v500, 28
        %v1438 = vpop.permute.xlu0 %1437
        %1439 = vrot.lane.b32.xlu0 %v502, 28
        %v1440 = vpop.permute.xlu0 %1439
        %1441 = vrot.lane.b32.xlu0 %v505, 28
        %v1442 = vpop.permute.xlu0 %1441
        %1443 = vrot.lane.b32.xlu0 %v507, 28
        %v1444 = vpop.permute.xlu0 %1443
        %1445 = vrot.lane.b32.xlu0 %v510, 28
        %v1446 = vpop.permute.xlu0 %1445
        %1447 = vrot.lane.b32.xlu0 %v512, 28
        %v1448 = vpop.permute.xlu0 %1447
        %1449 = vrot.lane.b32.xlu0 %v515, 28
        %v1450 = vpop.permute.xlu0 %1449
        %1451 = vrot.lane.b32.xlu0 %v517, 28
        %v1452 = vpop.permute.xlu0 %1451
        %1453 = vrot.lane.b32.xlu0 %v520, 28
        %v1454 = vpop.permute.xlu0 %1453
        %1455 = vrot.lane.b32.xlu0 %v522, 28
        %v1456 = vpop.permute.xlu0 %1455
        %1457 = vrot.lane.b32.xlu0 %v525, 28
        %v1458 = vpop.permute.xlu0 %1457
        %1459 = vrot.lane.b32.xlu0 %v527, 28
        %v1460 = vpop.permute.xlu0 %1459
        %1461 = vrot.lane.b32.xlu0 %v530, 28
        %v1462 = vpop.permute.xlu0 %1461
        %1463 = vrot.lane.b32.xlu0 %v532, 28
        %v1464 = vpop.permute.xlu0 %1463
        %1465 = vrot.lane.b32.xlu0 %v1006, 28
        %v1466 = vpop.permute.xlu0 %1465
        %1467 = vrot.lane.b32.xlu0 %v1008, 28
        %v1468 = vpop.permute.xlu0 %1467
        %1469 = vrot.lane.b32.xlu0 %v1406, 28
        %v1470 = vpop.permute.xlu0 %1469
        %1471 = vrot.lane.b32.xlu0 %v1408, 28
        %v1472 = vpop.permute.xlu0 %1471
        %vm1505 = vcmask 261344
        %1506 = vst.msk [vmem:[#allocation3] sm:$0xff] %vm1505, %v1410
        %1507 = vst.msk [vmem:[#allocation3 + $0x8] sm:$0xff] %vm1505, %v1412
        %1508 = vst.msk [vmem:[#allocation3 + $0x10] sm:$0xff] %vm1505, %v1414
        %1509 = vst.msk [vmem:[#allocation3 + $0x18] sm:$0xff] %vm1505, %v1416
        %1510 = vst.msk [vmem:[#allocation3 + $0x20] sm:$0xff] %vm1505, %v1418
        %1511 = vst.msk [vmem:[#allocation3 + $0x28] sm:$0xff] %vm1505, %v1420
        %1512 = vst.msk [vmem:[#allocation3 + $0x30] sm:$0xff] %vm1505, %v1422
        %1513 = vst.msk [vmem:[#allocation3 + $0x38] sm:$0xff] %vm1505, %v1424
        %1514 = vst.msk [vmem:[#allocation3 + $0x40] sm:$0xff] %vm1505, %v1426
        %1515 = vst.msk [vmem:[#allocation3 + $0x48] sm:$0xff] %vm1505, %v1428
        %1516 = vst.msk [vmem:[#allocation3 + $0x50] sm:$0xff] %vm1505, %v1430
        %1517 = vst.msk [vmem:[#allocation3 + $0x58] sm:$0xff] %vm1505, %v1432
        %1518 = vst.msk [vmem:[#allocation3 + $0x60] sm:$0xff] %vm1505, %v1434
        %1519 = vst.msk [vmem:[#allocation3 + $0x68] sm:$0xff] %vm1505, %v1436
        %1520 = vst.msk [vmem:[#allocation3 + $0x70] sm:$0xff] %vm1505, %v1438
        %1521 = vst.msk [vmem:[#allocation3 + $0x78] sm:$0xff] %vm1505, %v1440
        %1522 = vst.msk [vmem:[#allocation3 + $0x80] sm:$0xff] %vm1505, %v1442
        %1523 = vst.msk [vmem:[#allocation3 + $0x88] sm:$0xff] %vm1505, %v1444
        %1524 = vst.msk [vmem:[#allocation3 + $0x90] sm:$0xff] %vm1505, %v1446
        %1525 = vst.msk [vmem:[#allocation3 + $0x98] sm:$0xff] %vm1505, %v1448
        %1526 = vst.msk [vmem:[#allocation3 + $0xa0] sm:$0xff] %vm1505, %v1450
        %1527 = vst.msk [vmem:[#allocation3 + $0xa8] sm:$0xff] %vm1505, %v1452
        %1528 = vst.msk [vmem:[#allocation3 + $0xb0] sm:$0xff] %vm1505, %v1454
        %1529 = vst.msk [vmem:[#allocation3 + $0xb8] sm:$0xff] %vm1505, %v1456
        %1530 = vst.msk [vmem:[#allocation3 + $0xc0] sm:$0xff] %vm1505, %v1458
        %1531 = vst.msk [vmem:[#allocation3 + $0xc8] sm:$0xff] %vm1505, %v1460
        %1532 = vst.msk [vmem:[#allocation3 + $0xd0] sm:$0xff] %vm1505, %v1462
        %1533 = vst.msk [vmem:[#allocation3 + $0xd8] sm:$0xff] %vm1505, %v1464
        %1534 = vst.msk [vmem:[#allocation3 + $0xe0] sm:$0xff] %vm1505, %v1466
        %1535 = vst.msk [vmem:[#allocation3 + $0xe8] sm:$0xff] %vm1505, %v1468
        %1536 = vst.msk [vmem:[#allocation3 + $0xf0] sm:$0xff] %vm1505, %v1470
        %1537 = vst.msk [vmem:[#allocation3 + $0xf8] sm:$0xff] %vm1505, %v1472
        %v1538 = vrot.slane %v369, 2
        %v1539 = vrot.slane %v370, 2
        %v1540 = vsel %vm662, %v1538, %v1539
        %v1541 = vrot.slane %v371, 2
        %v1542 = vsel %vm662, %v1539, %v1541
        %1543 = vrot.lane.b32.xlu0 %v675, 32
        %v1544 = vpop.permute.xlu0 %1543
        %1545 = vrot.lane.b32.xlu0 %v677, 32
        %v1546 = vpop.permute.xlu0 %1545
        %1547 = vrot.lane.b32.xlu0 %v680, 32
        %v1548 = vpop.permute.xlu0 %1547
        %1549 = vrot.lane.b32.xlu0 %v682, 32
        %v1550 = vpop.permute.xlu0 %1549
        %1551 = vrot.lane.b32.xlu0 %v685, 32
        %v1552 = vpop.permute.xlu0 %1551
        %1553 = vrot.lane.b32.xlu0 %v687, 32
        %v1554 = vpop.permute.xlu0 %1553
        %1555 = vrot.lane.b32.xlu0 %v690, 32
        %v1556 = vpop.permute.xlu0 %1555
        %1557 = vrot.lane.b32.xlu0 %v692, 32
        %v1558 = vpop.permute.xlu0 %1557
        %1559 = vrot.lane.b32.xlu0 %v695, 32
        %v1560 = vpop.permute.xlu0 %1559
        %1561 = vrot.lane.b32.xlu0 %v697, 32
        %v1562 = vpop.permute.xlu0 %1561
        %1563 = vrot.lane.b32.xlu0 %v700, 32
        %v1564 = vpop.permute.xlu0 %1563
        %1565 = vrot.lane.b32.xlu0 %v702, 32
        %v1566 = vpop.permute.xlu0 %1565
        %1567 = vrot.lane.b32.xlu0 %v705, 32
        %v1568 = vpop.permute.xlu0 %1567
        %1569 = vrot.lane.b32.xlu0 %v707, 32
        %v1570 = vpop.permute.xlu0 %1569
        %1571 = vrot.lane.b32.xlu0 %v710, 32
        %v1572 = vpop.permute.xlu0 %1571
        %1573 = vrot.lane.b32.xlu0 %v712, 32
        %v1574 = vpop.permute.xlu0 %1573
        %1575 = vrot.lane.b32.xlu0 %v715, 32
        %v1576 = vpop.permute.xlu0 %1575
        %1577 = vrot.lane.b32.xlu0 %v717, 32
        %v1578 = vpop.permute.xlu0 %1577
        %1579 = vrot.lane.b32.xlu0 %v720, 32
        %v1580 = vpop.permute.xlu0 %1579
        %1581 = vrot.lane.b32.xlu0 %v722, 32
        %v1582 = vpop.permute.xlu0 %1581
        %1583 = vrot.lane.b32.xlu0 %v725, 32
        %v1584 = vpop.permute.xlu0 %1583
        %1585 = vrot.lane.b32.xlu0 %v727, 32
        %v1586 = vpop.permute.xlu0 %1585
        %1587 = vrot.lane.b32.xlu0 %v730, 32
        %v1588 = vpop.permute.xlu0 %1587
        %1589 = vrot.lane.b32.xlu0 %v732, 32
        %v1590 = vpop.permute.xlu0 %1589
        %1591 = vrot.lane.b32.xlu0 %v735, 32
        %v1592 = vpop.permute.xlu0 %1591
        %1593 = vrot.lane.b32.xlu0 %v737, 32
        %v1594 = vpop.permute.xlu0 %1593
        %1595 = vrot.lane.b32.xlu0 %v740, 32
        %v1596 = vpop.permute.xlu0 %1595
        %1597 = vrot.lane.b32.xlu0 %v742, 32
        %v1598 = vpop.permute.xlu0 %1597
        %1599 = vrot.lane.b32.xlu0 %v1140, 32
        %v1600 = vpop.permute.xlu0 %1599
        %1601 = vrot.lane.b32.xlu0 %v1142, 32
        %v1602 = vpop.permute.xlu0 %1601
        %1603 = vrot.lane.b32.xlu0 %v1540, 32
        %v1604 = vpop.permute.xlu0 %1603
        %1605 = vrot.lane.b32.xlu0 %v1542, 32
        %v1606 = vpop.permute.xlu0 %1605
        %vm1639 = vcmask 294144
        %1640 = vst.msk [vmem:[#allocation3] sm:$0xff] %vm1639, %v1544
        %1641 = vst.msk [vmem:[#allocation3 + $0x8] sm:$0xff] %vm1639, %v1546
        %1642 = vst.msk [vmem:[#allocation3 + $0x10] sm:$0xff] %vm1639, %v1548
        %1643 = vst.msk [vmem:[#allocation3 + $0x18] sm:$0xff] %vm1639, %v1550
        %1644 = vst.msk [vmem:[#allocation3 + $0x20] sm:$0xff] %vm1639, %v1552
        %1645 = vst.msk [vmem:[#allocation3 + $0x28] sm:$0xff] %vm1639, %v1554
        %1646 = vst.msk [vmem:[#allocation3 + $0x30] sm:$0xff] %vm1639, %v1556
        %1647 = vst.msk [vmem:[#allocation3 + $0x38] sm:$0xff] %vm1639, %v1558
        %1648 = vst.msk [vmem:[#allocation3 + $0x40] sm:$0xff] %vm1639, %v1560
        %1649 = vst.msk [vmem:[#allocation3 + $0x48] sm:$0xff] %vm1639, %v1562
        %1650 = vst.msk [vmem:[#allocation3 + $0x50] sm:$0xff] %vm1639, %v1564
        %1651 = vst.msk [vmem:[#allocation3 + $0x58] sm:$0xff] %vm1639, %v1566
        %1652 = vst.msk [vmem:[#allocation3 + $0x60] sm:$0xff] %vm1639, %v1568
        %1653 = vst.msk [vmem:[#allocation3 + $0x68] sm:$0xff] %vm1639, %v1570
        %1654 = vst.msk [vmem:[#allocation3 + $0x70] sm:$0xff] %vm1639, %v1572
        %1655 = vst.msk [vmem:[#allocation3 + $0x78] sm:$0xff] %vm1639, %v1574
        %1656 = vst.msk [vmem:[#allocation3 + $0x80] sm:$0xff] %vm1639, %v1576
        %1657 = vst.msk [vmem:[#allocation3 + $0x88] sm:$0xff] %vm1639, %v1578
        %1658 = vst.msk [vmem:[#allocation3 + $0x90] sm:$0xff] %vm1639, %v1580
        %1659 = vst.msk [vmem:[#allocation3 + $0x98] sm:$0xff] %vm1639, %v1582
        %1660 = vst.msk [vmem:[#allocation3 + $0xa0] sm:$0xff] %vm1639, %v1584
        %1661 = vst.msk [vmem:[#allocation3 + $0xa8] sm:$0xff] %vm1639, %v1586
        %1662 = vst.msk [vmem:[#allocation3 + $0xb0] sm:$0xff] %vm1639, %v1588
        %1663 = vst.msk [vmem:[#allocation3 + $0xb8] sm:$0xff] %vm1639, %v1590
        %1664 = vst.msk [vmem:[#allocation3 + $0xc0] sm:$0xff] %vm1639, %v1592
        %1665 = vst.msk [vmem:[#allocation3 + $0xc8] sm:$0xff] %vm1639, %v1594
        %1666 = vst.msk [vmem:[#allocation3 + $0xd0] sm:$0xff] %vm1639, %v1596
        %1667 = vst.msk [vmem:[#allocation3 + $0xd8] sm:$0xff] %vm1639, %v1598
        %1668 = vst.msk [vmem:[#allocation3 + $0xe0] sm:$0xff] %vm1639, %v1600
        %1669 = vst.msk [vmem:[#allocation3 + $0xe8] sm:$0xff] %vm1639, %v1602
        %1670 = vst.msk [vmem:[#allocation3 + $0xf0] sm:$0xff] %vm1639, %v1604
        %1671 = vst.msk [vmem:[#allocation3 + $0xf8] sm:$0xff] %vm1639, %v1606
        %v1672 = vld [vmem:[#allocation3] sm:$0xff]
        %v1673 = vld [vmem:[#allocation3 + $0x8] sm:$0xff]
        %v1674 = vld [vmem:[#allocation3 + $0x10] sm:$0xff]
        %v1675 = vld [vmem:[#allocation3 + $0x18] sm:$0xff]
        %v1676 = vld [vmem:[#allocation3 + $0x20] sm:$0xff]
        %v1677 = vld [vmem:[#allocation3 + $0x28] sm:$0xff]
        %v1678 = vld [vmem:[#allocation3 + $0x30] sm:$0xff]
        %v1679 = vld [vmem:[#allocation3 + $0x38] sm:$0xff]
        %v1680 = vld [vmem:[#allocation3 + $0x40] sm:$0xff]
        %v1681 = vld [vmem:[#allocation3 + $0x48] sm:$0xff]
        %v1682 = vld [vmem:[#allocation3 + $0x50] sm:$0xff]
        %v1683 = vld [vmem:[#allocation3 + $0x58] sm:$0xff]
        %v1684 = vld [vmem:[#allocation3 + $0x60] sm:$0xff]
        %v1685 = vld [vmem:[#allocation3 + $0x68] sm:$0xff]
        %v1686 = vld [vmem:[#allocation3 + $0x70] sm:$0xff]
        %v1687 = vld [vmem:[#allocation3 + $0x78] sm:$0xff]
        %v1688 = vld [vmem:[#allocation3 + $0x80] sm:$0xff]
        %v1689 = vld [vmem:[#allocation3 + $0x88] sm:$0xff]
        %v1690 = vld [vmem:[#allocation3 + $0x90] sm:$0xff]
        %v1691 = vld [vmem:[#allocation3 + $0x98] sm:$0xff]
        %v1692 = vld [vmem:[#allocation3 + $0xa0] sm:$0xff]
        %v1693 = vld [vmem:[#allocation3 + $0xa8] sm:$0xff]
        %v1694 = vld [vmem:[#allocation3 + $0xb0] sm:$0xff]
        %v1695 = vld [vmem:[#allocation3 + $0xb8] sm:$0xff]
        %v1696 = vld [vmem:[#allocation3 + $0xc0] sm:$0xff]
        %v1697 = vld [vmem:[#allocation3 + $0xc8] sm:$0xff]
        %v1698 = vld [vmem:[#allocation3 + $0xd0] sm:$0xff]
        %v1699 = vld [vmem:[#allocation3 + $0xd8] sm:$0xff]
        %v1700 = vld [vmem:[#allocation3 + $0xe0] sm:$0xff]
        %v1701 = vld [vmem:[#allocation3 + $0xe8] sm:$0xff]
        %v1702 = vld [vmem:[#allocation3 + $0xf0] sm:$0xff]
        %v1703 = vld [vmem:[#allocation3 + $0xf8] sm:$0xff]
        %v1704 = vpack.c.bf16 %v1673, %v1672
        %v1705 = vpack.c.bf16 %v1675, %v1674
        %v1706 = vpack.c.bf16 %v1677, %v1676
        %v1707 = vpack.c.bf16 %v1679, %v1678
        %v1708 = vpack.c.bf16 %v1681, %v1680
        %v1709 = vpack.c.bf16 %v1683, %v1682
        %v1710 = vpack.c.bf16 %v1685, %v1684
        %v1711 = vpack.c.bf16 %v1687, %v1686
        %v1712 = vpack.c.bf16 %v1689, %v1688
        %v1713 = vpack.c.bf16 %v1691, %v1690
        %v1714 = vpack.c.bf16 %v1693, %v1692
        %v1715 = vpack.c.bf16 %v1695, %v1694
        %v1716 = vpack.c.bf16 %v1697, %v1696
        %v1717 = vpack.c.bf16 %v1699, %v1698
        %v1718 = vpack.c.bf16 %v1701, %v1700
        %v1719 = vpack.c.bf16 %v1703, %v1702
        %v1720 = vld [vmem:[%s1] sm:$0xf]
        %v1721 = vld [vmem:[%s1 + $0x4] sm:$0xf]
        %v1722 = vld [vmem:[%s1 + $0x8] sm:$0xf]
        %v1723 = vld [vmem:[%s1 + $0xc] sm:$0xf]
        %v1724 = vld [vmem:[%s1 + $0x10] sm:$0x3]
        %v1725 = vld [vmem:[%s2] sm:$0x1]
        %v1727 = vlaneseq
        %v1728 = vshrl.u32 %v1727, 7
        %v1729 = vsub.s32 0, %v1728
        %v1730 = vrot.slane %v1725, %v1729
        %v1737 = vunpack.c.l.b16 %v1720
        %v1738 = vunpack.c.l.b16 %v1721
        %v1739 = vunpack.c.l.b16 %v1722
        %v1740 = vunpack.c.l.b16 %v1723
        %v1741 = vunpack.c.l.b16 %v1724
        %v1742 = vpack.c.b16 %v1738, %v1737
        %v1743 = vpack.c.b16 %v1740, %v1739
        %v1744 = vpack.c.b16 %v1741, %v1741
        %vm1747 = vcmask 293888
        %v1749 = vsel %vm1747, %v1704, 0
        %v1752 = vsel %vm1747, %v1705, 0
        %v1755 = vsel %vm1747, %v1706, 0
        %v1758 = vsel %vm1747, %v1707, 0
        %v1761 = vsel %vm1747, %v1708, 0
        %v1764 = vsel %vm1747, %v1709, 0
        %v1767 = vsel %vm1747, %v1710, 0
        %v1770 = vsel %vm1747, %v1711, 0
        %v1773 = vsel %vm1747, %v1712, 0
        %v1776 = vsel %vm1747, %v1713, 0
        %v1779 = vsel %vm1747, %v1714, 0
        %v1782 = vsel %vm1747, %v1715, 0
        %v1785 = vsel %vm1747, %v1716, 0
        %v1788 = vsel %vm1747, %v1717, 0
        %v1791 = vsel %vm1747, %v1718, 0
        %v1794 = vsel %vm1747, %v1719, 0
        %vm1796 = vcmask 1041408
        %v1798 = vsel %vm1796, %v1744, 0
        %1800 = vmatprep.subr.bf16.mxu0 0
        %1801 = vmatpush1.bf16.msra.mxu0 0
        %1802 = vmatprep.subr.bf16.mxu0 0
        %1803 = vmatpush1.bf16.msra.mxu0 0
        %1804 = vmatprep.subr.bf16.mxu0 0
        %1805 = vmatpush1.bf16.msra.mxu0 0
        %1806 = vmatprep.subr.bf16.mxu0 0
        %1807 = vmatpush1.bf16.msra.mxu0 0
        %1808 = vmatprep.subr.bf16.mxu0 0
        %1809 = vmatpush1.bf16.msra.mxu0 0
        %1810 = vmatprep.subr.bf16.mxu0 0
        %1811 = vmatpush1.bf16.msra.mxu0 %v1798
        %1812 = vmatprep.subr.bf16.mxu0 0
        %1813 = vmatpush1.bf16.msra.mxu0 %v1743
        %1814 = vmatprep.subr.bf16.mxu0 0
        %1815 = vmatpush1.bf16.msra.mxu0 %v1742
        %1816 = vmatprep.subr.bf16.mxu0 0
        %1817 = vmatpush2.bf16.msra.mxu0 0
        %1818 = vmatprep.subr.bf16.mxu0 0
        %1819 = vmatpush2.bf16.msra.mxu0 0
        %1820 = vmatprep.subr.bf16.mxu0 0
        %1821 = vmatpush2.bf16.msra.mxu0 0
        %1822 = vmatprep.subr.bf16.mxu0 0
        %1823 = vmatpush2.bf16.msra.mxu0 0
        %1824 = vmatprep.subr.bf16.mxu0 0
        %1825 = vmatpush2.bf16.msra.mxu0 0
        %1826 = vmatprep.subr.bf16.mxu0 0
        %1827 = vmatpush2.bf16.msra.mxu0 0
        %1828 = vmatprep.subr.bf16.mxu0 0
        %1829 = vmatpush2.bf16.msra.mxu0 0
        %1830 = vmatprep.subr.bf16.mxu0 0
        %1831 = vmatpush2.bf16.msra.mxu0 0
        %1832 = vmatprep.mubr.bf16.mxu0 0
        %1833 = vmatmul.mubr.bf16.gmra.mxu0 %v1749
        %v1834 = vpop.f32.mrf.mxu0
        %v1835 = vadd.f32 %v1730, %v1834
        %v1836 = vpop.f32.mrf.mxu0
        %v1837 = vpop.f32.mrf.mxu0
        %v1838 = vadd.f32 %v1730, %v1837
        %v1839 = vpop.f32.mrf.mxu0
        %1840 = vmatprep.mubr.bf16.mxu0 0
        %1841 = vmatmul.mubr.bf16.gmra.mxu0 %v1752
        %v1842 = vpop.f32.mrf.mxu0
        %v1843 = vadd.f32 %v1730, %v1842
        %v1844 = vpop.f32.mrf.mxu0
        %v1845 = vpop.f32.mrf.mxu0
        %v1846 = vadd.f32 %v1730, %v1845
        %v1847 = vpop.f32.mrf.mxu0
        %1848 = vmatprep.mubr.bf16.mxu0 0
        %1849 = vmatmul.mubr.bf16.gmra.mxu0 %v1755
        %v1850 = vpop.f32.mrf.mxu0
        %v1851 = vadd.f32 %v1730, %v1850
        %v1852 = vpop.f32.mrf.mxu0
        %v1853 = vpop.f32.mrf.mxu0
        %v1854 = vadd.f32 %v1730, %v1853
        %v1855 = vpop.f32.mrf.mxu0
        %1856 = vmatprep.mubr.bf16.mxu0 0
        %1857 = vmatmul.mubr.bf16.gmra.mxu0 %v1758
        %v1858 = vpop.f32.mrf.mxu0
        %v1859 = vadd.f32 %v1730, %v1858
        %v1860 = vpop.f32.mrf.mxu0
        %v1861 = vpop.f32.mrf.mxu0
        %v1862 = vadd.f32 %v1730, %v1861
        %v1863 = vpop.f32.mrf.mxu0
        %1864 = vmatprep.mubr.bf16.mxu0 0
        %1865 = vmatmul.mubr.bf16.gmra.mxu0 %v1761
        %v1866 = vpop.f32.mrf.mxu0
        %v1867 = vadd.f32 %v1730, %v1866
        %v1868 = vpop.f32.mrf.mxu0
        %v1869 = vpop.f32.mrf.mxu0
        %v1870 = vadd.f32 %v1730, %v1869
        %v1871 = vpop.f32.mrf.mxu0
        %1872 = vmatprep.mubr.bf16.mxu0 0
        %1873 = vmatmul.mubr.bf16.gmra.mxu0 %v1764
        %v1874 = vpop.f32.mrf.mxu0
        %v1875 = vadd.f32 %v1730, %v1874
        %v1876 = vpop.f32.mrf.mxu0
        %v1877 = vpop.f32.mrf.mxu0
        %v1878 = vadd.f32 %v1730, %v1877
        %v1879 = vpop.f32.mrf.mxu0
        %1880 = vmatprep.mubr.bf16.mxu0 0
        %1881 = vmatmul.mubr.bf16.gmra.mxu0 %v1767
        %v1882 = vpop.f32.mrf.mxu0
        %v1883 = vadd.f32 %v1730, %v1882
        %v1884 = vpop.f32.mrf.mxu0
        %v1885 = vpop.f32.mrf.mxu0
        %v1886 = vadd.f32 %v1730, %v1885
        %v1887 = vpop.f32.mrf.mxu0
        %1888 = vmatprep.mubr.bf16.mxu0 0
        %1889 = vmatmul.mubr.bf16.gmra.mxu0 %v1770
        %v1890 = vpop.f32.mrf.mxu0
        %v1891 = vadd.f32 %v1730, %v1890
        %v1892 = vpop.f32.mrf.mxu0
        %v1893 = vpop.f32.mrf.mxu0
        %v1894 = vadd.f32 %v1730, %v1893
        %v1895 = vpop.f32.mrf.mxu0
        %1896 = vmatprep.mubr.bf16.mxu0 0
        %1897 = vmatmul.mubr.bf16.gmra.mxu0 %v1773
        %v1898 = vpop.f32.mrf.mxu0
        %v1899 = vadd.f32 %v1730, %v1898
        %v1900 = vpop.f32.mrf.mxu0
        %v1901 = vpop.f32.mrf.mxu0
        %v1902 = vadd.f32 %v1730, %v1901
        %v1903 = vpop.f32.mrf.mxu0
        %1904 = vmatprep.mubr.bf16.mxu0 0
        %1905 = vmatmul.mubr.bf16.gmra.mxu0 %v1776
        %v1906 = vpop.f32.mrf.mxu0
        %v1907 = vadd.f32 %v1730, %v1906
        %v1908 = vpop.f32.mrf.mxu0
        %v1909 = vpop.f32.mrf.mxu0
        %v1910 = vadd.f32 %v1730, %v1909
        %v1911 = vpop.f32.mrf.mxu0
        %1912 = vmatprep.mubr.bf16.mxu0 0
        %1913 = vmatmul.mubr.bf16.gmra.mxu0 %v1779
        %v1914 = vpop.f32.mrf.mxu0
        %v1915 = vadd.f32 %v1730, %v1914
        %v1916 = vpop.f32.mrf.mxu0
        %v1917 = vpop.f32.mrf.mxu0
        %v1918 = vadd.f32 %v1730, %v1917
        %v1919 = vpop.f32.mrf.mxu0
        %1920 = vmatprep.mubr.bf16.mxu0 0
        %1921 = vmatmul.mubr.bf16.gmra.mxu0 %v1782
        %v1922 = vpop.f32.mrf.mxu0
        %v1923 = vadd.f32 %v1730, %v1922
        %v1924 = vpop.f32.mrf.mxu0
        %v1925 = vpop.f32.mrf.mxu0
        %v1926 = vadd.f32 %v1730, %v1925
        %v1927 = vpop.f32.mrf.mxu0
        %1928 = vmatprep.mubr.bf16.mxu0 0
        %1929 = vmatmul.mubr.bf16.gmra.mxu0 %v1785
        %v1930 = vpop.f32.mrf.mxu0
        %v1931 = vadd.f32 %v1730, %v1930
        %v1932 = vpop.f32.mrf.mxu0
        %v1933 = vpop.f32.mrf.mxu0
        %v1934 = vadd.f32 %v1730, %v1933
        %v1935 = vpop.f32.mrf.mxu0
        %1936 = vmatprep.mubr.bf16.mxu0 0
        %1937 = vmatmul.mubr.bf16.gmra.mxu0 %v1788
        %v1938 = vpop.f32.mrf.mxu0
        %v1939 = vadd.f32 %v1730, %v1938
        %v1940 = vpop.f32.mrf.mxu0
        %v1941 = vpop.f32.mrf.mxu0
        %v1942 = vadd.f32 %v1730, %v1941
        %v1943 = vpop.f32.mrf.mxu0
        %1944 = vmatprep.mubr.bf16.mxu0 0
        %1945 = vmatmul.mubr.bf16.gmra.mxu0 %v1791
        %v1946 = vpop.f32.mrf.mxu0
        %v1947 = vadd.f32 %v1730, %v1946
        %v1948 = vpop.f32.mrf.mxu0
        %v1949 = vpop.f32.mrf.mxu0
        %v1950 = vadd.f32 %v1730, %v1949
        %v1951 = vpop.f32.mrf.mxu0
        %1952 = vmatprep.mubr.bf16.mxu0 0
        %1953 = vmatmul.mubr.bf16.gmra.mxu0 %v1794
        %v1954 = vpop.f32.mrf.mxu0
        %v1955 = vadd.f32 %v1730, %v1954
        %v1956 = vpop.f32.mrf.mxu0
        %v1957 = vpop.f32.mrf.mxu0
        %v1958 = vadd.f32 %v1730, %v1957
        %v1959 = vpop.f32.mrf.mxu0
        %1960 = vdwg.mxu0
        %v1961 = vmax.f32 %v1835, 0.0
        %v1962 = vmax.f32 %v1838, 0.0
        %v1963 = vmax.f32 %v1843, 0.0
        %v1964 = vmax.f32 %v1846, 0.0
        %v1965 = vmax.f32 %v1851, 0.0
        %v1966 = vmax.f32 %v1854, 0.0
        %v1967 = vmax.f32 %v1859, 0.0
        %v1968 = vmax.f32 %v1862, 0.0
        %v1969 = vmax.f32 %v1867, 0.0
        %v1970 = vmax.f32 %v1870, 0.0
        %v1971 = vmax.f32 %v1875, 0.0
        %v1972 = vmax.f32 %v1878, 0.0
        %v1973 = vmax.f32 %v1883, 0.0
        %v1974 = vmax.f32 %v1886, 0.0
        %v1975 = vmax.f32 %v1891, 0.0
        %v1976 = vmax.f32 %v1894, 0.0
        %v1977 = vmax.f32 %v1899, 0.0
        %v1978 = vmax.f32 %v1902, 0.0
        %v1979 = vmax.f32 %v1907, 0.0
        %v1980 = vmax.f32 %v1910, 0.0
        %v1981 = vmax.f32 %v1915, 0.0
        %v1982 = vmax.f32 %v1918, 0.0
        %v1983 = vmax.f32 %v1923, 0.0
        %v1984 = vmax.f32 %v1926, 0.0
        %v1985 = vmax.f32 %v1931, 0.0
        %v1986 = vmax.f32 %v1934, 0.0
        %v1987 = vmax.f32 %v1939, 0.0
        %v1988 = vmax.f32 %v1942, 0.0
        %v1989 = vmax.f32 %v1947, 0.0
        %v1990 = vmax.f32 %v1950, 0.0
        %v1991 = vmax.f32 %v1955, 0.0
        %v1992 = vmax.f32 %v1958, 0.0
        %1993 = vxpose.xlu0.b32.start [1/16] %v1961, 128
        %1994 = vxpose.xlu0.b32.cont [2/16] %v1962, 128
        %1995 = vxpose.xlu0.b32.cont [3/16] %v1963, 128
        %1996 = vxpose.xlu0.b32.cont [4/16] %v1964, 128
        %1997 = vxpose.xlu0.b32.cont [5/16] %v1965, 128
        %1998 = vxpose.xlu0.b32.cont [6/16] %v1966, 128
        %1999 = vxpose.xlu0.b32.cont [7/16] %v1967, 128
        %2000 = vxpose.xlu0.b32.cont [8/16] %v1968, 128
        %2001 = vxpose.xlu0.b32.cont [9/16] %v1969, 128
        %2002 = vxpose.xlu0.b32.cont [10/16] %v1970, 128
        %2003 = vxpose.xlu0.b32.cont [11/16] %v1971, 128
        %2004 = vxpose.xlu0.b32.cont [12/16] %v1972, 128
        %2005 = vxpose.xlu0.b32.cont [13/16] %v1973, 128
        %2006 = vxpose.xlu0.b32.cont [14/16] %v1974, 128
        %2007 = vxpose.xlu0.b32.cont [15/16] %v1975, 128
        %2008 = vxpose.xlu0.b32.end [16/16] %v1976, 128
        %v2009 = vpop.trf.xlu0
        %v2010 = vpop.trf.xlu0
        %v2011 = vpop.trf.xlu0
        %v2012 = vpop.trf.xlu0
        %v2013 = vpop.trf.xlu0
        %v2014 = vpop.trf.xlu0
        %v2015 = vpop.trf.xlu0
        %v2016 = vpop.trf.xlu0
        %v2017 = vpop.trf.xlu0
        %v2018 = vpop.trf.xlu0
        %v2019 = vpop.trf.xlu0
        %v2020 = vpop.trf.xlu0
        %v2021 = vpop.trf.xlu0
        %v2022 = vpop.trf.xlu0
        %v2023 = vpop.trf.xlu0
        %v2024 = vpop.trf.xlu0
        %2025 = vxpose.xlu0.b32.start [1/16] %v1977, 128
        %2026 = vxpose.xlu0.b32.cont [2/16] %v1978, 128
        %2027 = vxpose.xlu0.b32.cont [3/16] %v1979, 128
        %2028 = vxpose.xlu0.b32.cont [4/16] %v1980, 128
        %2029 = vxpose.xlu0.b32.cont [5/16] %v1981, 128
        %2030 = vxpose.xlu0.b32.cont [6/16] %v1982, 128
        %2031 = vxpose.xlu0.b32.cont [7/16] %v1983, 128
        %2032 = vxpose.xlu0.b32.cont [8/16] %v1984, 128
        %2033 = vxpose.xlu0.b32.cont [9/16] %v1985, 128
        %2034 = vxpose.xlu0.b32.cont [10/16] %v1986, 128
        %2035 = vxpose.xlu0.b32.cont [11/16] %v1987, 128
        %2036 = vxpose.xlu0.b32.cont [12/16] %v1988, 128
        %2037 = vxpose.xlu0.b32.cont [13/16] %v1989, 128
        %2038 = vxpose.xlu0.b32.cont [14/16] %v1990, 128
        %2039 = vxpose.xlu0.b32.cont [15/16] %v1991, 128
        %2040 = vxpose.xlu0.b32.end [16/16] %v1992, 128
        %v2041 = vpop.trf.xlu0
        %v2042 = vpop.trf.xlu0
        %v2043 = vpop.trf.xlu0
        %v2044 = vpop.trf.xlu0
        %v2045 = vpop.trf.xlu0
        %v2046 = vpop.trf.xlu0
        %v2047 = vpop.trf.xlu0
        %v2048 = vpop.trf.xlu0
        %v2049 = vpop.trf.xlu0
        %v2050 = vpop.trf.xlu0
        %v2051 = vpop.trf.xlu0
        %v2052 = vpop.trf.xlu0
        %v2053 = vpop.trf.xlu0
        %v2054 = vpop.trf.xlu0
        %v2055 = vpop.trf.xlu0
        %v2056 = vpop.trf.xlu0
        %v2057 = vmul.f32 %v2009, 0.25
        %v2058 = vmul.f32 %v2009, 0.75
        %v2059 = vadd.f32 %v2057, %v2058
        %v2061 = vcombine.high %v2059, %v2059
        %v2063 = vunpack.c.l.s4 1966171168
        %v2064 = vunpack.c.0.s8 %v2063
        %v2065 = vlaneseq
        %v2066 = vshrl.u32 %v2065, 7
        %v2067 = vsub.s32 %v2064, %v2066
        %v2068 = vrot.slane %v2059, %v2067
        %v2070 = vunpack.c.l.s4 1966171168
        %v2071 = vunpack.c.0.s8 %v2070
        %v2072 = vlaneseq
        %v2073 = vshrl.u32 %v2072, 7
        %v2074 = vsub.s32 %v2071, %v2073
        %v2075 = vrot.slane %v2061, %v2074
        %v2076 = vcombine.high %v2068, %v2068
        %v2077 = vcombine.high %v2075, %v2075
        %v2079 = vunpack.c.l.s4 1966171168
        %v2080 = vunpack.c.0.s8 %v2079
        %v2081 = vlaneseq
        %v2082 = vshrl.u32 %v2081, 7
        %v2083 = vsub.s32 %v2080, %v2082
        %v2084 = vrot.slane %v2068, %v2083
        %v2086 = vunpack.c.l.s4 1966171168
        %v2087 = vunpack.c.0.s8 %v2086
        %v2088 = vlaneseq
        %v2089 = vshrl.u32 %v2088, 7
        %v2090 = vsub.s32 %v2087, %v2089
        %v2091 = vrot.slane %v2075, %v2090
        %v2093 = vunpack.c.l.s4 1966171168
        %v2094 = vunpack.c.0.s8 %v2093
        %v2095 = vlaneseq
        %v2096 = vshrl.u32 %v2095, 7
        %v2097 = vsub.s32 %v2094, %v2096
        %v2098 = vrot.slane %v2076, %v2097
        %v2100 = vunpack.c.l.s4 1966171168
        %v2101 = vunpack.c.0.s8 %v2100
        %v2102 = vlaneseq
        %v2103 = vshrl.u32 %v2102, 7
        %v2104 = vsub.s32 %v2101, %v2103
        %v2105 = vrot.slane %v2077, %v2104
        %v2106 = vcombine.high %v2084, %v2084
        %v2107 = vcombine.high %v2091, %v2091
        %v2108 = vcombine.high %v2098, %v2098
        %v2109 = vcombine.high %v2105, %v2105
        %vm2118 = vcmask 122880
        %2119 = vst.msk [vmem:[#allocation4] sm:$0x1] %vm2118, %v2084
        %2120 = vst.msk [vmem:[#allocation4 + $0x20] sm:$0x1] %vm2118, %v2098
        %2121 = vst.msk [vmem:[#allocation4 + $0x40] sm:$0x1] %vm2118, %v2106
        %2122 = vst.msk [vmem:[#allocation4 + $0x60] sm:$0x1] %vm2118, %v2108
        %2123 = vst.msk [vmem:[#allocation4 + $0x80] sm:$0x1] %vm2118, %v2091
        %2124 = vst.msk [vmem:[#allocation4 + $0xa0] sm:$0x1] %vm2118, %v2105
        %2125 = vst.msk [vmem:[#allocation4 + $0xc0] sm:$0x1] %vm2118, %v2107
        %2126 = vst.msk [vmem:[#allocation4 + $0xe0] sm:$0x1] %vm2118, %v2109
        %2128 = vrot.lane.b32.xlu0 %v2057, 112
        %v2129 = vpop.permute.xlu0 %2128
        %v2131 = vadd.f32 %v2058, %v2129
        %v2133 = vcombine.high %v2131, %v2131
        %v2135 = vunpack.c.l.s4 1966171168
        %v2136 = vunpack.c.0.s8 %v2135
        %v2137 = vlaneseq
        %v2138 = vshrl.u32 %v2137, 7
        %v2139 = vsub.s32 %v2136, %v2138
        %v2140 = vrot.slane %v2131, %v2139
        %v2142 = vunpack.c.l.s4 1966171168
        %v2143 = vunpack.c.0.s8 %v2142
        %v2144 = vlaneseq
        %v2145 = vshrl.u32 %v2144, 7
        %v2146 = vsub.s32 %v2143, %v2145
        %v2147 = vrot.slane %v2133, %v2146
        %v2148 = vcombine.high %v2140, %v2140
        %v2149 = vcombine.high %v2147, %v2147
        %v2151 = vunpack.c.l.s4 1966171168
        %v2152 = vunpack.c.0.s8 %v2151
        %v2153 = vlaneseq
        %v2154 = vshrl.u32 %v2153, 7
        %v2155 = vsub.s32 %v2152, %v2154
        %v2156 = vrot.slane %v2140, %v2155
        %v2158 = vunpack.c.l.s4 1966171168
        %v2159 = vunpack.c.0.s8 %v2158
        %v2160 = vlaneseq
        %v2161 = vshrl.u32 %v2160, 7
        %v2162 = vsub.s32 %v2159, %v2161
        %v2163 = vrot.slane %v2147, %v2162
        %v2165 = vunpack.c.l.s4 1966171168
        %v2166 = vunpack.c.0.s8 %v2165
        %v2167 = vlaneseq
        %v2168 = vshrl.u32 %v2167, 7
        %v2169 = vsub.s32 %v2166, %v2168
        %v2170 = vrot.slane %v2148, %v2169
        %v2172 = vunpack.c.l.s4 1966171168
        %v2173 = vunpack.c.0.s8 %v2172
        %v2174 = vlaneseq
        %v2175 = vshrl.u32 %v2174, 7
        %v2176 = vsub.s32 %v2173, %v2175
        %v2177 = vrot.slane %v2149, %v2176
        %v2178 = vcombine.high %v2156, %v2156
        %v2179 = vcombine.high %v2163, %v2163
        %v2180 = vcombine.high %v2170, %v2170
        %v2181 = vcombine.high %v2177, %v2177
        %2190 = vst.msk [vmem:[#allocation4 + $0x1] sm:$0x1] %vm2118, %v2156
        %2191 = vst.msk [vmem:[#allocation4 + $0x21] sm:$0x1] %vm2118, %v2170
        %2192 = vst.msk [vmem:[#allocation4 + $0x41] sm:$0x1] %vm2118, %v2178
        %2193 = vst.msk [vmem:[#allocation4 + $0x61] sm:$0x1] %vm2118, %v2180
        %2194 = vst.msk [vmem:[#allocation4 + $0x81] sm:$0x1] %vm2118, %v2163
        %2195 = vst.msk [vmem:[#allocation4 + $0xa1] sm:$0x1] %vm2118, %v2177
        %2196 = vst.msk [vmem:[#allocation4 + $0xc1] sm:$0x1] %vm2118, %v2179
        %2197 = vst.msk [vmem:[#allocation4 + $0xe1] sm:$0x1] %vm2118, %v2181
        %2199 = vrot.lane.b32.xlu0 %v2058, 112
        %v2200 = vpop.permute.xlu0 %2199
        %v2202 = vadd.f32 %v2057, %v2200
        %v2204 = vcombine.high %v2202, %v2202
        %v2206 = vunpack.c.l.s4 1966171168
        %v2207 = vunpack.c.0.s8 %v2206
        %v2208 = vlaneseq
        %v2209 = vshrl.u32 %v2208, 7
        %v2210 = vsub.s32 %v2207, %v2209
        %v2211 = vrot.slane %v2202, %v2210
        %v2213 = vunpack.c.l.s4 1966171168
        %v2214 = vunpack.c.0.s8 %v2213
        %v2215 = vlaneseq
        %v2216 = vshrl.u32 %v2215, 7
        %v2217 = vsub.s32 %v2214, %v2216
        %v2218 = vrot.slane %v2204, %v2217
        %v2219 = vcombine.high %v2211, %v2211
        %v2220 = vcombine.high %v2218, %v2218
        %v2222 = vunpack.c.l.s4 1966171168
        %v2223 = vunpack.c.0.s8 %v2222
        %v2224 = vlaneseq
        %v2225 = vshrl.u32 %v2224, 7
        %v2226 = vsub.s32 %v2223, %v2225
        %v2227 = vrot.slane %v2211, %v2226
        %v2229 = vunpack.c.l.s4 1966171168
        %v2230 = vunpack.c.0.s8 %v2229
        %v2231 = vlaneseq
        %v2232 = vshrl.u32 %v2231, 7
        %v2233 = vsub.s32 %v2230, %v2232
        %v2234 = vrot.slane %v2218, %v2233
        %v2236 = vunpack.c.l.s4 1966171168
        %v2237 = vunpack.c.0.s8 %v2236
        %v2238 = vlaneseq
        %v2239 = vshrl.u32 %v2238, 7
        %v2240 = vsub.s32 %v2237, %v2239
        %v2241 = vrot.slane %v2219, %v2240
        %v2243 = vunpack.c.l.s4 1966171168
        %v2244 = vunpack.c.0.s8 %v2243
        %v2245 = vlaneseq
        %v2246 = vshrl.u32 %v2245, 7
        %v2247 = vsub.s32 %v2244, %v2246
        %v2248 = vrot.slane %v2220, %v2247
        %v2249 = vcombine.high %v2227, %v2227
        %v2250 = vcombine.high %v2234, %v2234
        %v2251 = vcombine.high %v2241, %v2241
        %v2252 = vcombine.high %v2248, %v2248
        %2261 = vst.msk [vmem:[#allocation4 + $0x2] sm:$0x1] %vm2118, %v2227
        %2262 = vst.msk [vmem:[#allocation4 + $0x22] sm:$0x1] %vm2118, %v2241
        %2263 = vst.msk [vmem:[#allocation4 + $0x42] sm:$0x1] %vm2118, %v2249
        %2264 = vst.msk [vmem:[#allocation4 + $0x62] sm:$0x1] %vm2118, %v2251
        %2265 = vst.msk [vmem:[#allocation4 + $0x82] sm:$0x1] %vm2118, %v2234
        %2266 = vst.msk [vmem:[#allocation4 + $0xa2] sm:$0x1] %vm2118, %v2248
        %2267 = vst.msk [vmem:[#allocation4 + $0xc2] sm:$0x1] %vm2118, %v2250
        %2268 = vst.msk [vmem:[#allocation4 + $0xe2] sm:$0x1] %vm2118, %v2252
        %v2269 = vlaneseq
        %v2270 = vshrl.u32 %v2269, 7
        %v2271 = vsub.s32 0, %v2270
        %v2272 = vrot.slane %v2156, %v2271
        %v2273 = vlaneseq
        %v2274 = vshrl.u32 %v2273, 7
        %v2275 = vsub.s32 0, %v2274
        %v2276 = vrot.slane %v2170, %v2275
        %v2277 = vlaneseq
        %v2278 = vshrl.u32 %v2277, 7
        %v2279 = vsub.s32 0, %v2278
        %v2280 = vrot.slane %v2178, %v2279
        %v2281 = vlaneseq
        %v2282 = vshrl.u32 %v2281, 7
        %v2283 = vsub.s32 0, %v2282
        %v2284 = vrot.slane %v2180, %v2283
        %v2285 = vlaneseq
        %v2286 = vshrl.u32 %v2285, 7
        %v2287 = vsub.s32 0, %v2286
        %v2288 = vrot.slane %v2163, %v2287
        %v2289 = vlaneseq
        %v2290 = vshrl.u32 %v2289, 7
        %v2291 = vsub.s32 0, %v2290
        %v2292 = vrot.slane %v2177, %v2291
        %v2293 = vlaneseq
        %v2294 = vshrl.u32 %v2293, 7
        %v2295 = vsub.s32 0, %v2294
        %v2296 = vrot.slane %v2179, %v2295
        %v2297 = vlaneseq
        %v2298 = vshrl.u32 %v2297, 7
        %v2299 = vsub.s32 0, %v2298
        %v2300 = vrot.slane %v2181, %v2299
        %2301 = vrot.lane.b32.xlu0 %v2272, 112
        %v2302 = vpop.permute.xlu0 %2301
        %2303 = vrot.lane.b32.xlu0 %v2276, 112
        %v2304 = vpop.permute.xlu0 %2303
        %2305 = vrot.lane.b32.xlu0 %v2280, 112
        %v2306 = vpop.permute.xlu0 %2305
        %2307 = vrot.lane.b32.xlu0 %v2284, 112
        %v2308 = vpop.permute.xlu0 %2307
        %2309 = vrot.lane.b32.xlu0 %v2288, 112
        %v2310 = vpop.permute.xlu0 %2309
        %2311 = vrot.lane.b32.xlu0 %v2292, 112
        %v2312 = vpop.permute.xlu0 %2311
        %2313 = vrot.lane.b32.xlu0 %v2296, 112
        %v2314 = vpop.permute.xlu0 %2313
        %2315 = vrot.lane.b32.xlu0 %v2300, 112
        %v2316 = vpop.permute.xlu0 %2315
        %2325 = vst.msk [vmem:[#allocation4 + $0x3] sm:$0x1] %vm2118, %v2302
        %2326 = vst.msk [vmem:[#allocation4 + $0x23] sm:$0x1] %vm2118, %v2304
        %2327 = vst.msk [vmem:[#allocation4 + $0x43] sm:$0x1] %vm2118, %v2306
        %2328 = vst.msk [vmem:[#allocation4 + $0x63] sm:$0x1] %vm2118, %v2308
        %2329 = vst.msk [vmem:[#allocation4 + $0x83] sm:$0x1] %vm2118, %v2310
        %2330 = vst.msk [vmem:[#allocation4 + $0xa3] sm:$0x1] %vm2118, %v2312
        %2331 = vst.msk [vmem:[#allocation4 + $0xc3] sm:$0x1] %vm2118, %v2314
        %2332 = vst.msk [vmem:[#allocation4 + $0xe3] sm:$0x1] %vm2118, %v2316
        %v2333 = vlaneseq
        %v2334 = vshrl.u32 %v2333, 7
        %v2335 = vsub.s32 0, %v2334
        %v2336 = vrot.slane %v2227, %v2335
        %v2337 = vlaneseq
        %v2338 = vshrl.u32 %v2337, 7
        %v2339 = vsub.s32 0, %v2338
        %v2340 = vrot.slane %v2241, %v2339
        %v2341 = vlaneseq
        %v2342 = vshrl.u32 %v2341, 7
        %v2343 = vsub.s32 0, %v2342
        %v2344 = vrot.slane %v2249, %v2343
        %v2345 = vlaneseq
        %v2346 = vshrl.u32 %v2345, 7
        %v2347 = vsub.s32 0, %v2346
        %v2348 = vrot.slane %v2251, %v2347
        %v2349 = vlaneseq
        %v2350 = vshrl.u32 %v2349, 7
        %v2351 = vsub.s32 0, %v2350
        %v2352 = vrot.slane %v2234, %v2351
        %v2353 = vlaneseq
        %v2354 = vshrl.u32 %v2353, 7
        %v2355 = vsub.s32 0, %v2354
        %v2356 = vrot.slane %v2248, %v2355
        %v2357 = vlaneseq
        %v2358 = vshrl.u32 %v2357, 7
        %v2359 = vsub.s32 0, %v2358
        %v2360 = vrot.slane %v2250, %v2359
        %v2361 = vlaneseq
        %v2362 = vshrl.u32 %v2361, 7
        %v2363 = vsub.s32 0, %v2362
        %v2364 = vrot.slane %v2252, %v2363
        %2365 = vrot.lane.b32.xlu0 %v2336, 112
        %v2366 = vpop.permute.xlu0 %2365
        %2367 = vrot.lane.b32.xlu0 %v2340, 112
        %v2368 = vpop.permute.xlu0 %2367
        %2369 = vrot.lane.b32.xlu0 %v2344, 112
        %v2370 = vpop.permute.xlu0 %2369
        %2371 = vrot.lane.b32.xlu0 %v2348, 112
        %v2372 = vpop.permute.xlu0 %2371
        %2373 = vrot.lane.b32.xlu0 %v2352, 112
        %v2374 = vpop.permute.xlu0 %2373
        %2375 = vrot.lane.b32.xlu0 %v2356, 112
        %v2376 = vpop.permute.xlu0 %2375
        %2377 = vrot.lane.b32.xlu0 %v2360, 112
        %v2378 = vpop.permute.xlu0 %2377
        %2379 = vrot.lane.b32.xlu0 %v2364, 112
        %v2380 = vpop.permute.xlu0 %2379
        %2389 = vst.msk [vmem:[#allocation4 + $0x4] sm:$0x1] %vm2118, %v2366
        %2390 = vst.msk [vmem:[#allocation4 + $0x24] sm:$0x1] %vm2118, %v2368
        %2391 = vst.msk [vmem:[#allocation4 + $0x44] sm:$0x1] %vm2118, %v2370
        %2392 = vst.msk [vmem:[#allocation4 + $0x64] sm:$0x1] %vm2118, %v2372
        %2393 = vst.msk [vmem:[#allocation4 + $0x84] sm:$0x1] %vm2118, %v2374
        %2394 = vst.msk [vmem:[#allocation4 + $0xa4] sm:$0x1] %vm2118, %v2376
        %2395 = vst.msk [vmem:[#allocation4 + $0xc4] sm:$0x1] %vm2118, %v2378
        %2396 = vst.msk [vmem:[#allocation4 + $0xe4] sm:$0x1] %vm2118, %v2380
        %2397 = vrot.lane.b32.xlu0 %v2272, 96
        %v2398 = vpop.permute.xlu0 %2397
        %2399 = vrot.lane.b32.xlu0 %v2276, 96
        %v2400 = vpop.permute.xlu0 %2399
        %2401 = vrot.lane.b32.xlu0 %v2280, 96
        %v2402 = vpop.permute.xlu0 %2401
        %2403 = vrot.lane.b32.xlu0 %v2284, 96
        %v2404 = vpop.permute.xlu0 %2403
        %2405 = vrot.lane.b32.xlu0 %v2288, 96
        %v2406 = vpop.permute.xlu0 %2405
        %2407 = vrot.lane.b32.xlu0 %v2292, 96
        %v2408 = vpop.permute.xlu0 %2407
        %2409 = vrot.lane.b32.xlu0 %v2296, 96
        %v2410 = vpop.permute.xlu0 %2409
        %2411 = vrot.lane.b32.xlu0 %v2300, 96
        %v2412 = vpop.permute.xlu0 %2411
        %2421 = vst.msk [vmem:[#allocation4 + $0x5] sm:$0x1] %vm2118, %v2398
        %2422 = vst.msk [vmem:[#allocation4 + $0x25] sm:$0x1] %vm2118, %v2400
        %2423 = vst.msk [vmem:[#allocation4 + $0x45] sm:$0x1] %vm2118, %v2402
        %2424 = vst.msk [vmem:[#allocation4 + $0x65] sm:$0x1] %vm2118, %v2404
        %2425 = vst.msk [vmem:[#allocation4 + $0x85] sm:$0x1] %vm2118, %v2406
        %2426 = vst.msk [vmem:[#allocation4 + $0xa5] sm:$0x1] %vm2118, %v2408
        %2427 = vst.msk [vmem:[#allocation4 + $0xc5] sm:$0x1] %vm2118, %v2410
        %2428 = vst.msk [vmem:[#allocation4 + $0xe5] sm:$0x1] %vm2118, %v2412
        %2429 = vrot.lane.b32.xlu0 %v2336, 96
        %v2430 = vpop.permute.xlu0 %2429
        %2431 = vrot.lane.b32.xlu0 %v2340, 96
        %v2432 = vpop.permute.xlu0 %2431
        %2433 = vrot.lane.b32.xlu0 %v2344, 96
        %v2434 = vpop.permute.xlu0 %2433
        %2435 = vrot.lane.b32.xlu0 %v2348, 96
        %v2436 = vpop.permute.xlu0 %2435
        %2437 = vrot.lane.b32.xlu0 %v2352, 96
        %v2438 = vpop.permute.xlu0 %2437
        %2439 = vrot.lane.b32.xlu0 %v2356, 96
        %v2440 = vpop.permute.xlu0 %2439
        %2441 = vrot.lane.b32.xlu0 %v2360, 96
        %v2442 = vpop.permute.xlu0 %2441
        %2443 = vrot.lane.b32.xlu0 %v2364, 96
        %v2444 = vpop.permute.xlu0 %2443
        %2453 = vst.msk [vmem:[#allocation4 + $0x6] sm:$0x1] %vm2118, %v2430
        %2454 = vst.msk [vmem:[#allocation4 + $0x26] sm:$0x1] %vm2118, %v2432
        %2455 = vst.msk [vmem:[#allocation4 + $0x46] sm:$0x1] %vm2118, %v2434
        %2456 = vst.msk [vmem:[#allocation4 + $0x66] sm:$0x1] %vm2118, %v2436
        %2457 = vst.msk [vmem:[#allocation4 + $0x86] sm:$0x1] %vm2118, %v2438
        %2458 = vst.msk [vmem:[#allocation4 + $0xa6] sm:$0x1] %vm2118, %v2440
        %2459 = vst.msk [vmem:[#allocation4 + $0xc6] sm:$0x1] %vm2118, %v2442
        %2460 = vst.msk [vmem:[#allocation4 + $0xe6] sm:$0x1] %vm2118, %v2444
        %2461 = vrot.lane.b32.xlu0 %v2272, 80
        %v2462 = vpop.permute.xlu0 %2461
        %2463 = vrot.lane.b32.xlu0 %v2276, 80
        %v2464 = vpop.permute.xlu0 %2463
        %2465 = vrot.lane.b32.xlu0 %v2280, 80
        %v2466 = vpop.permute.xlu0 %2465
        %2467 = vrot.lane.b32.xlu0 %v2284, 80
        %v2468 = vpop.permute.xlu0 %2467
        %2469 = vrot.lane.b32.xlu0 %v2288, 80
        %v2470 = vpop.permute.xlu0 %2469
        %2471 = vrot.lane.b32.xlu0 %v2292, 80
        %v2472 = vpop.permute.xlu0 %2471
        %2473 = vrot.lane.b32.xlu0 %v2296, 80
        %v2474 = vpop.permute.xlu0 %2473
        %2475 = vrot.lane.b32.xlu0 %v2300, 80
        %v2476 = vpop.permute.xlu0 %2475
        %2485 = vst.msk [vmem:[#allocation4 + $0x7] sm:$0x1] %vm2118, %v2462
        %2486 = vst.msk [vmem:[#allocation4 + $0x27] sm:$0x1] %vm2118, %v2464
        %2487 = vst.msk [vmem:[#allocation4 + $0x47] sm:$0x1] %vm2118, %v2466
        %2488 = vst.msk [vmem:[#allocation4 + $0x67] sm:$0x1] %vm2118, %v2468
        %2489 = vst.msk [vmem:[#allocation4 + $0x87] sm:$0x1] %vm2118, %v2470
        %2490 = vst.msk [vmem:[#allocation4 + $0xa7] sm:$0x1] %vm2118, %v2472
        %2491 = vst.msk [vmem:[#allocation4 + $0xc7] sm:$0x1] %vm2118, %v2474
        %2492 = vst.msk [vmem:[#allocation4 + $0xe7] sm:$0x1] %vm2118, %v2476
        %2493 = vrot.lane.b32.xlu0 %v2336, 80
        %v2494 = vpop.permute.xlu0 %2493
        %2495 = vrot.lane.b32.xlu0 %v2340, 80
        %v2496 = vpop.permute.xlu0 %2495
        %2497 = vrot.lane.b32.xlu0 %v2344, 80
        %v2498 = vpop.permute.xlu0 %2497
        %2499 = vrot.lane.b32.xlu0 %v2348, 80
        %v2500 = vpop.permute.xlu0 %2499
        %2501 = vrot.lane.b32.xlu0 %v2352, 80
        %v2502 = vpop.permute.xlu0 %2501
        %2503 = vrot.lane.b32.xlu0 %v2356, 80
        %v2504 = vpop.permute.xlu0 %2503
        %2505 = vrot.lane.b32.xlu0 %v2360, 80
        %v2506 = vpop.permute.xlu0 %2505
        %2507 = vrot.lane.b32.xlu0 %v2364, 80
        %v2508 = vpop.permute.xlu0 %2507
        %2517 = vst.msk [vmem:[#allocation4 + $0x8] sm:$0x1] %vm2118, %v2494
        %2518 = vst.msk [vmem:[#allocation4 + $0x28] sm:$0x1] %vm2118, %v2496
        %2519 = vst.msk [vmem:[#allocation4 + $0x48] sm:$0x1] %vm2118, %v2498
        %2520 = vst.msk [vmem:[#allocation4 + $0x68] sm:$0x1] %vm2118, %v2500
        %2521 = vst.msk [vmem:[#allocation4 + $0x88] sm:$0x1] %vm2118, %v2502
        %2522 = vst.msk [vmem:[#allocation4 + $0xa8] sm:$0x1] %vm2118, %v2504
        %2523 = vst.msk [vmem:[#allocation4 + $0xc8] sm:$0x1] %vm2118, %v2506
        %2524 = vst.msk [vmem:[#allocation4 + $0xe8] sm:$0x1] %vm2118, %v2508
        %2525 = vrot.lane.b32.xlu0 %v2272, 64
        %v2526 = vpop.permute.xlu0 %2525
        %2527 = vrot.lane.b32.xlu0 %v2276, 64
        %v2528 = vpop.permute.xlu0 %2527
        %2529 = vrot.lane.b32.xlu0 %v2280, 64
        %v2530 = vpop.permute.xlu0 %2529
        %2531 = vrot.lane.b32.xlu0 %v2284, 64
        %v2532 = vpop.permute.xlu0 %2531
        %2533 = vrot.lane.b32.xlu0 %v2288, 64
        %v2534 = vpop.permute.xlu0 %2533
        %2535 = vrot.lane.b32.xlu0 %v2292, 64
        %v2536 = vpop.permute.xlu0 %2535
        %2537 = vrot.lane.b32.xlu0 %v2296, 64
        %v2538 = vpop.permute.xlu0 %2537
        %2539 = vrot.lane.b32.xlu0 %v2300, 64
        %v2540 = vpop.permute.xlu0 %2539
        %2549 = vst.msk [vmem:[#allocation4 + $0x9] sm:$0x1] %vm2118, %v2526
        %2550 = vst.msk [vmem:[#allocation4 + $0x29] sm:$0x1] %vm2118, %v2528
        %2551 = vst.msk [vmem:[#allocation4 + $0x49] sm:$0x1] %vm2118, %v2530
        %2552 = vst.msk [vmem:[#allocation4 + $0x69] sm:$0x1] %vm2118, %v2532
        %2553 = vst.msk [vmem:[#allocation4 + $0x89] sm:$0x1] %vm2118, %v2534
        %2554 = vst.msk [vmem:[#allocation4 + $0xa9] sm:$0x1] %vm2118, %v2536
        %2555 = vst.msk [vmem:[#allocation4 + $0xc9] sm:$0x1] %vm2118, %v2538
        %2556 = vst.msk [vmem:[#allocation4 + $0xe9] sm:$0x1] %vm2118, %v2540
        %2557 = vrot.lane.b32.xlu0 %v2336, 64
        %v2558 = vpop.permute.xlu0 %2557
        %2559 = vrot.lane.b32.xlu0 %v2340, 64
        %v2560 = vpop.permute.xlu0 %2559
        %2561 = vrot.lane.b32.xlu0 %v2344, 64
        %v2562 = vpop.permute.xlu0 %2561
        %2563 = vrot.lane.b32.xlu0 %v2348, 64
        %v2564 = vpop.permute.xlu0 %2563
        %2565 = vrot.lane.b32.xlu0 %v2352, 64
        %v2566 = vpop.permute.xlu0 %2565
        %2567 = vrot.lane.b32.xlu0 %v2356, 64
        %v2568 = vpop.permute.xlu0 %2567
        %2569 = vrot.lane.b32.xlu0 %v2360, 64
        %v2570 = vpop.permute.xlu0 %2569
        %2571 = vrot.lane.b32.xlu0 %v2364, 64
        %v2572 = vpop.permute.xlu0 %2571
        %2581 = vst.msk [vmem:[#allocation4 + $0xa] sm:$0x1] %vm2118, %v2558
        %2582 = vst.msk [vmem:[#allocation4 + $0x2a] sm:$0x1] %vm2118, %v2560
        %2583 = vst.msk [vmem:[#allocation4 + $0x4a] sm:$0x1] %vm2118, %v2562
        %2584 = vst.msk [vmem:[#allocation4 + $0x6a] sm:$0x1] %vm2118, %v2564
        %2585 = vst.msk [vmem:[#allocation4 + $0x8a] sm:$0x1] %vm2118, %v2566
        %2586 = vst.msk [vmem:[#allocation4 + $0xaa] sm:$0x1] %vm2118, %v2568
        %2587 = vst.msk [vmem:[#allocation4 + $0xca] sm:$0x1] %vm2118, %v2570
        %2588 = vst.msk [vmem:[#allocation4 + $0xea] sm:$0x1] %vm2118, %v2572
        %2589 = vrot.lane.b32.xlu0 %v2272, 48
        %v2590 = vpop.permute.xlu0 %2589
        %2591 = vrot.lane.b32.xlu0 %v2276, 48
        %v2592 = vpop.permute.xlu0 %2591
        %2593 = vrot.lane.b32.xlu0 %v2280, 48
        %v2594 = vpop.permute.xlu0 %2593
        %2595 = vrot.lane.b32.xlu0 %v2284, 48
        %v2596 = vpop.permute.xlu0 %2595
        %2597 = vrot.lane.b32.xlu0 %v2288, 48
        %v2598 = vpop.permute.xlu0 %2597
        %2599 = vrot.lane.b32.xlu0 %v2292, 48
        %v2600 = vpop.permute.xlu0 %2599
        %2601 = vrot.lane.b32.xlu0 %v2296, 48
        %v2602 = vpop.permute.xlu0 %2601
        %2603 = vrot.lane.b32.xlu0 %v2300, 48
        %v2604 = vpop.permute.xlu0 %2603
        %2613 = vst.msk [vmem:[#allocation4 + $0xb] sm:$0x1] %vm2118, %v2590
        %2614 = vst.msk [vmem:[#allocation4 + $0x2b] sm:$0x1] %vm2118, %v2592
        %2615 = vst.msk [vmem:[#allocation4 + $0x4b] sm:$0x1] %vm2118, %v2594
        %2616 = vst.msk [vmem:[#allocation4 + $0x6b] sm:$0x1] %vm2118, %v2596
        %2617 = vst.msk [vmem:[#allocation4 + $0x8b] sm:$0x1] %vm2118, %v2598
        %2618 = vst.msk [vmem:[#allocation4 + $0xab] sm:$0x1] %vm2118, %v2600
        %2619 = vst.msk [vmem:[#allocation4 + $0xcb] sm:$0x1] %vm2118, %v2602
        %2620 = vst.msk [vmem:[#allocation4 + $0xeb] sm:$0x1] %vm2118, %v2604
        %2621 = vrot.lane.b32.xlu0 %v2336, 48
        %v2622 = vpop.permute.xlu0 %2621
        %2623 = vrot.lane.b32.xlu0 %v2340, 48
        %v2624 = vpop.permute.xlu0 %2623
        %2625 = vrot.lane.b32.xlu0 %v2344, 48
        %v2626 = vpop.permute.xlu0 %2625
        %2627 = vrot.lane.b32.xlu0 %v2348, 48
        %v2628 = vpop.permute.xlu0 %2627
        %2629 = vrot.lane.b32.xlu0 %v2352, 48
        %v2630 = vpop.permute.xlu0 %2629
        %2631 = vrot.lane.b32.xlu0 %v2356, 48
        %v2632 = vpop.permute.xlu0 %2631
        %2633 = vrot.lane.b32.xlu0 %v2360, 48
        %v2634 = vpop.permute.xlu0 %2633
        %2635 = vrot.lane.b32.xlu0 %v2364, 48
        %v2636 = vpop.permute.xlu0 %2635
        %2645 = vst.msk [vmem:[#allocation4 + $0xc] sm:$0x1] %vm2118, %v2622
        %2646 = vst.msk [vmem:[#allocation4 + $0x2c] sm:$0x1] %vm2118, %v2624
        %2647 = vst.msk [vmem:[#allocation4 + $0x4c] sm:$0x1] %vm2118, %v2626
        %2648 = vst.msk [vmem:[#allocation4 + $0x6c] sm:$0x1] %vm2118, %v2628
        %2649 = vst.msk [vmem:[#allocation4 + $0x8c] sm:$0x1] %vm2118, %v2630
        %2650 = vst.msk [vmem:[#allocation4 + $0xac] sm:$0x1] %vm2118, %v2632
        %2651 = vst.msk [vmem:[#allocation4 + $0xcc] sm:$0x1] %vm2118, %v2634
        %2652 = vst.msk [vmem:[#allocation4 + $0xec] sm:$0x1] %vm2118, %v2636
        %2653 = vrot.lane.b32.xlu0 %v2272, 32
        %v2654 = vpop.permute.xlu0 %2653
        %2655 = vrot.lane.b32.xlu0 %v2276, 32
        %v2656 = vpop.permute.xlu0 %2655
        %2657 = vrot.lane.b32.xlu0 %v2280, 32
        %v2658 = vpop.permute.xlu0 %2657
        %2659 = vrot.lane.b32.xlu0 %v2284, 32
        %v2660 = vpop.permute.xlu0 %2659
        %2661 = vrot.lane.b32.xlu0 %v2288, 32
        %v2662 = vpop.permute.xlu0 %2661
        %2663 = vrot.lane.b32.xlu0 %v2292, 32
        %v2664 = vpop.permute.xlu0 %2663
        %2665 = vrot.lane.b32.xlu0 %v2296, 32
        %v2666 = vpop.permute.xlu0 %2665
        %2667 = vrot.lane.b32.xlu0 %v2300, 32
        %v2668 = vpop.permute.xlu0 %2667
        %2677 = vst.msk [vmem:[#allocation4 + $0xd] sm:$0x1] %vm2118, %v2654
        %2678 = vst.msk [vmem:[#allocation4 + $0x2d] sm:$0x1] %vm2118, %v2656
        %2679 = vst.msk [vmem:[#allocation4 + $0x4d] sm:$0x1] %vm2118, %v2658
        %2680 = vst.msk [vmem:[#allocation4 + $0x6d] sm:$0x1] %vm2118, %v2660
        %2681 = vst.msk [vmem:[#allocation4 + $0x8d] sm:$0x1] %vm2118, %v2662
        %2682 = vst.msk [vmem:[#allocation4 + $0xad] sm:$0x1] %vm2118, %v2664
        %2683 = vst.msk [vmem:[#allocation4 + $0xcd] sm:$0x1] %vm2118, %v2666
        %2684 = vst.msk [vmem:[#allocation4 + $0xed] sm:$0x1] %vm2118, %v2668
        %2685 = vrot.lane.b32.xlu0 %v2336, 32
        %v2686 = vpop.permute.xlu0 %2685
        %2687 = vrot.lane.b32.xlu0 %v2340, 32
        %v2688 = vpop.permute.xlu0 %2687
        %2689 = vrot.lane.b32.xlu0 %v2344, 32
        %v2690 = vpop.permute.xlu0 %2689
        %2691 = vrot.lane.b32.xlu0 %v2348, 32
        %v2692 = vpop.permute.xlu0 %2691
        %2693 = vrot.lane.b32.xlu0 %v2352, 32
        %v2694 = vpop.permute.xlu0 %2693
        %2695 = vrot.lane.b32.xlu0 %v2356, 32
        %v2696 = vpop.permute.xlu0 %2695
        %2697 = vrot.lane.b32.xlu0 %v2360, 32
        %v2698 = vpop.permute.xlu0 %2697
        %2699 = vrot.lane.b32.xlu0 %v2364, 32
        %v2700 = vpop.permute.xlu0 %2699
        %2709 = vst.msk [vmem:[#allocation4 + $0xe] sm:$0x1] %vm2118, %v2686
        %2710 = vst.msk [vmem:[#allocation4 + $0x2e] sm:$0x1] %vm2118, %v2688
        %2711 = vst.msk [vmem:[#allocation4 + $0x4e] sm:$0x1] %vm2118, %v2690
        %2712 = vst.msk [vmem:[#allocation4 + $0x6e] sm:$0x1] %vm2118, %v2692
        %2713 = vst.msk [vmem:[#allocation4 + $0x8e] sm:$0x1] %vm2118, %v2694
        %2714 = vst.msk [vmem:[#allocation4 + $0xae] sm:$0x1] %vm2118, %v2696
        %2715 = vst.msk [vmem:[#allocation4 + $0xce] sm:$0x1] %vm2118, %v2698
        %2716 = vst.msk [vmem:[#allocation4 + $0xee] sm:$0x1] %vm2118, %v2700
        %v2717 = vmul.f32 %v2041, 0.25
        %2719 = vrot.lane.b32.xlu0 %v2717, 112
        %v2720 = vpop.permute.xlu0 %2719
        %v2722 = vadd.f32 %v2058, %v2720
        %v2724 = vcombine.high %v2722, %v2722
        %v2726 = vunpack.c.l.s4 1966171168
        %v2727 = vunpack.c.0.s8 %v2726
        %v2728 = vlaneseq
        %v2729 = vshrl.u32 %v2728, 7
        %v2730 = vsub.s32 %v2727, %v2729
        %v2731 = vrot.slane %v2722, %v2730
        %v2733 = vunpack.c.l.s4 1966171168
        %v2734 = vunpack.c.0.s8 %v2733
        %v2735 = vlaneseq
        %v2736 = vshrl.u32 %v2735, 7
        %v2737 = vsub.s32 %v2734, %v2736
        %v2738 = vrot.slane %v2724, %v2737
        %v2739 = vcombine.high %v2731, %v2731
        %v2740 = vcombine.high %v2738, %v2738
        %v2742 = vunpack.c.l.s4 1966171168
        %v2743 = vunpack.c.0.s8 %v2742
        %v2744 = vlaneseq
        %v2745 = vshrl.u32 %v2744, 7
        %v2746 = vsub.s32 %v2743, %v2745
        %v2747 = vrot.slane %v2731, %v2746
        %v2749 = vunpack.c.l.s4 1966171168
        %v2750 = vunpack.c.0.s8 %v2749
        %v2751 = vlaneseq
        %v2752 = vshrl.u32 %v2751, 7
        %v2753 = vsub.s32 %v2750, %v2752
        %v2754 = vrot.slane %v2738, %v2753
        %v2756 = vunpack.c.l.s4 1966171168
        %v2757 = vunpack.c.0.s8 %v2756
        %v2758 = vlaneseq
        %v2759 = vshrl.u32 %v2758, 7
        %v2760 = vsub.s32 %v2757, %v2759
        %v2761 = vrot.slane %v2739, %v2760
        %v2763 = vunpack.c.l.s4 1966171168
        %v2764 = vunpack.c.0.s8 %v2763
        %v2765 = vlaneseq
        %v2766 = vshrl.u32 %v2765, 7
        %v2767 = vsub.s32 %v2764, %v2766
        %v2768 = vrot.slane %v2740, %v2767
        %v2769 = vcombine.high %v2747, %v2747
        %v2770 = vcombine.high %v2754, %v2754
        %v2771 = vcombine.high %v2761, %v2761
        %v2772 = vcombine.high %v2768, %v2768
        %v2773 = vlaneseq
        %v2774 = vshrl.u32 %v2773, 7
        %v2775 = vsub.s32 0, %v2774
        %v2776 = vrot.slane %v2747, %v2775
        %v2777 = vlaneseq
        %v2778 = vshrl.u32 %v2777, 7
        %v2779 = vsub.s32 0, %v2778
        %v2780 = vrot.slane %v2761, %v2779
        %v2781 = vlaneseq
        %v2782 = vshrl.u32 %v2781, 7
        %v2783 = vsub.s32 0, %v2782
        %v2784 = vrot.slane %v2769, %v2783
        %v2785 = vlaneseq
        %v2786 = vshrl.u32 %v2785, 7
        %v2787 = vsub.s32 0, %v2786
        %v2788 = vrot.slane %v2771, %v2787
        %v2789 = vlaneseq
        %v2790 = vshrl.u32 %v2789, 7
        %v2791 = vsub.s32 0, %v2790
        %v2792 = vrot.slane %v2754, %v2791
        %v2793 = vlaneseq
        %v2794 = vshrl.u32 %v2793, 7
        %v2795 = vsub.s32 0, %v2794
        %v2796 = vrot.slane %v2768, %v2795
        %v2797 = vlaneseq
        %v2798 = vshrl.u32 %v2797, 7
        %v2799 = vsub.s32 0, %v2798
        %v2800 = vrot.slane %v2770, %v2799
        %v2801 = vlaneseq
        %v2802 = vshrl.u32 %v2801, 7
        %v2803 = vsub.s32 0, %v2802
        %v2804 = vrot.slane %v2772, %v2803
        %2805 = vrot.lane.b32.xlu0 %v2776, 16
        %v2806 = vpop.permute.xlu0 %2805
        %2807 = vrot.lane.b32.xlu0 %v2780, 16
        %v2808 = vpop.permute.xlu0 %2807
        %2809 = vrot.lane.b32.xlu0 %v2784, 16
        %v2810 = vpop.permute.xlu0 %2809
        %2811 = vrot.lane.b32.xlu0 %v2788, 16
        %v2812 = vpop.permute.xlu0 %2811
        %2813 = vrot.lane.b32.xlu0 %v2792, 16
        %v2814 = vpop.permute.xlu0 %2813
        %2815 = vrot.lane.b32.xlu0 %v2796, 16
        %v2816 = vpop.permute.xlu0 %2815
        %2817 = vrot.lane.b32.xlu0 %v2800, 16
        %v2818 = vpop.permute.xlu0 %2817
        %2819 = vrot.lane.b32.xlu0 %v2804, 16
        %v2820 = vpop.permute.xlu0 %2819
        %2829 = vst.msk [vmem:[#allocation4 + $0xf] sm:$0x1] %vm2118, %v2806
        %2830 = vst.msk [vmem:[#allocation4 + $0x2f] sm:$0x1] %vm2118, %v2808
        %2831 = vst.msk [vmem:[#allocation4 + $0x4f] sm:$0x1] %vm2118, %v2810
        %2832 = vst.msk [vmem:[#allocation4 + $0x6f] sm:$0x1] %vm2118, %v2812
        %2833 = vst.msk [vmem:[#allocation4 + $0x8f] sm:$0x1] %vm2118, %v2814
        %2834 = vst.msk [vmem:[#allocation4 + $0xaf] sm:$0x1] %vm2118, %v2816
        %2835 = vst.msk [vmem:[#allocation4 + $0xcf] sm:$0x1] %vm2118, %v2818
        %2836 = vst.msk [vmem:[#allocation4 + $0xef] sm:$0x1] %vm2118, %v2820
        %v2837 = vmul.f32 %v2041, 0.75
        %2839 = vrot.lane.b32.xlu0 %v2837, 112
        %v2840 = vpop.permute.xlu0 %2839
        %v2842 = vadd.f32 %v2057, %v2840
        %v2844 = vcombine.high %v2842, %v2842
        %v2846 = vunpack.c.l.s4 1966171168
        %v2847 = vunpack.c.0.s8 %v2846
        %v2848 = vlaneseq
        %v2849 = vshrl.u32 %v2848, 7
        %v2850 = vsub.s32 %v2847, %v2849
        %v2851 = vrot.slane %v2842, %v2850
        %v2853 = vunpack.c.l.s4 1966171168
        %v2854 = vunpack.c.0.s8 %v2853
        %v2855 = vlaneseq
        %v2856 = vshrl.u32 %v2855, 7
        %v2857 = vsub.s32 %v2854, %v2856
        %v2858 = vrot.slane %v2844, %v2857
        %v2859 = vcombine.high %v2851, %v2851
        %v2860 = vcombine.high %v2858, %v2858
        %v2862 = vunpack.c.l.s4 1966171168
        %v2863 = vunpack.c.0.s8 %v2862
        %v2864 = vlaneseq
        %v2865 = vshrl.u32 %v2864, 7
        %v2866 = vsub.s32 %v2863, %v2865
        %v2867 = vrot.slane %v2851, %v2866
        %v2869 = vunpack.c.l.s4 1966171168
        %v2870 = vunpack.c.0.s8 %v2869
        %v2871 = vlaneseq
        %v2872 = vshrl.u32 %v2871, 7
        %v2873 = vsub.s32 %v2870, %v2872
        %v2874 = vrot.slane %v2858, %v2873
        %v2876 = vunpack.c.l.s4 1966171168
        %v2877 = vunpack.c.0.s8 %v2876
        %v2878 = vlaneseq
        %v2879 = vshrl.u32 %v2878, 7
        %v2880 = vsub.s32 %v2877, %v2879
        %v2881 = vrot.slane %v2859, %v2880
        %v2883 = vunpack.c.l.s4 1966171168
        %v2884 = vunpack.c.0.s8 %v2883
        %v2885 = vlaneseq
        %v2886 = vshrl.u32 %v2885, 7
        %v2887 = vsub.s32 %v2884, %v2886
        %v2888 = vrot.slane %v2860, %v2887
        %v2889 = vcombine.high %v2867, %v2867
        %v2890 = vcombine.high %v2874, %v2874
        %v2891 = vcombine.high %v2881, %v2881
        %v2892 = vcombine.high %v2888, %v2888
        %v2893 = vlaneseq
        %v2894 = vshrl.u32 %v2893, 7
        %v2895 = vsub.s32 0, %v2894
        %v2896 = vrot.slane %v2867, %v2895
        %v2897 = vlaneseq
        %v2898 = vshrl.u32 %v2897, 7
        %v2899 = vsub.s32 0, %v2898
        %v2900 = vrot.slane %v2881, %v2899
        %v2901 = vlaneseq
        %v2902 = vshrl.u32 %v2901, 7
        %v2903 = vsub.s32 0, %v2902
        %v2904 = vrot.slane %v2889, %v2903
        %v2905 = vlaneseq
        %v2906 = vshrl.u32 %v2905, 7
        %v2907 = vsub.s32 0, %v2906
        %v2908 = vrot.slane %v2891, %v2907
        %v2909 = vlaneseq
        %v2910 = vshrl.u32 %v2909, 7
        %v2911 = vsub.s32 0, %v2910
        %v2912 = vrot.slane %v2874, %v2911
        %v2913 = vlaneseq
        %v2914 = vshrl.u32 %v2913, 7
        %v2915 = vsub.s32 0, %v2914
        %v2916 = vrot.slane %v2888, %v2915
        %v2917 = vlaneseq
        %v2918 = vshrl.u32 %v2917, 7
        %v2919 = vsub.s32 0, %v2918
        %v2920 = vrot.slane %v2890, %v2919
        %v2921 = vlaneseq
        %v2922 = vshrl.u32 %v2921, 7
        %v2923 = vsub.s32 0, %v2922
        %v2924 = vrot.slane %v2892, %v2923
        %2925 = vrot.lane.b32.xlu0 %v2896, 16
        %v2926 = vpop.permute.xlu0 %2925
        %2927 = vrot.lane.b32.xlu0 %v2900, 16
        %v2928 = vpop.permute.xlu0 %2927
        %2929 = vrot.lane.b32.xlu0 %v2904, 16
        %v2930 = vpop.permute.xlu0 %2929
        %2931 = vrot.lane.b32.xlu0 %v2908, 16
        %v2932 = vpop.permute.xlu0 %2931
        %2933 = vrot.lane.b32.xlu0 %v2912, 16
        %v2934 = vpop.permute.xlu0 %2933
        %2935 = vrot.lane.b32.xlu0 %v2916, 16
        %v2936 = vpop.permute.xlu0 %2935
        %2937 = vrot.lane.b32.xlu0 %v2920, 16
        %v2938 = vpop.permute.xlu0 %2937
        %2939 = vrot.lane.b32.xlu0 %v2924, 16
        %v2940 = vpop.permute.xlu0 %2939
        %2949 = vst.msk [vmem:[#allocation4 + $0x10] sm:$0x1] %vm2118, %v2926
        %2950 = vst.msk [vmem:[#allocation4 + $0x30] sm:$0x1] %vm2118, %v2928
        %2951 = vst.msk [vmem:[#allocation4 + $0x50] sm:$0x1] %vm2118, %v2930
        %2952 = vst.msk [vmem:[#allocation4 + $0x70] sm:$0x1] %vm2118, %v2932
        %2953 = vst.msk [vmem:[#allocation4 + $0x90] sm:$0x1] %vm2118, %v2934
        %2954 = vst.msk [vmem:[#allocation4 + $0xb0] sm:$0x1] %vm2118, %v2936
        %2955 = vst.msk [vmem:[#allocation4 + $0xd0] sm:$0x1] %vm2118, %v2938
        %2956 = vst.msk [vmem:[#allocation4 + $0xf0] sm:$0x1] %vm2118, %v2940
        %v2957 = vadd.f32 %v2837, %v2720
        %v2959 = vcombine.high %v2957, %v2957
        %v2961 = vunpack.c.l.s4 1966171168
        %v2962 = vunpack.c.0.s8 %v2961
        %v2963 = vlaneseq
        %v2964 = vshrl.u32 %v2963, 7
        %v2965 = vsub.s32 %v2962, %v2964
        %v2966 = vrot.slane %v2957, %v2965
        %v2968 = vunpack.c.l.s4 1966171168
        %v2969 = vunpack.c.0.s8 %v2968
        %v2970 = vlaneseq
        %v2971 = vshrl.u32 %v2970, 7
        %v2972 = vsub.s32 %v2969, %v2971
        %v2973 = vrot.slane %v2959, %v2972
        %v2974 = vcombine.high %v2966, %v2966
        %v2975 = vcombine.high %v2973, %v2973
        %v2977 = vunpack.c.l.s4 1966171168
        %v2978 = vunpack.c.0.s8 %v2977
        %v2979 = vlaneseq
        %v2980 = vshrl.u32 %v2979, 7
        %v2981 = vsub.s32 %v2978, %v2980
        %v2982 = vrot.slane %v2966, %v2981
        %v2984 = vunpack.c.l.s4 1966171168
        %v2985 = vunpack.c.0.s8 %v2984
        %v2986 = vlaneseq
        %v2987 = vshrl.u32 %v2986, 7
        %v2988 = vsub.s32 %v2985, %v2987
        %v2989 = vrot.slane %v2973, %v2988
        %v2991 = vunpack.c.l.s4 1966171168
        %v2992 = vunpack.c.0.s8 %v2991
        %v2993 = vlaneseq
        %v2994 = vshrl.u32 %v2993, 7
        %v2995 = vsub.s32 %v2992, %v2994
        %v2996 = vrot.slane %v2974, %v2995
        %v2998 = vunpack.c.l.s4 1966171168
        %v2999 = vunpack.c.0.s8 %v2998
        %v3000 = vlaneseq
        %v3001 = vshrl.u32 %v3000, 7
        %v3002 = vsub.s32 %v2999, %v3001
        %v3003 = vrot.slane %v2975, %v3002
        %v3004 = vcombine.high %v2982, %v2982
        %v3005 = vcombine.high %v2989, %v2989
        %v3006 = vcombine.high %v2996, %v2996
        %v3007 = vcombine.high %v3003, %v3003
        %3016 = vst.msk [vmem:[#allocation4 + $0x11] sm:$0x1] %vm2118, %v2982
        %3017 = vst.msk [vmem:[#allocation4 + $0x31] sm:$0x1] %vm2118, %v2996
        %3018 = vst.msk [vmem:[#allocation4 + $0x51] sm:$0x1] %vm2118, %v3004
        %3019 = vst.msk [vmem:[#allocation4 + $0x71] sm:$0x1] %vm2118, %v3006
        %3020 = vst.msk [vmem:[#allocation4 + $0x91] sm:$0x1] %vm2118, %v2989
        %3021 = vst.msk [vmem:[#allocation4 + $0xb1] sm:$0x1] %vm2118, %v3003
        %3022 = vst.msk [vmem:[#allocation4 + $0xd1] sm:$0x1] %vm2118, %v3005
        %3023 = vst.msk [vmem:[#allocation4 + $0xf1] sm:$0x1] %vm2118, %v3007
        %v3024 = vadd.f32 %v2717, %v2840
        %v3026 = vcombine.high %v3024, %v3024
        %v3028 = vunpack.c.l.s4 1966171168
        %v3029 = vunpack.c.0.s8 %v3028
        %v3030 = vlaneseq
        %v3031 = vshrl.u32 %v3030, 7
        %v3032 = vsub.s32 %v3029, %v3031
        %v3033 = vrot.slane %v3024, %v3032
        %v3035 = vunpack.c.l.s4 1966171168
        %v3036 = vunpack.c.0.s8 %v3035
        %v3037 = vlaneseq
        %v3038 = vshrl.u32 %v3037, 7
        %v3039 = vsub.s32 %v3036, %v3038
        %v3040 = vrot.slane %v3026, %v3039
        %v3041 = vcombine.high %v3033, %v3033
        %v3042 = vcombine.high %v3040, %v3040
        %v3044 = vunpack.c.l.s4 1966171168
        %v3045 = vunpack.c.0.s8 %v3044
        %v3046 = vlaneseq
        %v3047 = vshrl.u32 %v3046, 7
        %v3048 = vsub.s32 %v3045, %v3047
        %v3049 = vrot.slane %v3033, %v3048
        %v3051 = vunpack.c.l.s4 1966171168
        %v3052 = vunpack.c.0.s8 %v3051
        %v3053 = vlaneseq
        %v3054 = vshrl.u32 %v3053, 7
        %v3055 = vsub.s32 %v3052, %v3054
        %v3056 = vrot.slane %v3040, %v3055
        %v3058 = vunpack.c.l.s4 1966171168
        %v3059 = vunpack.c.0.s8 %v3058
        %v3060 = vlaneseq
        %v3061 = vshrl.u32 %v3060, 7
        %v3062 = vsub.s32 %v3059, %v3061
        %v3063 = vrot.slane %v3041, %v3062
        %v3065 = vunpack.c.l.s4 1966171168
        %v3066 = vunpack.c.0.s8 %v3065
        %v3067 = vlaneseq
        %v3068 = vshrl.u32 %v3067, 7
        %v3069 = vsub.s32 %v3066, %v3068
        %v3070 = vrot.slane %v3042, %v3069
        %v3071 = vcombine.high %v3049, %v3049
        %v3072 = vcombine.high %v3056, %v3056
        %v3073 = vcombine.high %v3063, %v3063
        %v3074 = vcombine.high %v3070, %v3070
        %3083 = vst.msk [vmem:[#allocation4 + $0x12] sm:$0x1] %vm2118, %v3049
        %3084 = vst.msk [vmem:[#allocation4 + $0x32] sm:$0x1] %vm2118, %v3063
        %3085 = vst.msk [vmem:[#allocation4 + $0x52] sm:$0x1] %vm2118, %v3071
        %3086 = vst.msk [vmem:[#allocation4 + $0x72] sm:$0x1] %vm2118, %v3073
        %3087 = vst.msk [vmem:[#allocation4 + $0x92] sm:$0x1] %vm2118, %v3056
        %3088 = vst.msk [vmem:[#allocation4 + $0xb2] sm:$0x1] %vm2118, %v3070
        %3089 = vst.msk [vmem:[#allocation4 + $0xd2] sm:$0x1] %vm2118, %v3072
        %3090 = vst.msk [vmem:[#allocation4 + $0xf2] sm:$0x1] %vm2118, %v3074
        %v3091 = vlaneseq
        %v3092 = vshrl.u32 %v3091, 7
        %v3093 = vsub.s32 0, %v3092
        %v3094 = vrot.slane %v2982, %v3093
        %v3095 = vlaneseq
        %v3096 = vshrl.u32 %v3095, 7
        %v3097 = vsub.s32 0, %v3096
        %v3098 = vrot.slane %v2996, %v3097
        %v3099 = vlaneseq
        %v3100 = vshrl.u32 %v3099, 7
        %v3101 = vsub.s32 0, %v3100
        %v3102 = vrot.slane %v3004, %v3101
        %v3103 = vlaneseq
        %v3104 = vshrl.u32 %v3103, 7
        %v3105 = vsub.s32 0, %v3104
        %v3106 = vrot.slane %v3006, %v3105
        %v3107 = vlaneseq
        %v3108 = vshrl.u32 %v3107, 7
        %v3109 = vsub.s32 0, %v3108
        %v3110 = vrot.slane %v2989, %v3109
        %v3111 = vlaneseq
        %v3112 = vshrl.u32 %v3111, 7
        %v3113 = vsub.s32 0, %v3112
        %v3114 = vrot.slane %v3003, %v3113
        %v3115 = vlaneseq
        %v3116 = vshrl.u32 %v3115, 7
        %v3117 = vsub.s32 0, %v3116
        %v3118 = vrot.slane %v3005, %v3117
        %v3119 = vlaneseq
        %v3120 = vshrl.u32 %v3119, 7
        %v3121 = vsub.s32 0, %v3120
        %v3122 = vrot.slane %v3007, %v3121
        %3123 = vrot.lane.b32.xlu0 %v3094, 112
        %v3124 = vpop.permute.xlu0 %3123
        %3125 = vrot.lane.b32.xlu0 %v3098, 112
        %v3126 = vpop.permute.xlu0 %3125
        %3127 = vrot.lane.b32.xlu0 %v3102, 112
        %v3128 = vpop.permute.xlu0 %3127
        %3129 = vrot.lane.b32.xlu0 %v3106, 112
        %v3130 = vpop.permute.xlu0 %3129
        %3131 = vrot.lane.b32.xlu0 %v3110, 112
        %v3132 = vpop.permute.xlu0 %3131
        %3133 = vrot.lane.b32.xlu0 %v3114, 112
        %v3134 = vpop.permute.xlu0 %3133
        %3135 = vrot.lane.b32.xlu0 %v3118, 112
        %v3136 = vpop.permute.xlu0 %3135
        %3137 = vrot.lane.b32.xlu0 %v3122, 112
        %v3138 = vpop.permute.xlu0 %3137
        %3147 = vst.msk [vmem:[#allocation4 + $0x13] sm:$0x1] %vm2118, %v3124
        %3148 = vst.msk [vmem:[#allocation4 + $0x33] sm:$0x1] %vm2118, %v3126
        %3149 = vst.msk [vmem:[#allocation4 + $0x53] sm:$0x1] %vm2118, %v3128
        %3150 = vst.msk [vmem:[#allocation4 + $0x73] sm:$0x1] %vm2118, %v3130
        %3151 = vst.msk [vmem:[#allocation4 + $0x93] sm:$0x1] %vm2118, %v3132
        %3152 = vst.msk [vmem:[#allocation4 + $0xb3] sm:$0x1] %vm2118, %v3134
        %3153 = vst.msk [vmem:[#allocation4 + $0xd3] sm:$0x1] %vm2118, %v3136
        %3154 = vst.msk [vmem:[#allocation4 + $0xf3] sm:$0x1] %vm2118, %v3138
        %v3155 = vlaneseq
        %v3156 = vshrl.u32 %v3155, 7
        %v3157 = vsub.s32 0, %v3156
        %v3158 = vrot.slane %v3049, %v3157
        %v3159 = vlaneseq
        %v3160 = vshrl.u32 %v3159, 7
        %v3161 = vsub.s32 0, %v3160
        %v3162 = vrot.slane %v3063, %v3161
        %v3163 = vlaneseq
        %v3164 = vshrl.u32 %v3163, 7
        %v3165 = vsub.s32 0, %v3164
        %v3166 = vrot.slane %v3071, %v3165
        %v3167 = vlaneseq
        %v3168 = vshrl.u32 %v3167, 7
        %v3169 = vsub.s32 0, %v3168
        %v3170 = vrot.slane %v3073, %v3169
        %v3171 = vlaneseq
        %v3172 = vshrl.u32 %v3171, 7
        %v3173 = vsub.s32 0, %v3172
        %v3174 = vrot.slane %v3056, %v3173
        %v3175 = vlaneseq
        %v3176 = vshrl.u32 %v3175, 7
        %v3177 = vsub.s32 0, %v3176
        %v3178 = vrot.slane %v3070, %v3177
        %v3179 = vlaneseq
        %v3180 = vshrl.u32 %v3179, 7
        %v3181 = vsub.s32 0, %v3180
        %v3182 = vrot.slane %v3072, %v3181
        %v3183 = vlaneseq
        %v3184 = vshrl.u32 %v3183, 7
        %v3185 = vsub.s32 0, %v3184
        %v3186 = vrot.slane %v3074, %v3185
        %3187 = vrot.lane.b32.xlu0 %v3158, 112
        %v3188 = vpop.permute.xlu0 %3187
        %3189 = vrot.lane.b32.xlu0 %v3162, 112
        %v3190 = vpop.permute.xlu0 %3189
        %3191 = vrot.lane.b32.xlu0 %v3166, 112
        %v3192 = vpop.permute.xlu0 %3191
        %3193 = vrot.lane.b32.xlu0 %v3170, 112
        %v3194 = vpop.permute.xlu0 %3193
        %3195 = vrot.lane.b32.xlu0 %v3174, 112
        %v3196 = vpop.permute.xlu0 %3195
        %3197 = vrot.lane.b32.xlu0 %v3178, 112
        %v3198 = vpop.permute.xlu0 %3197
        %3199 = vrot.lane.b32.xlu0 %v3182, 112
        %v3200 = vpop.permute.xlu0 %3199
        %3201 = vrot.lane.b32.xlu0 %v3186, 112
        %v3202 = vpop.permute.xlu0 %3201
        %3211 = vst.msk [vmem:[#allocation4 + $0x14] sm:$0x1] %vm2118, %v3188
        %3212 = vst.msk [vmem:[#allocation4 + $0x34] sm:$0x1] %vm2118, %v3190
        %3213 = vst.msk [vmem:[#allocation4 + $0x54] sm:$0x1] %vm2118, %v3192
        %3214 = vst.msk [vmem:[#allocation4 + $0x74] sm:$0x1] %vm2118, %v3194
        %3215 = vst.msk [vmem:[#allocation4 + $0x94] sm:$0x1] %vm2118, %v3196
        %3216 = vst.msk [vmem:[#allocation4 + $0xb4] sm:$0x1] %vm2118, %v3198
        %3217 = vst.msk [vmem:[#allocation4 + $0xd4] sm:$0x1] %vm2118, %v3200
        %3218 = vst.msk [vmem:[#allocation4 + $0xf4] sm:$0x1] %vm2118, %v3202
        %3219 = vrot.lane.b32.xlu0 %v3094, 96
        %v3220 = vpop.permute.xlu0 %3219
        %3221 = vrot.lane.b32.xlu0 %v3098, 96
        %v3222 = vpop.permute.xlu0 %3221
        %3223 = vrot.lane.b32.xlu0 %v3102, 96
        %v3224 = vpop.permute.xlu0 %3223
        %3225 = vrot.lane.b32.xlu0 %v3106, 96
        %v3226 = vpop.permute.xlu0 %3225
        %3227 = vrot.lane.b32.xlu0 %v3110, 96
        %v3228 = vpop.permute.xlu0 %3227
        %3229 = vrot.lane.b32.xlu0 %v3114, 96
        %v3230 = vpop.permute.xlu0 %3229
        %3231 = vrot.lane.b32.xlu0 %v3118, 96
        %v3232 = vpop.permute.xlu0 %3231
        %3233 = vrot.lane.b32.xlu0 %v3122, 96
        %v3234 = vpop.permute.xlu0 %3233
        %3243 = vst.msk [vmem:[#allocation4 + $0x15] sm:$0x1] %vm2118, %v3220
        %3244 = vst.msk [vmem:[#allocation4 + $0x35] sm:$0x1] %vm2118, %v3222
        %3245 = vst.msk [vmem:[#allocation4 + $0x55] sm:$0x1] %vm2118, %v3224
        %3246 = vst.msk [vmem:[#allocation4 + $0x75] sm:$0x1] %vm2118, %v3226
        %3247 = vst.msk [vmem:[#allocation4 + $0x95] sm:$0x1] %vm2118, %v3228
        %3248 = vst.msk [vmem:[#allocation4 + $0xb5] sm:$0x1] %vm2118, %v3230
        %3249 = vst.msk [vmem:[#allocation4 + $0xd5] sm:$0x1] %vm2118, %v3232
        %3250 = vst.msk [vmem:[#allocation4 + $0xf5] sm:$0x1] %vm2118, %v3234
        %3251 = vrot.lane.b32.xlu0 %v3158, 96
        %v3252 = vpop.permute.xlu0 %3251
        %3253 = vrot.lane.b32.xlu0 %v3162, 96
        %v3254 = vpop.permute.xlu0 %3253
        %3255 = vrot.lane.b32.xlu0 %v3166, 96
        %v3256 = vpop.permute.xlu0 %3255
        %3257 = vrot.lane.b32.xlu0 %v3170, 96
        %v3258 = vpop.permute.xlu0 %3257
        %3259 = vrot.lane.b32.xlu0 %v3174, 96
        %v3260 = vpop.permute.xlu0 %3259
        %3261 = vrot.lane.b32.xlu0 %v3178, 96
        %v3262 = vpop.permute.xlu0 %3261
        %3263 = vrot.lane.b32.xlu0 %v3182, 96
        %v3264 = vpop.permute.xlu0 %3263
        %3265 = vrot.lane.b32.xlu0 %v3186, 96
        %v3266 = vpop.permute.xlu0 %3265
        %3275 = vst.msk [vmem:[#allocation4 + $0x16] sm:$0x1] %vm2118, %v3252
        %3276 = vst.msk [vmem:[#allocation4 + $0x36] sm:$0x1] %vm2118, %v3254
        %3277 = vst.msk [vmem:[#allocation4 + $0x56] sm:$0x1] %vm2118, %v3256
        %3278 = vst.msk [vmem:[#allocation4 + $0x76] sm:$0x1] %vm2118, %v3258
        %3279 = vst.msk [vmem:[#allocation4 + $0x96] sm:$0x1] %vm2118, %v3260
        %3280 = vst.msk [vmem:[#allocation4 + $0xb6] sm:$0x1] %vm2118, %v3262
        %3281 = vst.msk [vmem:[#allocation4 + $0xd6] sm:$0x1] %vm2118, %v3264
        %3282 = vst.msk [vmem:[#allocation4 + $0xf6] sm:$0x1] %vm2118, %v3266
        %3283 = vrot.lane.b32.xlu0 %v3094, 80
        %v3284 = vpop.permute.xlu0 %3283
        %3285 = vrot.lane.b32.xlu0 %v3098, 80
        %v3286 = vpop.permute.xlu0 %3285
        %3287 = vrot.lane.b32.xlu0 %v3102, 80
        %v3288 = vpop.permute.xlu0 %3287
        %3289 = vrot.lane.b32.xlu0 %v3106, 80
        %v3290 = vpop.permute.xlu0 %3289
        %3291 = vrot.lane.b32.xlu0 %v3110, 80
        %v3292 = vpop.permute.xlu0 %3291
        %3293 = vrot.lane.b32.xlu0 %v3114, 80
        %v3294 = vpop.permute.xlu0 %3293
        %3295 = vrot.lane.b32.xlu0 %v3118, 80
        %v3296 = vpop.permute.xlu0 %3295
        %3297 = vrot.lane.b32.xlu0 %v3122, 80
        %v3298 = vpop.permute.xlu0 %3297
        %3307 = vst.msk [vmem:[#allocation4 + $0x17] sm:$0x1] %vm2118, %v3284
        %3308 = vst.msk [vmem:[#allocation4 + $0x37] sm:$0x1] %vm2118, %v3286
        %3309 = vst.msk [vmem:[#allocation4 + $0x57] sm:$0x1] %vm2118, %v3288
        %3310 = vst.msk [vmem:[#allocation4 + $0x77] sm:$0x1] %vm2118, %v3290
        %3311 = vst.msk [vmem:[#allocation4 + $0x97] sm:$0x1] %vm2118, %v3292
        %3312 = vst.msk [vmem:[#allocation4 + $0xb7] sm:$0x1] %vm2118, %v3294
        %3313 = vst.msk [vmem:[#allocation4 + $0xd7] sm:$0x1] %vm2118, %v3296
        %3314 = vst.msk [vmem:[#allocation4 + $0xf7] sm:$0x1] %vm2118, %v3298
        %3315 = vrot.lane.b32.xlu0 %v3158, 80
        %v3316 = vpop.permute.xlu0 %3315
        %3317 = vrot.lane.b32.xlu0 %v3162, 80
        %v3318 = vpop.permute.xlu0 %3317
        %3319 = vrot.lane.b32.xlu0 %v3166, 80
        %v3320 = vpop.permute.xlu0 %3319
        %3321 = vrot.lane.b32.xlu0 %v3170, 80
        %v3322 = vpop.permute.xlu0 %3321
        %3323 = vrot.lane.b32.xlu0 %v3174, 80
        %v3324 = vpop.permute.xlu0 %3323
        %3325 = vrot.lane.b32.xlu0 %v3178, 80
        %v3326 = vpop.permute.xlu0 %3325
        %3327 = vrot.lane.b32.xlu0 %v3182, 80
        %v3328 = vpop.permute.xlu0 %3327
        %3329 = vrot.lane.b32.xlu0 %v3186, 80
        %v3330 = vpop.permute.xlu0 %3329
        %3339 = vst.msk [vmem:[#allocation4 + $0x18] sm:$0x1] %vm2118, %v3316
        %3340 = vst.msk [vmem:[#allocation4 + $0x38] sm:$0x1] %vm2118, %v3318
        %3341 = vst.msk [vmem:[#allocation4 + $0x58] sm:$0x1] %vm2118, %v3320
        %3342 = vst.msk [vmem:[#allocation4 + $0x78] sm:$0x1] %vm2118, %v3322
        %3343 = vst.msk [vmem:[#allocation4 + $0x98] sm:$0x1] %vm2118, %v3324
        %3344 = vst.msk [vmem:[#allocation4 + $0xb8] sm:$0x1] %vm2118, %v3326
        %3345 = vst.msk [vmem:[#allocation4 + $0xd8] sm:$0x1] %vm2118, %v3328
        %3346 = vst.msk [vmem:[#allocation4 + $0xf8] sm:$0x1] %vm2118, %v3330
        %3347 = vrot.lane.b32.xlu0 %v3094, 64
        %v3348 = vpop.permute.xlu0 %3347
        %3349 = vrot.lane.b32.xlu0 %v3098, 64
        %v3350 = vpop.permute.xlu0 %3349
        %3351 = vrot.lane.b32.xlu0 %v3102, 64
        %v3352 = vpop.permute.xlu0 %3351
        %3353 = vrot.lane.b32.xlu0 %v3106, 64
        %v3354 = vpop.permute.xlu0 %3353
        %3355 = vrot.lane.b32.xlu0 %v3110, 64
        %v3356 = vpop.permute.xlu0 %3355
        %3357 = vrot.lane.b32.xlu0 %v3114, 64
        %v3358 = vpop.permute.xlu0 %3357
        %3359 = vrot.lane.b32.xlu0 %v3118, 64
        %v3360 = vpop.permute.xlu0 %3359
        %3361 = vrot.lane.b32.xlu0 %v3122, 64
        %v3362 = vpop.permute.xlu0 %3361
        %3371 = vst.msk [vmem:[#allocation4 + $0x19] sm:$0x1] %vm2118, %v3348
        %3372 = vst.msk [vmem:[#allocation4 + $0x39] sm:$0x1] %vm2118, %v3350
        %3373 = vst.msk [vmem:[#allocation4 + $0x59] sm:$0x1] %vm2118, %v3352
        %3374 = vst.msk [vmem:[#allocation4 + $0x79] sm:$0x1] %vm2118, %v3354
        %3375 = vst.msk [vmem:[#allocation4 + $0x99] sm:$0x1] %vm2118, %v3356
        %3376 = vst.msk [vmem:[#allocation4 + $0xb9] sm:$0x1] %vm2118, %v3358
        %3377 = vst.msk [vmem:[#allocation4 + $0xd9] sm:$0x1] %vm2118, %v3360
        %3378 = vst.msk [vmem:[#allocation4 + $0xf9] sm:$0x1] %vm2118, %v3362
        %3379 = vrot.lane.b32.xlu0 %v3158, 64
        %v3380 = vpop.permute.xlu0 %3379
        %3381 = vrot.lane.b32.xlu0 %v3162, 64
        %v3382 = vpop.permute.xlu0 %3381
        %3383 = vrot.lane.b32.xlu0 %v3166, 64
        %v3384 = vpop.permute.xlu0 %3383
        %3385 = vrot.lane.b32.xlu0 %v3170, 64
        %v3386 = vpop.permute.xlu0 %3385
        %3387 = vrot.lane.b32.xlu0 %v3174, 64
        %v3388 = vpop.permute.xlu0 %3387
        %3389 = vrot.lane.b32.xlu0 %v3178, 64
        %v3390 = vpop.permute.xlu0 %3389
        %3391 = vrot.lane.b32.xlu0 %v3182, 64
        %v3392 = vpop.permute.xlu0 %3391
        %3393 = vrot.lane.b32.xlu0 %v3186, 64
        %v3394 = vpop.permute.xlu0 %3393
        %3403 = vst.msk [vmem:[#allocation4 + $0x1a] sm:$0x1] %vm2118, %v3380
        %3404 = vst.msk [vmem:[#allocation4 + $0x3a] sm:$0x1] %vm2118, %v3382
        %3405 = vst.msk [vmem:[#allocation4 + $0x5a] sm:$0x1] %vm2118, %v3384
        %3406 = vst.msk [vmem:[#allocation4 + $0x7a] sm:$0x1] %vm2118, %v3386
        %3407 = vst.msk [vmem:[#allocation4 + $0x9a] sm:$0x1] %vm2118, %v3388
        %3408 = vst.msk [vmem:[#allocation4 + $0xba] sm:$0x1] %vm2118, %v3390
        %3409 = vst.msk [vmem:[#allocation4 + $0xda] sm:$0x1] %vm2118, %v3392
        %3410 = vst.msk [vmem:[#allocation4 + $0xfa] sm:$0x1] %vm2118, %v3394
        %3411 = vrot.lane.b32.xlu0 %v3094, 48
        %v3412 = vpop.permute.xlu0 %3411
        %3413 = vrot.lane.b32.xlu0 %v3098, 48
        %v3414 = vpop.permute.xlu0 %3413
        %3415 = vrot.lane.b32.xlu0 %v3102, 48
        %v3416 = vpop.permute.xlu0 %3415
        %3417 = vrot.lane.b32.xlu0 %v3106, 48
        %v3418 = vpop.permute.xlu0 %3417
        %3419 = vrot.lane.b32.xlu0 %v3110, 48
        %v3420 = vpop.permute.xlu0 %3419
        %3421 = vrot.lane.b32.xlu0 %v3114, 48
        %v3422 = vpop.permute.xlu0 %3421
        %3423 = vrot.lane.b32.xlu0 %v3118, 48
        %v3424 = vpop.permute.xlu0 %3423
        %3425 = vrot.lane.b32.xlu0 %v3122, 48
        %v3426 = vpop.permute.xlu0 %3425
        %3435 = vst.msk [vmem:[#allocation4 + $0x1b] sm:$0x1] %vm2118, %v3412
        %3436 = vst.msk [vmem:[#allocation4 + $0x3b] sm:$0x1] %vm2118, %v3414
        %3437 = vst.msk [vmem:[#allocation4 + $0x5b] sm:$0x1] %vm2118, %v3416
        %3438 = vst.msk [vmem:[#allocation4 + $0x7b] sm:$0x1] %vm2118, %v3418
        %3439 = vst.msk [vmem:[#allocation4 + $0x9b] sm:$0x1] %vm2118, %v3420
        %3440 = vst.msk [vmem:[#allocation4 + $0xbb] sm:$0x1] %vm2118, %v3422
        %3441 = vst.msk [vmem:[#allocation4 + $0xdb] sm:$0x1] %vm2118, %v3424
        %3442 = vst.msk [vmem:[#allocation4 + $0xfb] sm:$0x1] %vm2118, %v3426
        %3443 = vrot.lane.b32.xlu0 %v3158, 48
        %v3444 = vpop.permute.xlu0 %3443
        %3445 = vrot.lane.b32.xlu0 %v3162, 48
        %v3446 = vpop.permute.xlu0 %3445
        %3447 = vrot.lane.b32.xlu0 %v3166, 48
        %v3448 = vpop.permute.xlu0 %3447
        %3449 = vrot.lane.b32.xlu0 %v3170, 48
        %v3450 = vpop.permute.xlu0 %3449
        %3451 = vrot.lane.b32.xlu0 %v3174, 48
        %v3452 = vpop.permute.xlu0 %3451
        %3453 = vrot.lane.b32.xlu0 %v3178, 48
        %v3454 = vpop.permute.xlu0 %3453
        %3455 = vrot.lane.b32.xlu0 %v3182, 48
        %v3456 = vpop.permute.xlu0 %3455
        %3457 = vrot.lane.b32.xlu0 %v3186, 48
        %v3458 = vpop.permute.xlu0 %3457
        %3467 = vst.msk [vmem:[#allocation4 + $0x1c] sm:$0x1] %vm2118, %v3444
        %3468 = vst.msk [vmem:[#allocation4 + $0x3c] sm:$0x1] %vm2118, %v3446
        %3469 = vst.msk [vmem:[#allocation4 + $0x5c] sm:$0x1] %vm2118, %v3448
        %3470 = vst.msk [vmem:[#allocation4 + $0x7c] sm:$0x1] %vm2118, %v3450
        %3471 = vst.msk [vmem:[#allocation4 + $0x9c] sm:$0x1] %vm2118, %v3452
        %3472 = vst.msk [vmem:[#allocation4 + $0xbc] sm:$0x1] %vm2118, %v3454
        %3473 = vst.msk [vmem:[#allocation4 + $0xdc] sm:$0x1] %vm2118, %v3456
        %3474 = vst.msk [vmem:[#allocation4 + $0xfc] sm:$0x1] %vm2118, %v3458
        %3475 = vrot.lane.b32.xlu0 %v3094, 32
        %v3476 = vpop.permute.xlu0 %3475
        %3477 = vrot.lane.b32.xlu0 %v3098, 32
        %v3478 = vpop.permute.xlu0 %3477
        %3479 = vrot.lane.b32.xlu0 %v3102, 32
        %v3480 = vpop.permute.xlu0 %3479
        %3481 = vrot.lane.b32.xlu0 %v3106, 32
        %v3482 = vpop.permute.xlu0 %3481
        %3483 = vrot.lane.b32.xlu0 %v3110, 32
        %v3484 = vpop.permute.xlu0 %3483
        %3485 = vrot.lane.b32.xlu0 %v3114, 32
        %v3486 = vpop.permute.xlu0 %3485
        %3487 = vrot.lane.b32.xlu0 %v3118, 32
        %v3488 = vpop.permute.xlu0 %3487
        %3489 = vrot.lane.b32.xlu0 %v3122, 32
        %v3490 = vpop.permute.xlu0 %3489
        %3499 = vst.msk [vmem:[#allocation4 + $0x1d] sm:$0x1] %vm2118, %v3476
        %3500 = vst.msk [vmem:[#allocation4 + $0x3d] sm:$0x1] %vm2118, %v3478
        %3501 = vst.msk [vmem:[#allocation4 + $0x5d] sm:$0x1] %vm2118, %v3480
        %3502 = vst.msk [vmem:[#allocation4 + $0x7d] sm:$0x1] %vm2118, %v3482
        %3503 = vst.msk [vmem:[#allocation4 + $0x9d] sm:$0x1] %vm2118, %v3484
        %3504 = vst.msk [vmem:[#allocation4 + $0xbd] sm:$0x1] %vm2118, %v3486
        %3505 = vst.msk [vmem:[#allocation4 + $0xdd] sm:$0x1] %vm2118, %v3488
        %3506 = vst.msk [vmem:[#allocation4 + $0xfd] sm:$0x1] %vm2118, %v3490
        %3507 = vrot.lane.b32.xlu0 %v3158, 32
        %v3508 = vpop.permute.xlu0 %3507
        %3509 = vrot.lane.b32.xlu0 %v3162, 32
        %v3510 = vpop.permute.xlu0 %3509
        %3511 = vrot.lane.b32.xlu0 %v3166, 32
        %v3512 = vpop.permute.xlu0 %3511
        %3513 = vrot.lane.b32.xlu0 %v3170, 32
        %v3514 = vpop.permute.xlu0 %3513
        %3515 = vrot.lane.b32.xlu0 %v3174, 32
        %v3516 = vpop.permute.xlu0 %3515
        %3517 = vrot.lane.b32.xlu0 %v3178, 32
        %v3518 = vpop.permute.xlu0 %3517
        %3519 = vrot.lane.b32.xlu0 %v3182, 32
        %v3520 = vpop.permute.xlu0 %3519
        %3521 = vrot.lane.b32.xlu0 %v3186, 32
        %v3522 = vpop.permute.xlu0 %3521
        %3531 = vst.msk [vmem:[#allocation4 + $0x1e] sm:$0x1] %vm2118, %v3508
        %3532 = vst.msk [vmem:[#allocation4 + $0x3e] sm:$0x1] %vm2118, %v3510
        %3533 = vst.msk [vmem:[#allocation4 + $0x5e] sm:$0x1] %vm2118, %v3512
        %3534 = vst.msk [vmem:[#allocation4 + $0x7e] sm:$0x1] %vm2118, %v3514
        %3535 = vst.msk [vmem:[#allocation4 + $0x9e] sm:$0x1] %vm2118, %v3516
        %3536 = vst.msk [vmem:[#allocation4 + $0xbe] sm:$0x1] %vm2118, %v3518
        %3537 = vst.msk [vmem:[#allocation4 + $0xde] sm:$0x1] %vm2118, %v3520
        %3538 = vst.msk [vmem:[#allocation4 + $0xfe] sm:$0x1] %vm2118, %v3522
        %v3539 = vadd.f32 %v2837, %v2717
        %v3541 = vcombine.high %v3539, %v3539
        %v3543 = vunpack.c.l.s4 1966171168
        %v3544 = vunpack.c.0.s8 %v3543
        %v3545 = vlaneseq
        %v3546 = vshrl.u32 %v3545, 7
        %v3547 = vsub.s32 %v3544, %v3546
        %v3548 = vrot.slane %v3539, %v3547
        %v3550 = vunpack.c.l.s4 1966171168
        %v3551 = vunpack.c.0.s8 %v3550
        %v3552 = vlaneseq
        %v3553 = vshrl.u32 %v3552, 7
        %v3554 = vsub.s32 %v3551, %v3553
        %v3555 = vrot.slane %v3541, %v3554
        %v3556 = vcombine.high %v3548, %v3548
        %v3557 = vcombine.high %v3555, %v3555
        %v3559 = vunpack.c.l.s4 1966171168
        %v3560 = vunpack.c.0.s8 %v3559
        %v3561 = vlaneseq
        %v3562 = vshrl.u32 %v3561, 7
        %v3563 = vsub.s32 %v3560, %v3562
        %v3564 = vrot.slane %v3548, %v3563
        %v3566 = vunpack.c.l.s4 1966171168
        %v3567 = vunpack.c.0.s8 %v3566
        %v3568 = vlaneseq
        %v3569 = vshrl.u32 %v3568, 7
        %v3570 = vsub.s32 %v3567, %v3569
        %v3571 = vrot.slane %v3555, %v3570
        %v3573 = vunpack.c.l.s4 1966171168
        %v3574 = vunpack.c.0.s8 %v3573
        %v3575 = vlaneseq
        %v3576 = vshrl.u32 %v3575, 7
        %v3577 = vsub.s32 %v3574, %v3576
        %v3578 = vrot.slane %v3556, %v3577
        %v3580 = vunpack.c.l.s4 1966171168
        %v3581 = vunpack.c.0.s8 %v3580
        %v3582 = vlaneseq
        %v3583 = vshrl.u32 %v3582, 7
        %v3584 = vsub.s32 %v3581, %v3583
        %v3585 = vrot.slane %v3557, %v3584
        %v3586 = vcombine.high %v3564, %v3564
        %v3587 = vcombine.high %v3571, %v3571
        %v3588 = vcombine.high %v3578, %v3578
        %v3589 = vcombine.high %v3585, %v3585
        %v3590 = vlaneseq
        %v3591 = vshrl.u32 %v3590, 7
        %v3592 = vsub.s32 0, %v3591
        %v3593 = vrot.slane %v3564, %v3592
        %v3594 = vlaneseq
        %v3595 = vshrl.u32 %v3594, 7
        %v3596 = vsub.s32 0, %v3595
        %v3597 = vrot.slane %v3578, %v3596
        %v3598 = vlaneseq
        %v3599 = vshrl.u32 %v3598, 7
        %v3600 = vsub.s32 0, %v3599
        %v3601 = vrot.slane %v3586, %v3600
        %v3602 = vlaneseq
        %v3603 = vshrl.u32 %v3602, 7
        %v3604 = vsub.s32 0, %v3603
        %v3605 = vrot.slane %v3588, %v3604
        %v3606 = vlaneseq
        %v3607 = vshrl.u32 %v3606, 7
        %v3608 = vsub.s32 0, %v3607
        %v3609 = vrot.slane %v3571, %v3608
        %v3610 = vlaneseq
        %v3611 = vshrl.u32 %v3610, 7
        %v3612 = vsub.s32 0, %v3611
        %v3613 = vrot.slane %v3585, %v3612
        %v3614 = vlaneseq
        %v3615 = vshrl.u32 %v3614, 7
        %v3616 = vsub.s32 0, %v3615
        %v3617 = vrot.slane %v3587, %v3616
        %v3618 = vlaneseq
        %v3619 = vshrl.u32 %v3618, 7
        %v3620 = vsub.s32 0, %v3619
        %v3621 = vrot.slane %v3589, %v3620
        %3622 = vrot.lane.b32.xlu0 %v3593, 16
        %v3623 = vpop.permute.xlu0 %3622
        %3624 = vrot.lane.b32.xlu0 %v3597, 16
        %v3625 = vpop.permute.xlu0 %3624
        %3626 = vrot.lane.b32.xlu0 %v3601, 16
        %v3627 = vpop.permute.xlu0 %3626
        %3628 = vrot.lane.b32.xlu0 %v3605, 16
        %v3629 = vpop.permute.xlu0 %3628
        %3630 = vrot.lane.b32.xlu0 %v3609, 16
        %v3631 = vpop.permute.xlu0 %3630
        %3632 = vrot.lane.b32.xlu0 %v3613, 16
        %v3633 = vpop.permute.xlu0 %3632
        %3634 = vrot.lane.b32.xlu0 %v3617, 16
        %v3635 = vpop.permute.xlu0 %3634
        %3636 = vrot.lane.b32.xlu0 %v3621, 16
        %v3637 = vpop.permute.xlu0 %3636
        %3646 = vst.msk [vmem:[#allocation4 + $0x1f] sm:$0x1] %vm2118, %v3623
        %3647 = vst.msk [vmem:[#allocation4 + $0x3f] sm:$0x1] %vm2118, %v3625
        %3648 = vst.msk [vmem:[#allocation4 + $0x5f] sm:$0x1] %vm2118, %v3627
        %3649 = vst.msk [vmem:[#allocation4 + $0x7f] sm:$0x1] %vm2118, %v3629
        %3650 = vst.msk [vmem:[#allocation4 + $0x9f] sm:$0x1] %vm2118, %v3631
        %3651 = vst.msk [vmem:[#allocation4 + $0xbf] sm:$0x1] %vm2118, %v3633
        %3652 = vst.msk [vmem:[#allocation4 + $0xdf] sm:$0x1] %vm2118, %v3635
        %3653 = vst.msk [vmem:[#allocation4 + $0xff] sm:$0x1] %vm2118, %v3637
        %v3654 = vld [vmem:[#allocation4] sm:$0xff]
        %v3655 = vld [vmem:[#allocation4 + $0x8] sm:$0xff]
        %v3656 = vld [vmem:[#allocation4 + $0x10] sm:$0xff]
        %v3657 = vld [vmem:[#allocation4 + $0x18] sm:$0xff]
        %v3658 = vld [vmem:[#allocation4 + $0x20] sm:$0xff]
        %v3659 = vld [vmem:[#allocation4 + $0x28] sm:$0xff]
        %v3660 = vld [vmem:[#allocation4 + $0x30] sm:$0xff]
        %v3661 = vld [vmem:[#allocation4 + $0x38] sm:$0xff]
        %v3662 = vld [vmem:[#allocation4 + $0x40] sm:$0xff]
        %v3663 = vld [vmem:[#allocation4 + $0x48] sm:$0xff]
        %v3664 = vld [vmem:[#allocation4 + $0x50] sm:$0xff]
        %v3665 = vld [vmem:[#allocation4 + $0x58] sm:$0xff]
        %v3666 = vld [vmem:[#allocation4 + $0x60] sm:$0xff]
        %v3667 = vld [vmem:[#allocation4 + $0x68] sm:$0xff]
        %v3668 = vld [vmem:[#allocation4 + $0x70] sm:$0xff]
        %v3669 = vld [vmem:[#allocation4 + $0x78] sm:$0xff]
        %v3670 = vld [vmem:[#allocation4 + $0x80] sm:$0xff]
        %v3671 = vld [vmem:[#allocation4 + $0x88] sm:$0xff]
        %v3672 = vld [vmem:[#allocation4 + $0x90] sm:$0xff]
        %v3673 = vld [vmem:[#allocation4 + $0x98] sm:$0xff]
        %v3674 = vld [vmem:[#allocation4 + $0xa0] sm:$0xff]
        %v3675 = vld [vmem:[#allocation4 + $0xa8] sm:$0xff]
        %v3676 = vld [vmem:[#allocation4 + $0xb0] sm:$0xff]
        %v3677 = vld [vmem:[#allocation4 + $0xb8] sm:$0xff]
        %v3678 = vld [vmem:[#allocation4 + $0xc0] sm:$0xff]
        %v3679 = vld [vmem:[#allocation4 + $0xc8] sm:$0xff]
        %v3680 = vld [vmem:[#allocation4 + $0xd0] sm:$0xff]
        %v3681 = vld [vmem:[#allocation4 + $0xd8] sm:$0xff]
        %v3682 = vld [vmem:[#allocation4 + $0xe0] sm:$0xff]
        %v3683 = vld [vmem:[#allocation4 + $0xe8] sm:$0xff]
        %v3684 = vld [vmem:[#allocation4 + $0xf0] sm:$0xff]
        %v3685 = vld [vmem:[#allocation4 + $0xf8] sm:$0xff]
        %v3686 = vpack.c.bf16 %v3655, %v3654
        %v3687 = vpack.c.bf16 %v3657, %v3656
        %v3688 = vpack.c.bf16 %v3659, %v3658
        %v3689 = vpack.c.bf16 %v3661, %v3660
        %v3690 = vpack.c.bf16 %v3663, %v3662
        %v3691 = vpack.c.bf16 %v3665, %v3664
        %v3692 = vpack.c.bf16 %v3667, %v3666
        %v3693 = vpack.c.bf16 %v3669, %v3668
        %v3694 = vpack.c.bf16 %v3671, %v3670
        %v3695 = vpack.c.bf16 %v3673, %v3672
        %v3696 = vpack.c.bf16 %v3675, %v3674
        %v3697 = vpack.c.bf16 %v3677, %v3676
        %v3698 = vpack.c.bf16 %v3679, %v3678
        %v3699 = vpack.c.bf16 %v3681, %v3680
        %v3700 = vpack.c.bf16 %v3683, %v3682
        %v3701 = vpack.c.bf16 %v3685, %v3684
        %v3702 = vld [vmem:[%s3] sm:$0xf]
        %v3703 = vld [vmem:[%s3 + $0x4] sm:$0xf]
        %v3706 = vunpack.c.l.b16 %v3702
        %v3707 = vunpack.c.l.b16 %v3703
        %v3708 = vpack.c.b16 %v3707, %v3706
        %vm3710 = vcmask 130048
        %v3712 = vsel %vm3710, %v3686, 0
        %v3715 = vsel %vm3710, %v3687, 0
        %v3718 = vsel %vm3710, %v3688, 0
        %v3721 = vsel %vm3710, %v3689, 0
        %v3724 = vsel %vm3710, %v3690, 0
        %v3727 = vsel %vm3710, %v3691, 0
        %v3730 = vsel %vm3710, %v3692, 0
        %v3733 = vsel %vm3710, %v3693, 0
        %v3736 = vsel %vm3710, %v3694, 0
        %v3739 = vsel %vm3710, %v3695, 0
        %v3742 = vsel %vm3710, %v3696, 0
        %v3745 = vsel %vm3710, %v3697, 0
        %v3748 = vsel %vm3710, %v3698, 0
        %v3751 = vsel %vm3710, %v3699, 0
        %v3754 = vsel %vm3710, %v3700, 0
        %v3757 = vsel %vm3710, %v3701, 0
        %3759 = vmatprep.subr.bf16.mxu0 0
        %3760 = vmatpush1.bf16.msra.mxu0 0
        %3761 = vmatprep.subr.bf16.mxu0 0
        %3762 = vmatpush1.bf16.msra.mxu0 0
        %3763 = vmatprep.subr.bf16.mxu0 0
        %3764 = vmatpush1.bf16.msra.mxu0 0
        %3765 = vmatprep.subr.bf16.mxu0 0
        %3766 = vmatpush1.bf16.msra.mxu0 0
        %3767 = vmatprep.subr.bf16.mxu0 0
        %3768 = vmatpush1.bf16.msra.mxu0 0
        %3769 = vmatprep.subr.bf16.mxu0 0
        %3770 = vmatpush1.bf16.msra.mxu0 0
        %3771 = vmatprep.subr.bf16.mxu0 0
        %3772 = vmatpush1.bf16.msra.mxu0 0
        %3773 = vmatprep.subr.bf16.mxu0 0
        %3774 = vmatpush1.bf16.msra.mxu0 %v3708
        %3775 = vmatprep.subr.bf16.mxu0 0
        %3776 = vmatpush2.bf16.msra.mxu0 0
        %3777 = vmatprep.subr.bf16.mxu0 0
        %3778 = vmatpush2.bf16.msra.mxu0 0
        %3779 = vmatprep.subr.bf16.mxu0 0
        %3780 = vmatpush2.bf16.msra.mxu0 0
        %3781 = vmatprep.subr.bf16.mxu0 0
        %3782 = vmatpush2.bf16.msra.mxu0 0
        %3783 = vmatprep.subr.bf16.mxu0 0
        %3784 = vmatpush2.bf16.msra.mxu0 0
        %3785 = vmatprep.subr.bf16.mxu0 0
        %3786 = vmatpush2.bf16.msra.mxu0 0
        %3787 = vmatprep.subr.bf16.mxu0 0
        %3788 = vmatpush2.bf16.msra.mxu0 0
        %3789 = vmatprep.subr.bf16.mxu0 0
        %3790 = vmatpush2.bf16.msra.mxu0 0
        %3791 = vmatprep.mubr.bf16.mxu0 0
        %3792 = vmatmul.mubr.bf16.gmra.mxu0 %v3712
        %v3793 = vpop.f32.mrf.mxu0
        %v3794 = vadd.f32 0.0, %v3793
        %v3795 = vpop.f32.mrf.mxu0
        %v3796 = vpop.f32.mrf.mxu0
        %v3797 = vadd.f32 0.0, %v3796
        %v3798 = vpop.f32.mrf.mxu0
        %3799 = vmatprep.mubr.bf16.mxu0 0
        %3800 = vmatmul.mubr.bf16.gmra.mxu0 %v3715
        %v3801 = vpop.f32.mrf.mxu0
        %v3802 = vadd.f32 0.0, %v3801
        %v3803 = vpop.f32.mrf.mxu0
        %v3804 = vpop.f32.mrf.mxu0
        %v3805 = vadd.f32 0.0, %v3804
        %v3806 = vpop.f32.mrf.mxu0
        %3807 = vmatprep.mubr.bf16.mxu0 0
        %3808 = vmatmul.mubr.bf16.gmra.mxu0 %v3718
        %v3809 = vpop.f32.mrf.mxu0
        %v3810 = vadd.f32 0.0, %v3809
        %v3811 = vpop.f32.mrf.mxu0
        %v3812 = vpop.f32.mrf.mxu0
        %v3813 = vadd.f32 0.0, %v3812
        %v3814 = vpop.f32.mrf.mxu0
        %3815 = vmatprep.mubr.bf16.mxu0 0
        %3816 = vmatmul.mubr.bf16.gmra.mxu0 %v3721
        %v3817 = vpop.f32.mrf.mxu0
        %v3818 = vadd.f32 0.0, %v3817
        %v3819 = vpop.f32.mrf.mxu0
        %v3820 = vpop.f32.mrf.mxu0
        %v3821 = vadd.f32 0.0, %v3820
        %v3822 = vpop.f32.mrf.mxu0
        %3823 = vmatprep.mubr.bf16.mxu0 0
        %3824 = vmatmul.mubr.bf16.gmra.mxu0 %v3724
        %v3825 = vpop.f32.mrf.mxu0
        %v3826 = vadd.f32 0.0, %v3825
        %v3827 = vpop.f32.mrf.mxu0
        %v3828 = vpop.f32.mrf.mxu0
        %v3829 = vadd.f32 0.0, %v3828
        %v3830 = vpop.f32.mrf.mxu0
        %3831 = vmatprep.mubr.bf16.mxu0 0
        %3832 = vmatmul.mubr.bf16.gmra.mxu0 %v3727
        %v3833 = vpop.f32.mrf.mxu0
        %v3834 = vadd.f32 0.0, %v3833
        %v3835 = vpop.f32.mrf.mxu0
        %v3836 = vpop.f32.mrf.mxu0
        %v3837 = vadd.f32 0.0, %v3836
        %v3838 = vpop.f32.mrf.mxu0
        %3839 = vmatprep.mubr.bf16.mxu0 0
        %3840 = vmatmul.mubr.bf16.gmra.mxu0 %v3730
        %v3841 = vpop.f32.mrf.mxu0
        %v3842 = vadd.f32 0.0, %v3841
        %v3843 = vpop.f32.mrf.mxu0
        %v3844 = vpop.f32.mrf.mxu0
        %v3845 = vadd.f32 0.0, %v3844
        %v3846 = vpop.f32.mrf.mxu0
        %3847 = vmatprep.mubr.bf16.mxu0 0
        %3848 = vmatmul.mubr.bf16.gmra.mxu0 %v3733
        %v3849 = vpop.f32.mrf.mxu0
        %v3850 = vadd.f32 0.0, %v3849
        %v3851 = vpop.f32.mrf.mxu0
        %v3852 = vpop.f32.mrf.mxu0
        %v3853 = vadd.f32 0.0, %v3852
        %v3854 = vpop.f32.mrf.mxu0
        %3855 = vmatprep.mubr.bf16.mxu0 0
        %3856 = vmatmul.mubr.bf16.gmra.mxu0 %v3736
        %v3857 = vpop.f32.mrf.mxu0
        %v3858 = vadd.f32 0.0, %v3857
        %v3859 = vpop.f32.mrf.mxu0
        %v3860 = vpop.f32.mrf.mxu0
        %v3861 = vadd.f32 0.0, %v3860
        %v3862 = vpop.f32.mrf.mxu0
        %3863 = vmatprep.mubr.bf16.mxu0 0
        %3864 = vmatmul.mubr.bf16.gmra.mxu0 %v3739
        %v3865 = vpop.f32.mrf.mxu0
        %v3866 = vadd.f32 0.0, %v3865
        %v3867 = vpop.f32.mrf.mxu0
        %v3868 = vpop.f32.mrf.mxu0
        %v3869 = vadd.f32 0.0, %v3868
        %v3870 = vpop.f32.mrf.mxu0
        %3871 = vmatprep.mubr.bf16.mxu0 0
        %3872 = vmatmul.mubr.bf16.gmra.mxu0 %v3742
        %v3873 = vpop.f32.mrf.mxu0
        %v3874 = vadd.f32 0.0, %v3873
        %v3875 = vpop.f32.mrf.mxu0
        %v3876 = vpop.f32.mrf.mxu0
        %v3877 = vadd.f32 0.0, %v3876
        %v3878 = vpop.f32.mrf.mxu0
        %3879 = vmatprep.mubr.bf16.mxu0 0
        %3880 = vmatmul.mubr.bf16.gmra.mxu0 %v3745
        %v3881 = vpop.f32.mrf.mxu0
        %v3882 = vadd.f32 0.0, %v3881
        %v3883 = vpop.f32.mrf.mxu0
        %v3884 = vpop.f32.mrf.mxu0
        %v3885 = vadd.f32 0.0, %v3884
        %v3886 = vpop.f32.mrf.mxu0
        %3887 = vmatprep.mubr.bf16.mxu0 0
        %3888 = vmatmul.mubr.bf16.gmra.mxu0 %v3748
        %v3889 = vpop.f32.mrf.mxu0
        %v3890 = vadd.f32 0.0, %v3889
        %v3891 = vpop.f32.mrf.mxu0
        %v3892 = vpop.f32.mrf.mxu0
        %v3893 = vadd.f32 0.0, %v3892
        %v3894 = vpop.f32.mrf.mxu0
        %3895 = vmatprep.mubr.bf16.mxu0 0
        %3896 = vmatmul.mubr.bf16.gmra.mxu0 %v3751
        %v3897 = vpop.f32.mrf.mxu0
        %v3898 = vadd.f32 0.0, %v3897
        %v3899 = vpop.f32.mrf.mxu0
        %v3900 = vpop.f32.mrf.mxu0
        %v3901 = vadd.f32 0.0, %v3900
        %v3902 = vpop.f32.mrf.mxu0
        %3903 = vmatprep.mubr.bf16.mxu0 0
        %3904 = vmatmul.mubr.bf16.gmra.mxu0 %v3754
        %v3905 = vpop.f32.mrf.mxu0
        %v3906 = vadd.f32 0.0, %v3905
        %v3907 = vpop.f32.mrf.mxu0
        %v3908 = vpop.f32.mrf.mxu0
        %v3909 = vadd.f32 0.0, %v3908
        %v3910 = vpop.f32.mrf.mxu0
        %3911 = vmatprep.mubr.bf16.mxu0 0
        %3912 = vmatmul.mubr.bf16.gmra.mxu0 %v3757
        %v3913 = vpop.f32.mrf.mxu0
        %v3914 = vadd.f32 0.0, %v3913
        %v3915 = vpop.f32.mrf.mxu0
        %v3916 = vpop.f32.mrf.mxu0
        %v3917 = vadd.f32 0.0, %v3916
        %v3918 = vpop.f32.mrf.mxu0
        %3919 = vdwg.mxu0
        %vm3920 = vcmask 261120
        %3921 = vst.msk [vmem:[%s190] sm:$0xff] %vm3920, %v3794
        %3922 = vst.msk [vmem:[%s190 + $0x8] sm:$0xff] %vm3920, %v3797
        %3923 = vst.msk [vmem:[%s190 + $0x10] sm:$0xff] %vm3920, %v3802
        %3924 = vst.msk [vmem:[%s190 + $0x18] sm:$0xff] %vm3920, %v3805
        %3925 = vst.msk [vmem:[%s190 + $0x20] sm:$0xff] %vm3920, %v3810
        %3926 = vst.msk [vmem:[%s190 + $0x28] sm:$0xff] %vm3920, %v3813
        %3927 = vst.msk [vmem:[%s190 + $0x30] sm:$0xff] %vm3920, %v3818
        %3928 = vst.msk [vmem:[%s190 + $0x38] sm:$0xff] %vm3920, %v3821
        %3929 = vst.msk [vmem:[%s190 + $0x40] sm:$0xff] %vm3920, %v3826
        %3930 = vst.msk [vmem:[%s190 + $0x48] sm:$0xff] %vm3920, %v3829
        %3931 = vst.msk [vmem:[%s190 + $0x50] sm:$0xff] %vm3920, %v3834
        %3932 = vst.msk [vmem:[%s190 + $0x58] sm:$0xff] %vm3920, %v3837
        %3933 = vst.msk [vmem:[%s190 + $0x60] sm:$0xff] %vm3920, %v3842
        %3934 = vst.msk [vmem:[%s190 + $0x68] sm:$0xff] %vm3920, %v3845
        %3935 = vst.msk [vmem:[%s190 + $0x70] sm:$0xff] %vm3920, %v3850
        %3936 = vst.msk [vmem:[%s190 + $0x78] sm:$0xff] %vm3920, %v3853
        %3937 = vst.msk [vmem:[%s190 + $0x80] sm:$0xff] %vm3920, %v3858
        %3938 = vst.msk [vmem:[%s190 + $0x88] sm:$0xff] %vm3920, %v3861
        %3939 = vst.msk [vmem:[%s190 + $0x90] sm:$0xff] %vm3920, %v3866
        %3940 = vst.msk [vmem:[%s190 + $0x98] sm:$0xff] %vm3920, %v3869
        %3941 = vst.msk [vmem:[%s190 + $0xa0] sm:$0xff] %vm3920, %v3874
        %3942 = vst.msk [vmem:[%s190 + $0xa8] sm:$0xff] %vm3920, %v3877
        %3943 = vst.msk [vmem:[%s190 + $0xb0] sm:$0xff] %vm3920, %v3882
        %3944 = vst.msk [vmem:[%s190 + $0xb8] sm:$0xff] %vm3920, %v3885
        %3945 = vst.msk [vmem:[%s190 + $0xc0] sm:$0xff] %vm3920, %v3890
        %3946 = vst.msk [vmem:[%s190 + $0xc8] sm:$0xff] %vm3920, %v3893
        %3947 = vst.msk [vmem:[%s190 + $0xd0] sm:$0xff] %vm3920, %v3898
        %3948 = vst.msk [vmem:[%s190 + $0xd8] sm:$0xff] %vm3920, %v3901
        %3949 = vst.msk [vmem:[%s190 + $0xe0] sm:$0xff] %vm3920, %v3906
        %3950 = vst.msk [vmem:[%s190 + $0xe8] sm:$0xff] %vm3920, %v3909
        %3951 = vst.msk [vmem:[%s190 + $0xf0] sm:$0xff] %vm3920, %v3914
        %3952 = vst.msk [vmem:[%s190 + $0xf8] sm:$0xff] %vm3920, %v3917
        %s3953 = sand.u32 %s115, 1
        %s3954 = scalar_lea.sflag [#allocation6], %s3953
        %s3955 = sand.u32 %s115, 1
        %s3956 = smul.addr %s3955, 256
        %s3957 = scalar_lea.vmem [#allocation5], %s3956
        // Predicated region
        $region37: #{tpu_custom_call.1} parent=35 // pred_check
          %p3958 = pneg %p125
        $region38: #{tpu_custom_call.1} parent=35 // pred_check_branch
          %3960 = sbr.rel (%p3958) target = $region40
        $region39: #{tpu_custom_call.1} parent=35 // pred_region
          %s3962 = ssub.s32 4096, 4096
          %3963 = vsyncadd %s3954, %s3962
          %s3964 = smul.addr %s18, 32
          %s3965 = smul.addr %s3964, 128
          %s3966 = scalar_lea.hbm %s4, %s3965
          %s3967 = sshll.u32 %s3957, 4
          %s3968 = int_to_ptr.vmem [resolvable:$true] %s3967
          %3973 = dma.vmem_to_hbm [thread:$0]  %s3968, 4096, %s3966, %s3954, 128, 128, 8
        $region40: #{tpu_custom_call.1} parent=35 // pred_fallthru
          _
      $region36: #{tpu_custom_call.1} parent=5 // pred_fallthru
        _
      %p3974 = scmp.le.s32.totalorder 2, %s13
      // Predicated region
      $region41: #{tpu_custom_call.1} parent=5 // pred_check
        %p3975 = pneg %p3974
      $region42: #{tpu_custom_call.1} parent=5 // pred_check_branch
        %3977 = sbr.rel (%p3975) target = $region44
      $region43: #{tpu_custom_call.1} parent=5 // pred_region
        %s3978 = ssub.s32 %s13, 2
        // Predicated region
        $region45: #{tpu_custom_call.1} parent=43 // pred_check
          %p3979 = pneg %p131
        $region46: #{tpu_custom_call.1} parent=43 // pred_check_branch
          %3981 = sbr.rel (%p3979) target = $region48
        $region47: #{tpu_custom_call.1} parent=43 // pred_region
          %s3982 = sand.u32 %s116, 1
          %s3983 = scalar_lea.sflag [#allocation6], %s3982
          %s3984 = sand.u32 %s116, 1
          %s3985 = smul.addr %s3984, 256
          %s3986 = scalar_lea.vmem [#allocation5], %s3985
          %3987 = dma.done %s3983, 4096
        $region48: #{tpu_custom_call.1} parent=43 // pred_fallthru
          _
      $region44: #{tpu_custom_call.1} parent=5 // pred_fallthru
        _
    $region6: #{tpu_custom_call.1} parent=1 // loop_footer
      %s17 = sadd.s32 1, %s13
    $region7: #{tpu_custom_call.1} parent=1 // loop_footer_branch
      %12 = sbr.rel target = $region3
    $region8: #{tpu_custom_call.1} parent=1 // loop_exit
      _
    %3988 = vsyncpa [#allocation6], 1
    %s3989 = scalar_lea.sflag [#allocation6], 1
    %3990 = vsyncpa %s3989, 1

</llo_original>
